<compile_context>
chip_gen: v6e
topology: v6e:2x2x1
jax: 0.10.0
libtpu: 0.0.40
codegen_flags: <defaults>
</compile_context>

<pallas_src>
import functools

import jax
import jax.numpy as jnp
from jax.experimental import pallas as pl
from jax.experimental.pallas import tpu as pltpu


def _round_up(x, m):
    return ((x + m - 1) // m) * m


def _vmem_capacity_bytes():
    try:
        return int(pltpu.get_tpu_info().vmem_capacity_bytes)
    except Exception:
        return 64 << 20  # conservative fallback (v7x per-core VMEM)


def _vmem_est(tp, ho_wq, hq_wq, dmax, ph_n, cin_gp, cout_gp, k, in_isz, out_isz):
    """Rough per-step VMEM working set for spatial tile size `tp`."""
    lout = _round_up(ho_wq, tp)
    lin = _round_up(max(hq_wq, lout + dmax), 128)
    return (2 * ph_n * lin * cin_gp * in_isz           # input block (double-buffered)
            + 2 * k * k * cin_gp * cout_gp * in_isz    # weight (TODO(synk): Buffered(1))
            + 2 * cout_gp * 4                          # bias
            + 2 * tp * cout_gp * out_isz               # output block
            + tp * cout_gp * 4                         # f32 accumulator
            + tp * cin_gp * in_isz                     # one tap operand
            + (2 << 20))                               # slack


def _pick_tile(ho_wq, hq_wq, dmax, ph_n, cin_gp, cout_gp, k, in_isz, out_isz, budget):
    """Largest lane/sublane-friendly spatial tile that fits the VMEM budget."""
    full = _round_up(ho_wq, 128)
    cands = sorted({min(c, full) for c in (4096, 2048, 1024, 512, 256, 128)},
                   reverse=True)
    for tp in cands:
        if _vmem_est(tp, ho_wq, hq_wq, dmax, ph_n, cin_gp, cout_gp, k,
                     in_isz, out_isz) <= budget:
            return tp
    return 128


# ----------------------------- Pallas kernel -----------------------------

def conv_bn_silu_kernel(x_ref, w_ref, b_ref, o_ref, *, k, stride, wq, lin, approx):
    """One (batch, group, spatial-tile) grid step.

    x_ref: (1, 1, PH*Lin, Cin_gp)   phase-split padded image (this batch, this group)
    w_ref: (1, k*k, Cin_gp, Cout_gp) BN-scale-folded conv weight for this group
    b_ref: (1, 1, Cout_gp)          folded BN bias (f32)
    o_ref: (1, 1, TP, Cout_gp)      output tile (flattened wide spatial x channels)
    """
    tp = o_ref.shape[2]
    cout_gp = o_ref.shape[3]
    base = pl.multiple_of(pl.program_id(2) * tp, 128)

    acc = jnp.zeros((tp, cout_gp), jnp.float32)
    # k*k shifted dots accumulated in f32 (in-kernel im2col; no HBM amplification).
    for ky in range(k):
        for kx in range(k):
            ph = (ky % stride) * stride + (kx % stride)     # phase plane (static)
            d = (ky // stride) * wq + (kx // stride)        # flat shift in plane (static)
            xs = x_ref[0, 0, pl.ds(ph * lin + base + d, tp), :]   # (TP, Cin_gp)
            acc = acc + jnp.dot(xs, w_ref[0, ky * k + kx],
                                preferred_element_type=jnp.float32)

    z = acc + b_ref[0]                                      # (1, Cout_gp) broadcast
    # SiLU.  exp(-z) overflows to inf only for very negative finite z -> sig==0, ok.
    sig = pl.reciprocal(1.0 + jnp.exp(-z), approx=approx)
    o_ref[0, 0] = (z * sig).astype(o_ref.dtype)


# ----------------------------- wrapper -----------------------------

def conv_bn_silu_forward(x, weight, bn_gamma, bn_beta, bn_mean, bn_var, *,
                         stride=1, padding=0, groups=1, eps=1e-5,
                         compute_dtype=jnp.bfloat16, out_dtype=jnp.float32):
    """SiLU(BatchNorm2d(Conv2d(x, weight, bias=False))), BatchNorm in eval mode.

    x      : (N, Cin, H, W)              PyTorch NCHW layout
    weight : (Cout, Cin//groups, k, k)   PyTorch OIHW layout
    returns: (N, Cout, Ho, Wo) in out_dtype
    """
    n, cin, h, w = x.shape
    cout = int(weight.shape[0])
    k = int(weight.shape[-1])
    s, p, g = int(stride), int(padding), int(groups)
    assert cin % g == 0 and cout % g == 0
    cin_g, cout_g = cin // g, cout // g

    in_isz = jnp.dtype(compute_dtype).itemsize
    out_isz = jnp.dtype(out_dtype).itemsize
    sub = 16 if in_isz == 2 else 8                      # sublane-packing multiple
    cin_gp = _round_up(cin_g, sub)
    cout_gp = _round_up(cout_g, sub)

    hp, wp = h + 2 * p, w + 2 * p
    ho = (hp - k) // s + 1
    wo = (wp - k) // s + 1
    assert ho > 0 and wo > 0

    # stride-s conv -> stride-1 conv over s*s phase planes (total bytes ~= input).
    hp2, wp2 = _round_up(hp, s), _round_up(wp, s)
    hq, wq = hp2 // s, wp2 // s
    ph_n = s * s
    dmax = ((k - 1) // s) * (wq + 1)

    # --- VMEM-aware tile selection ---
    cap = _vmem_capacity_bytes()
    tp = _pick_tile(ho * wq, hq * wq, dmax, ph_n, cin_gp, cout_gp, k,
                    in_isz, out_isz, budget=int(0.35 * cap))
    lout = _round_up(ho * wq, tp)
    lin = _round_up(max(hq * wq, lout + dmax), 128)
    est = _vmem_est(tp, ho * wq, hq * wq, dmax, ph_n, cin_gp, cout_gp, k,
                    in_isz, out_isz)
    vmem_limit = int(min(0.8 * cap, max(32 << 20, 1.3 * est)))

    # --- input: pad, phase-split, group-split, channel/flat pad, channels-last ---
    xp = jnp.pad(x, ((0, 0), (0, 0), (p, p + hp2 - hp), (p, p + wp2 - wp)))
    xq = xp.reshape(n, g, cin_g, hq, s, wq, s)           # [n, g, c, y, a, x, b]
    xq = xq.transpose(0, 1, 4, 6, 3, 5, 2)               # [n, g, a, b, y, x, c]
    xq = xq.reshape(n, g, ph_n, hq * wq, cin_g)          # [n, g, ph, l, c]
    xq = jnp.pad(xq, ((0, 0), (0, 0), (0, 0),
                      (0, lin - hq * wq), (0, cin_gp - cin_g)))
    xq = xq.reshape(n, g, ph_n * lin, cin_gp).astype(compute_dtype)

    # --- weight/bias: fold BN scale per output channel, per-group layout ---
    scale = bn_gamma / jnp.sqrt(bn_var + eps)            # (Cout,)
    bias = bn_beta - bn_mean * scale                     # (Cout,)
    wg = weight.reshape(g, cout_g, cin_g, k, k)          # [g, o, c, ky, kx]
    wg = wg.transpose(0, 3, 4, 2, 1)                     # [g, ky, kx, c, o]
    wg = wg.reshape(g, k * k, cin_g, cout_g) * scale.reshape(g, 1, 1, cout_g)
    wg = jnp.pad(wg, ((0, 0), (0, 0), (0, cin_gp - cin_g),
                      (0, cout_gp - cout_g))).astype(compute_dtype)
    bg = jnp.pad(bias.reshape(g, 1, cout_g),
                 ((0, 0), (0, 0), (0, cout_gp - cout_g))).astype(jnp.float32)

    grid = (n, g, lout // tp)
    kernel = functools.partial(conv_bn_silu_kernel, k=k, stride=s, wq=wq, lin=lin,
                               approx=(in_isz == 2))

    flops = 2 * n * cout * ho * wo * k * k * cin_g
    bytes_accessed = (xq.size * in_isz + wg.size * in_isz + bg.size * 4
                      + n * g * lout * cout_gp * out_isz)

    out_wide = pl.pallas_call(
        kernel,
        out_shape=jax.ShapeDtypeStruct((n, g, lout, cout_gp), out_dtype),
        grid=grid,
        in_specs=[
            pl.BlockSpec((1, 1, ph_n * lin, cin_gp), lambda b, gi, j: (b, gi, 0, 0)),
            pl.BlockSpec((1, k * k, cin_gp, cout_gp), lambda b, gi, j: (gi, 0, 0, 0)),
            pl.BlockSpec((1, 1, cout_gp), lambda b, gi, j: (gi, 0, 0)),
        ],
        out_specs=pl.BlockSpec((1, 1, tp, cout_gp), lambda b, gi, j: (b, gi, j, 0)),
        compiler_params=pltpu.CompilerParams(
            dimension_semantics=("parallel", "parallel", "parallel"),
            vmem_limit_bytes=vmem_limit),
        cost_estimate=pl.CostEstimate(
            flops=flops,
            transcendentals=n * g * lout * cout_gp,
            bytes_accessed=bytes_accessed),
    )(xq, wg, bg)

    # Crop junk columns / channel padding, back to NCHW.
    out = out_wide[:, :, :ho * wq, :cout_g]              # (N, G, Ho*Wq, cout_g)
    out = out.reshape(n, g, ho, wq, cout_g)[:, :, :, :wo, :]
    out = out.transpose(0, 1, 4, 2, 3).reshape(n, cout, ho, wo)
    return out.astype(out_dtype)


# ----------------------------- pure-JAX reference -----------------------------

def conv_bn_silu_reference(x, weight, gamma, beta, mean, var, *,
                           stride, padding, groups, eps=1e-5):
    y = jax.lax.conv_general_dilated(
        x, weight, window_strides=(stride, stride),
        padding=((padding, padding), (padding, padding)),
        dimension_numbers=('NCHW', 'OIHW', 'NCHW'),
        feature_group_count=groups)
    scale = gamma / jnp.sqrt(var + eps)
    bias = beta - mean * scale
    y = y * scale[None, :, None, None] + bias[None, :, None, None]
    return y * jax.nn.sigmoid(y)


# ----------------------------- test -----------------------------

def _check(name, out, ref, atol, rtol):
    assert out.shape == ref.shape, (name, out.shape, ref.shape)
    if not bool(jnp.allclose(out, ref, atol=atol, rtol=rtol)):
        raise AssertionError(
            f"{name}: max abs err = {float(jnp.max(jnp.abs(out - ref)))}")


if __name__ == "__main__":
    key = jax.random.PRNGKey(0)
    N, Cin, H, W = 2, 4, 16, 16
    Cout, k = 8, 3

    ks = jax.random.split(key, 7)
    x = jax.random.normal(ks[0], (N, Cin, H, W), jnp.float32)
    w = 0.1 * jax.random.normal(ks[1], (Cout, Cin, k, k), jnp.float32)
    gamma = 1.0 + 0.1 * jax.random.normal(ks[2], (Cout,), jnp.float32)
    beta = 0.1 * jax.random.normal(ks[3], (Cout,), jnp.float32)
    mean = 0.1 * jax.random.normal(ks[4], (Cout,), jnp.float32)
    var = 1.0 + 0.1 * jnp.abs(jax.random.normal(ks[5], (Cout,), jnp.float32))

    # --- Conv(4, 8, k=3, s=1, p=1): f32 validation path, tight tolerance ---
    ref = conv_bn_silu_reference(x, w, gamma, beta, mean, var,
                                 stride=1, padding=1, groups=1)
    out = jax.block_until_ready(conv_bn_silu_forward(
        x, w, gamma, beta, mean, var, stride=1, padding=1, groups=1,
        compute_dtype=jnp.float32))
    _check("k3 s1 p1 f32", out, ref, 1e-4, 1e-4)

    # --- same layer, default bf16 MXU fast path ---
    out = jax.block_until_ready(conv_bn_silu_forward(
        x, w, gamma, beta, mean, var, stride=1, padding=1, groups=1))
    _check("k3 s1 p1 bf16", out, ref, 3e-2, 3e-2)

    # --- stride 2 (phase-decomposed path) ---
    ref2 = conv_bn_silu_reference(x, w, gamma, beta, mean, var,
                                  stride=2, padding=1, groups=1)
    out = jax.block_until_ready(conv_bn_silu_forward(
        x, w, gamma, beta, mean, var, stride=2, padding=1, groups=1,
        compute_dtype=jnp.float32))
    _check("k3 s2 p1 f32", out, ref2, 1e-4, 1e-4)

    # --- padding 0 (junk-column crop path) ---
    ref3 = conv_bn_silu_reference(x, w, gamma, beta, mean, var,
                                  stride=1, padding=0, groups=1)
    out = jax.block_until_ready(conv_bn_silu_forward(
        x, w, gamma, beta, mean, var, stride=1, padding=0, groups=1,
        compute_dtype=jnp.float32))
    _check("k3 s1 p0 f32", out, ref3, 1e-4, 1e-4)

    # --- groups=2 (real grouped-GEMM grid axis) ---
    wg2 = 0.1 * jax.random.normal(ks[6], (Cout, Cin // 2, k, k), jnp.float32)
    ref4 = conv_bn_silu_reference(x, wg2, gamma, beta, mean, var,
                                  stride=1, padding=1, groups=2)
    out = jax.block_until_ready(conv_bn_silu_forward(
        x, wg2, gamma, beta, mean, var, stride=1, padding=1, groups=2,
        compute_dtype=jnp.float32))
    _check("k3 s1 p1 g2 f32", out, ref4, 1e-4, 1e-4)

    print("KERNEL_OK")
</pallas_src>

<mosaic_0001>
module attributes {stable_mosaic.version = 11 : i64} {
  func.func @conv_bn_silu_kernel(%arg0: i32, %arg1: i32, %arg2: i32, %arg3: memref<1x1x512x8xf32, #tpu.memory_space<vmem>>, %arg4: memref<1x9x8x8xf32, #tpu.memory_space<vmem>>, %arg5: memref<1x1x8xf32, #tpu.memory_space<vmem>>, %arg6: memref<1x1x384x8xf32, #tpu.memory_space<vmem>>) attributes {dimension_semantics = [#tpu.dimension_semantics<parallel>, #tpu.dimension_semantics<parallel>, #tpu.dimension_semantics<parallel>], iteration_bounds = array<i64: 2, 1, 1>, scalar_prefetch = 0 : i64, scratch_operands = 0 : i64, tpu.core_type = #tpu.core_type<tc>, window_params = [{transform_indices = @transform_0, window_bounds = array<i64: 1, 1, 512, 8>}, {transform_indices = @transform_1, window_bounds = array<i64: 1, 9, 8, 8>}, {transform_indices = @transform_2, window_bounds = array<i64: 1, 1, 8>}, {transform_indices = @transform_3, window_bounds = array<i64: 1, 1, 384, 8>}]} {
    %c384_i32 = arith.constant 384 : i32
    %0 = arith.muli %arg2, %c384_i32 : i32
    %1 = tpu.assume_multiple %0, 128 : i32
    %cst = arith.constant 0.000000e+00 : f32
    %2 = vector.broadcast %cst : f32 to vector<384x8xf32>
    %c0_i32 = arith.constant 0 : i32
    %3 = arith.addi %c0_i32, %1 : i32
    %c0_i32_0 = arith.constant 0 : i32
    %4 = arith.addi %3, %c0_i32_0 : i32
    %c0 = arith.constant 0 : index
    %c0_1 = arith.constant 0 : index
    %5 = arith.index_cast %4 : i32 to index
    %c0_2 = arith.constant 0 : index
    %6 = vector.load %arg3[%c0, %c0_1, %5, %c0_2] : memref<1x1x512x8xf32, #tpu.memory_space<vmem>>, vector<1x1x384x8xf32>
    %7 = vector.shape_cast %6 : vector<1x1x384x8xf32> to vector<384x8xf32>
    %c0_3 = arith.constant 0 : index
    %c0_4 = arith.constant 0 : index
    %c0_5 = arith.constant 0 : index
    %c0_6 = arith.constant 0 : index
    %8 = vector.load %arg4[%c0_3, %c0_4, %c0_5, %c0_6] : memref<1x9x8x8xf32, #tpu.memory_space<vmem>>, vector<1x1x8x8xf32>
    %9 = vector.shape_cast %8 : vector<1x1x8x8xf32> to vector<8x8xf32>
    %cst_7 = arith.constant dense<0.000000e+00> : vector<384x8xf32>
    %10 = tpu.matmul %7, %9, %cst_7 {dimension_numbers = #tpu.dot_dimension_numbers<[1], [0], [0], [1], [0, 0, 1, 1], [], []>} : vector<384x8xf32>, vector<8x8xf32>, vector<384x8xf32> -> vector<384x8xf32>
    %11 = arith.addf %2, %10 : vector<384x8xf32>
    %c0_i32_8 = arith.constant 0 : i32
    %12 = arith.addi %c0_i32_8, %1 : i32
    %c1_i32 = arith.constant 1 : i32
    %13 = arith.addi %12, %c1_i32 : i32
    %c0_9 = arith.constant 0 : index
    %c0_10 = arith.constant 0 : index
    %14 = arith.index_cast %13 : i32 to index
    %c0_11 = arith.constant 0 : index
    %15 = vector.load %arg3[%c0_9, %c0_10, %14, %c0_11] : memref<1x1x512x8xf32, #tpu.memory_space<vmem>>, vector<1x1x384x8xf32>
    %16 = vector.shape_cast %15 : vector<1x1x384x8xf32> to vector<384x8xf32>
    %c0_12 = arith.constant 0 : index
    %c1 = arith.constant 1 : index
    %c0_13 = arith.constant 0 : index
    %c0_14 = arith.constant 0 : index
    %17 = vector.load %arg4[%c0_12, %c1, %c0_13, %c0_14] : memref<1x9x8x8xf32, #tpu.memory_space<vmem>>, vector<1x1x8x8xf32>
    %18 = vector.shape_cast %17 : vector<1x1x8x8xf32> to vector<8x8xf32>
    %cst_15 = arith.constant dense<0.000000e+00> : vector<384x8xf32>
    %19 = tpu.matmul %16, %18, %cst_15 {dimension_numbers = #tpu.dot_dimension_numbers<[1], [0], [0], [1], [0, 0, 1, 1], [], []>} : vector<384x8xf32>, vector<8x8xf32>, vector<384x8xf32> -> vector<384x8xf32>
    %20 = arith.addf %11, %19 : vector<384x8xf32>
    %c0_i32_16 = arith.constant 0 : i32
    %21 = arith.addi %c0_i32_16, %1 : i32
    %c2_i32 = arith.constant 2 : i32
    %22 = arith.addi %21, %c2_i32 : i32
    %c0_17 = arith.constant 0 : index
    %c0_18 = arith.constant 0 : index
    %23 = arith.index_cast %22 : i32 to index
    %c0_19 = arith.constant 0 : index
    %24 = vector.load %arg3[%c0_17, %c0_18, %23, %c0_19] : memref<1x1x512x8xf32, #tpu.memory_space<vmem>>, vector<1x1x384x8xf32>
    %25 = vector.shape_cast %24 : vector<1x1x384x8xf32> to vector<384x8xf32>
    %c0_20 = arith.constant 0 : index
    %c2 = arith.constant 2 : index
    %c0_21 = arith.constant 0 : index
    %c0_22 = arith.constant 0 : index
    %26 = vector.load %arg4[%c0_20, %c2, %c0_21, %c0_22] : memref<1x9x8x8xf32, #tpu.memory_space<vmem>>, vector<1x1x8x8xf32>
    %27 = vector.shape_cast %26 : vector<1x1x8x8xf32> to vector<8x8xf32>
    %cst_23 = arith.constant dense<0.000000e+00> : vector<384x8xf32>
    %28 = tpu.matmul %25, %27, %cst_23 {dimension_numbers = #tpu.dot_dimension_numbers<[1], [0], [0], [1], [0, 0, 1, 1], [], []>} : vector<384x8xf32>, vector<8x8xf32>, vector<384x8xf32> -> vector<384x8xf32>
    %29 = arith.addf %20, %28 : vector<384x8xf32>
    %c0_i32_24 = arith.constant 0 : i32
    %30 = arith.addi %c0_i32_24, %1 : i32
    %c18_i32 = arith.constant 18 : i32
    %31 = arith.addi %30, %c18_i32 : i32
    %c0_25 = arith.constant 0 : index
    %c0_26 = arith.constant 0 : index
    %32 = arith.index_cast %31 : i32 to index
    %c0_27 = arith.constant 0 : index
    %33 = vector.load %arg3[%c0_25, %c0_26, %32, %c0_27] : memref<1x1x512x8xf32, #tpu.memory_space<vmem>>, vector<1x1x384x8xf32>
    %34 = vector.shape_cast %33 : vector<1x1x384x8xf32> to vector<384x8xf32>
    %c0_28 = arith.constant 0 : index
    %c3 = arith.constant 3 : index
    %c0_29 = arith.constant 0 : index
    %c0_30 = arith.constant 0 : index
    %35 = vector.load %arg4[%c0_28, %c3, %c0_29, %c0_30] : memref<1x9x8x8xf32, #tpu.memory_space<vmem>>, vector<1x1x8x8xf32>
    %36 = vector.shape_cast %35 : vector<1x1x8x8xf32> to vector<8x8xf32>
    %cst_31 = arith.constant dense<0.000000e+00> : vector<384x8xf32>
    %37 = tpu.matmul %34, %36, %cst_31 {dimension_numbers = #tpu.dot_dimension_numbers<[1], [0], [0], [1], [0, 0, 1, 1], [], []>} : vector<384x8xf32>, vector<8x8xf32>, vector<384x8xf32> -> vector<384x8xf32>
    %38 = arith.addf %29, %37 : vector<384x8xf32>
    %c0_i32_32 = arith.constant 0 : i32
    %39 = arith.addi %c0_i32_32, %1 : i32
    %c19_i32 = arith.constant 19 : i32
    %40 = arith.addi %39, %c19_i32 : i32
    %c0_33 = arith.constant 0 : index
    %c0_34 = arith.constant 0 : index
    %41 = arith.index_cast %40 : i32 to index
    %c0_35 = arith.constant 0 : index
    %42 = vector.load %arg3[%c0_33, %c0_34, %41, %c0_35] : memref<1x1x512x8xf32, #tpu.memory_space<vmem>>, vector<1x1x384x8xf32>
    %43 = vector.shape_cast %42 : vector<1x1x384x8xf32> to vector<384x8xf32>
    %c0_36 = arith.constant 0 : index
    %c4 = arith.constant 4 : index
    %c0_37 = arith.constant 0 : index
    %c0_38 = arith.constant 0 : index
    %44 = vector.load %arg4[%c0_36, %c4, %c0_37, %c0_38] : memref<1x9x8x8xf32, #tpu.memory_space<vmem>>, vector<1x1x8x8xf32>
    %45 = vector.shape_cast %44 : vector<1x1x8x8xf32> to vector<8x8xf32>
    %cst_39 = arith.constant dense<0.000000e+00> : vector<384x8xf32>
    %46 = tpu.matmul %43, %45, %cst_39 {dimension_numbers = #tpu.dot_dimension_numbers<[1], [0], [0], [1], [0, 0, 1, 1], [], []>} : vector<384x8xf32>, vector<8x8xf32>, vector<384x8xf32> -> vector<384x8xf32>
    %47 = arith.addf %38, %46 : vector<384x8xf32>
    %c0_i32_40 = arith.constant 0 : i32
    %48 = arith.addi %c0_i32_40, %1 : i32
    %c20_i32 = arith.constant 20 : i32
    %49 = arith.addi %48, %c20_i32 : i32
    %c0_41 = arith.constant 0 : index
    %c0_42 = arith.constant 0 : index
    %50 = arith.index_cast %49 : i32 to index
    %c0_43 = arith.constant 0 : index
    %51 = vector.load %arg3[%c0_41, %c0_42, %50, %c0_43] : memref<1x1x512x8xf32, #tpu.memory_space<vmem>>, vector<1x1x384x8xf32>
    %52 = vector.shape_cast %51 : vector<1x1x384x8xf32> to vector<384x8xf32>
    %c0_44 = arith.constant 0 : index
    %c5 = arith.constant 5 : index
    %c0_45 = arith.constant 0 : index
    %c0_46 = arith.constant 0 : index
    %53 = vector.load %arg4[%c0_44, %c5, %c0_45, %c0_46] : memref<1x9x8x8xf32, #tpu.memory_space<vmem>>, vector<1x1x8x8xf32>
    %54 = vector.shape_cast %53 : vector<1x1x8x8xf32> to vector<8x8xf32>
    %cst_47 = arith.constant dense<0.000000e+00> : vector<384x8xf32>
    %55 = tpu.matmul %52, %54, %cst_47 {dimension_numbers = #tpu.dot_dimension_numbers<[1], [0], [0], [1], [0, 0, 1, 1], [], []>} : vector<384x8xf32>, vector<8x8xf32>, vector<384x8xf32> -> vector<384x8xf32>
    %56 = arith.addf %47, %55 : vector<384x8xf32>
    %c0_i32_48 = arith.constant 0 : i32
    %57 = arith.addi %c0_i32_48, %1 : i32
    %c36_i32 = arith.constant 36 : i32
    %58 = arith.addi %57, %c36_i32 : i32
    %c0_49 = arith.constant 0 : index
    %c0_50 = arith.constant 0 : index
    %59 = arith.index_cast %58 : i32 to index
    %c0_51 = arith.constant 0 : index
    %60 = vector.load %arg3[%c0_49, %c0_50, %59, %c0_51] : memref<1x1x512x8xf32, #tpu.memory_space<vmem>>, vector<1x1x384x8xf32>
    %61 = vector.shape_cast %60 : vector<1x1x384x8xf32> to vector<384x8xf32>
    %c0_52 = arith.constant 0 : index
    %c6 = arith.constant 6 : index
    %c0_53 = arith.constant 0 : index
    %c0_54 = arith.constant 0 : index
    %62 = vector.load %arg4[%c0_52, %c6, %c0_53, %c0_54] : memref<1x9x8x8xf32, #tpu.memory_space<vmem>>, vector<1x1x8x8xf32>
    %63 = vector.shape_cast %62 : vector<1x1x8x8xf32> to vector<8x8xf32>
    %cst_55 = arith.constant dense<0.000000e+00> : vector<384x8xf32>
    %64 = tpu.matmul %61, %63, %cst_55 {dimension_numbers = #tpu.dot_dimension_numbers<[1], [0], [0], [1], [0, 0, 1, 1], [], []>} : vector<384x8xf32>, vector<8x8xf32>, vector<384x8xf32> -> vector<384x8xf32>
    %65 = arith.addf %56, %64 : vector<384x8xf32>
    %c0_i32_56 = arith.constant 0 : i32
    %66 = arith.addi %c0_i32_56, %1 : i32
    %c37_i32 = arith.constant 37 : i32
    %67 = arith.addi %66, %c37_i32 : i32
    %c0_57 = arith.constant 0 : index
    %c0_58 = arith.constant 0 : index
    %68 = arith.index_cast %67 : i32 to index
    %c0_59 = arith.constant 0 : index
    %69 = vector.load %arg3[%c0_57, %c0_58, %68, %c0_59] : memref<1x1x512x8xf32, #tpu.memory_space<vmem>>, vector<1x1x384x8xf32>
    %70 = vector.shape_cast %69 : vector<1x1x384x8xf32> to vector<384x8xf32>
    %c0_60 = arith.constant 0 : index
    %c7 = arith.constant 7 : index
    %c0_61 = arith.constant 0 : index
    %c0_62 = arith.constant 0 : index
    %71 = vector.load %arg4[%c0_60, %c7, %c0_61, %c0_62] : memref<1x9x8x8xf32, #tpu.memory_space<vmem>>, vector<1x1x8x8xf32>
    %72 = vector.shape_cast %71 : vector<1x1x8x8xf32> to vector<8x8xf32>
    %cst_63 = arith.constant dense<0.000000e+00> : vector<384x8xf32>
    %73 = tpu.matmul %70, %72, %cst_63 {dimension_numbers = #tpu.dot_dimension_numbers<[1], [0], [0], [1], [0, 0, 1, 1], [], []>} : vector<384x8xf32>, vector<8x8xf32>, vector<384x8xf32> -> vector<384x8xf32>
    %74 = arith.addf %65, %73 : vector<384x8xf32>
    %c0_i32_64 = arith.constant 0 : i32
    %75 = arith.addi %c0_i32_64, %1 : i32
    %c38_i32 = arith.constant 38 : i32
    %76 = arith.addi %75, %c38_i32 : i32
    %c0_65 = arith.constant 0 : index
    %c0_66 = arith.constant 0 : index
    %77 = arith.index_cast %76 : i32 to index
    %c0_67 = arith.constant 0 : index
    %78 = vector.load %arg3[%c0_65, %c0_66, %77, %c0_67] : memref<1x1x512x8xf32, #tpu.memory_space<vmem>>, vector<1x1x384x8xf32>
    %79 = vector.shape_cast %78 : vector<1x1x384x8xf32> to vector<384x8xf32>
    %c0_68 = arith.constant 0 : index
    %c8 = arith.constant 8 : index
    %c0_69 = arith.constant 0 : index
    %c0_70 = arith.constant 0 : index
    %80 = vector.load %arg4[%c0_68, %c8, %c0_69, %c0_70] : memref<1x9x8x8xf32, #tpu.memory_space<vmem>>, vector<1x1x8x8xf32>
    %81 = vector.shape_cast %80 : vector<1x1x8x8xf32> to vector<8x8xf32>
    %cst_71 = arith.constant dense<0.000000e+00> : vector<384x8xf32>
    %82 = tpu.matmul %79, %81, %cst_71 {dimension_numbers = #tpu.dot_dimension_numbers<[1], [0], [0], [1], [0, 0, 1, 1], [], []>} : vector<384x8xf32>, vector<8x8xf32>, vector<384x8xf32> -> vector<384x8xf32>
    %83 = arith.addf %74, %82 : vector<384x8xf32>
    %c0_72 = arith.constant 0 : index
    %c0_73 = arith.constant 0 : index
    %c0_74 = arith.constant 0 : index
    %84 = vector.load %arg5[%c0_72, %c0_73, %c0_74] : memref<1x1x8xf32, #tpu.memory_space<vmem>>, vector<1x1x8xf32>
    %85 = vector.shape_cast %84 : vector<1x1x8xf32> to vector<1x8xf32>
    %86 = vector.broadcast %85 : vector<1x8xf32> to vector<384x8xf32>
    %87 = arith.addf %83, %86 : vector<384x8xf32>
    %cst_75 = arith.constant 0.000000e+00 : f32
    %88 = vector.broadcast %cst_75 : f32 to vector<384x8xf32>
    %89 = arith.subf %88, %87 : vector<384x8xf32>
    %90 = math.exp %89 : vector<384x8xf32>
    %cst_76 = arith.constant 1.000000e+00 : f32
    %91 = vector.broadcast %cst_76 : f32 to vector<384x8xf32>
    %92 = arith.addf %91, %90 : vector<384x8xf32>
    %93 = tpu.reciprocal %92 : vector<384x8xf32> -> vector<384x8xf32>
    %94 = arith.mulf %87, %93 : vector<384x8xf32>
    %c0_77 = arith.constant 0 : index
    %c0_78 = arith.constant 0 : index
    %c0_79 = arith.constant 0 : index
    %c0_80 = arith.constant 0 : index
    %95 = vector.load %arg6[%c0_77, %c0_78, %c0_79, %c0_80] : memref<1x1x384x8xf32, #tpu.memory_space<vmem>>, vector<1x1x384x8xf32>
    %96 = vector.shape_cast %95 : vector<1x1x384x8xf32> to vector<384x8xf32>
    %97 = vector.shape_cast %94 : vector<384x8xf32> to vector<1x1x384x8xf32>
    tpu.vector_store %arg6[%c0_77, %c0_78, %c0_79, %c0_80], %97 {strides = array<i32>} : memref<1x1x384x8xf32, #tpu.memory_space<vmem>>, vector<1x1x384x8xf32>,
    return
  }
  func.func @transform_0(%arg0: i32, %arg1: i32, %arg2: i32) -> (i32, i32, i32, i32) {
    %c0_i32 = arith.constant 0 : i32
    %c0_i32_0 = arith.constant 0 : i32
    %c0_i32_1 = arith.constant 0 : i32
    return %arg0, %arg1, %c0_i32, %c0_i32_0 : i32, i32, i32, i32
  }
  func.func @transform_1(%arg0: i32, %arg1: i32, %arg2: i32) -> (i32, i32, i32, i32) {
    %c0_i32 = arith.constant 0 : i32
    %c0_i32_0 = arith.constant 0 : i32
    %c0_i32_1 = arith.constant 0 : i32
    %c0_i32_2 = arith.constant 0 : i32
    return %arg1, %c0_i32, %c0_i32_0, %c0_i32_1 : i32, i32, i32, i32
  }
  func.func @transform_2(%arg0: i32, %arg1: i32, %arg2: i32) -> (i32, i32, i32) {
    %c0_i32 = arith.constant 0 : i32
    %c0_i32_0 = arith.constant 0 : i32
    %c0_i32_1 = arith.constant 0 : i32
    return %arg1, %c0_i32, %c0_i32_0 : i32, i32, i32
  }
  func.func @transform_3(%arg0: i32, %arg1: i32, %arg2: i32) -> (i32, i32, i32, i32) {
    %c0_i32 = arith.constant 0 : i32
    %c0_i32_0 = arith.constant 0 : i32
    return %arg0, %arg1, %arg2, %c0_i32 : i32, i32, i32, i32
  }
}

</mosaic_0001>

<llo_original>
// kernel: tpu_custom_call.1
$region0: #{tpu_custom_call.1}
  #allocation0 [shape = 'u32[]', space=smem, size = 0x4, offset = 0x4, fixed_abs, tag = 'smem constant byte address 0x4 - core index']
  #allocation1 [shape = 'u32[144,128]{1,0:T(1,128)}', space=vmem, size = 0x12000, scoped, tag = 'internal scratch']
  %s0 = inlined_call_operand.vmem [shape: f32[2,1,512,8], index: 0, kind: input, shape index: {}]
  %s1 = inlined_call_operand.vmem [shape: f32[1,9,8,8], index: 1, kind: input, shape index: {}]
  %s2 = inlined_call_operand.vmem [shape: f32[1,1,8], index: 2, kind: input, shape index: {}]
  %s3 = inlined_call_operand.vmem [shape: f32[2,1,384,8], index: 3, kind: output, shape index: {}]
  %s4 = sld [smem:[#allocation0]]
  $region45: #{tpu_custom_call.1} parent=0
    _
  %s6 = ssub.s32 1, %s4
  %s7 = scalar_select 0, %s6, %s4
  loop: start=0, step=1, limit=4
  $region2: #{tpu_custom_call.1} parent=0 // loop_pre_header
    _
  $region3: #{tpu_custom_call.1} parent=0 // loop_header
    %s9 = sphi 0, %s13
    %p10 = scmp.ge.s32.totalorder %s9, 4
    %s16 = sphi 0, %s35
    %s17 = sphi 0, %s31
    %s18 = sphi 0, %s27
    %s19 = sphi 0, %s16
    %s20 = sphi 0, %s17
    %s21 = sphi 0, %s18
    %s22 = sphi 0, %s19
    %s23 = sphi 0, %s20
    %s24 = sphi 0, %s21
    %s40 = sphi 0, %s42
    %s43 = sphi 0, %s40
    %s44 = sphi 0, %s43
    %s60 = sphi 0, %s44
    %s66 = sphi 0, %s68
    %s69 = sphi 0, %s66
    %s70 = sphi 0, %s69
    %s86 = sphi 0, %s70
    %s92 = sphi 0, %s94
    %s95 = sphi 0, %s92
    %s96 = sphi 0, %s95
    %s112 = sphi 0, %s96
    %s122 = sphi 0, %s124
    %s125 = sphi 0, %s122
    %s126 = sphi 0, %s125
    %s142 = sphi 0, %s126
  $region4: #{tpu_custom_call.1} parent=0 // loop_header_branch
    %12 = sbr.rel (%p10) target = $region8
  $region5: #{tpu_custom_call.1} parent=0 // loop_body
    %s14 = ssub.s32 %s9, 1
    %s15 = ssub.s32 %s9, 2
    %s25 = sadd.s32 1, %s18
    %p26 = scmp.ge.s32.totalorder %s25, 1
    %s27 = scalar_select %p26, 0, %s25
    %s28 = sadd.s32 1, %s17
    %s29 = scalar_select %p26, %s28, %s17
    %p30 = scmp.ge.s32.totalorder %s29, 1
    %s31 = scalar_select %p30, 0, %s29
    %s32 = sadd.s32 1, %s16
    %s33 = scalar_select %p30, %s32, %s16
    %p34 = scmp.ge.s32.totalorder %s33, 2
    %s35 = scalar_select %p34, 0, %s33
    %s36 = ssub.s32 %s16, %s35
    %s37 = ssub.s32 %s17, %s31
    %s38 = sor.u32 %s36, %s37
    %p39 = scmp.eq.s32.totalorder %s38, 0
    %s41 = sadd.s32 %s40, 1
    %s42 = scalar_select %p39, %s40, %s41
    %p45 = pneg %p39
    %p46 = scmp.eq.s32.totalorder %s9, 1
    %p47 = por %p45, %p46
    %p48 = scmp.ne.s32.totalorder %s40, %s43
    %p49 = scmp.eq.s32.totalorder %s9, 0
    %p50 = por %p48, %p49
    %p51 = scmp.ne.s32.totalorder %s40, %s43
    %p52 = scmp.eq.s32.totalorder %s14, 1
    %p53 = por %p51, %p52
    %p54 = scmp.ne.s32.totalorder %s43, %s44
    %p55 = scmp.eq.s32.totalorder %s14, 0
    %p56 = por %p54, %p55
    %p57 = scmp.ne.s32.totalorder %s43, %s44
    %p58 = scmp.eq.s32.totalorder %s15, 1
    %p59 = por %p57, %p58
    %p61 = scmp.ne.s32.totalorder %s44, %s60
    %p62 = scmp.eq.s32.totalorder %s15, 0
    %p63 = por %p61, %p62
    %s64 = ssub.s32 %s17, %s31
    %p65 = scmp.eq.s32.totalorder %s64, 0
    %s67 = sadd.s32 %s66, 1
    %s68 = scalar_select %p65, %s66, %s67
    %p71 = pneg %p65
    %p72 = scmp.eq.s32.totalorder %s9, 1
    %p73 = por %p71, %p72
    %p74 = scmp.ne.s32.totalorder %s66, %s69
    %p75 = scmp.eq.s32.totalorder %s9, 0
    %p76 = por %p74, %p75
    %p77 = scmp.ne.s32.totalorder %s66, %s69
    %p78 = scmp.eq.s32.totalorder %s14, 1
    %p79 = por %p77, %p78
    %p80 = scmp.ne.s32.totalorder %s69, %s70
    %p81 = scmp.eq.s32.totalorder %s14, 0
    %p82 = por %p80, %p81
    %p83 = scmp.ne.s32.totalorder %s69, %s70
    %p84 = scmp.eq.s32.totalorder %s15, 1
    %p85 = por %p83, %p84
    %p87 = scmp.ne.s32.totalorder %s70, %s86
    %p88 = scmp.eq.s32.totalorder %s15, 0
    %p89 = por %p87, %p88
    %s90 = ssub.s32 %s17, %s31
    %p91 = scmp.eq.s32.totalorder %s90, 0
    %s93 = sadd.s32 %s92, 1
    %s94 = scalar_select %p91, %s92, %s93
    %p97 = pneg %p91
    %p98 = scmp.eq.s32.totalorder %s9, 1
    %p99 = por %p97, %p98
    %p100 = scmp.ne.s32.totalorder %s92, %s95
    %p101 = scmp.eq.s32.totalorder %s9, 0
    %p102 = por %p100, %p101
    %p103 = scmp.ne.s32.totalorder %s92, %s95
    %p104 = scmp.eq.s32.totalorder %s14, 1
    %p105 = por %p103, %p104
    %p106 = scmp.ne.s32.totalorder %s95, %s96
    %p107 = scmp.eq.s32.totalorder %s14, 0
    %p108 = por %p106, %p107
    %p109 = scmp.ne.s32.totalorder %s95, %s96
    %p110 = scmp.eq.s32.totalorder %s15, 1
    %p111 = por %p109, %p110
    %p113 = scmp.ne.s32.totalorder %s96, %s112
    %p114 = scmp.eq.s32.totalorder %s15, 0
    %p115 = por %p113, %p114
    %s116 = ssub.s32 %s16, %s35
    %s117 = ssub.s32 %s17, %s31
    %s118 = sor.u32 %s116, %s117
    %s119 = ssub.s32 %s18, %s27
    %s120 = sor.u32 %s118, %s119
    %p121 = scmp.eq.s32.totalorder %s120, 0
    %s123 = sadd.s32 %s122, 1
    %s124 = scalar_select %p121, %s122, %s123
    %p127 = pneg %p121
    %p128 = scmp.eq.s32.totalorder %s9, 1
    %p129 = por %p127, %p128
    %p130 = scmp.ne.s32.totalorder %s122, %s125
    %p131 = scmp.eq.s32.totalorder %s9, 0
    %p132 = por %p130, %p131
    %p133 = scmp.ne.s32.totalorder %s122, %s125
    %p134 = scmp.eq.s32.totalorder %s14, 1
    %p135 = por %p133, %p134
    %p136 = scmp.ne.s32.totalorder %s125, %s126
    %p137 = scmp.eq.s32.totalorder %s14, 0
    %p138 = por %p136, %p137
    %p139 = scmp.ne.s32.totalorder %s125, %s126
    %p140 = scmp.eq.s32.totalorder %s15, 1
    %p141 = por %p139, %p140
    %p143 = scmp.ne.s32.totalorder %s126, %s142
    %p144 = scmp.eq.s32.totalorder %s15, 0
    %p145 = por %p143, %p144
    %p146 = scmp.le.s32.totalorder 1, %s9
    %p147 = scmp.lt.s32.totalorder %s9, 3
    %p148 = pnand %p146, %p147
    %p149 = pneg %p148
    // Predicated region
    $region9: #{tpu_custom_call.1} parent=5 // pred_check
      _
    $region10: #{tpu_custom_call.1} parent=5 // pred_check_branch
      %151 = sbr.rel (%p148) target = $region12
    $region11: #{tpu_custom_call.1} parent=5 // pred_region
      %s152 = ssub.s32 %s9, 1
      // Predicated region
      $region13: #{tpu_custom_call.1} parent=11 // pred_check
        %p153 = pneg %p82
      $region14: #{tpu_custom_call.1} parent=11 // pred_check_branch
        %155 = sbr.rel (%p153) target = $region16
      $region15: #{tpu_custom_call.1} parent=11 // pred_region
        %p156 = scmp.lt.s32.totalorder %s20, 0
        %s157 = scalar_select %p156, %s20, 0
        %s158 = smul.addr %s157, 9
        %s159 = smul.addr %s158, 8
        %s160 = scalar_lea.vmem %s1, %s159
      $region16: #{tpu_custom_call.1} parent=11 // pred_fallthru
        _
      // Predicated region
      $region17: #{tpu_custom_call.1} parent=11 // pred_check
        %p161 = pneg %p108
      $region18: #{tpu_custom_call.1} parent=11 // pred_check_branch
        %163 = sbr.rel (%p161) target = $region20
      $region19: #{tpu_custom_call.1} parent=11 // pred_region
        %p164 = scmp.lt.s32.totalorder %s20, 0
        %s165 = scalar_select %p164, %s20, 0
        %s166 = scalar_lea.vmem %s2, %s165
      $region20: #{tpu_custom_call.1} parent=11 // pred_fallthru
        _
    $region12: #{tpu_custom_call.1} parent=5 // pred_fallthru
      _
    %p167 = scmp.lt.s32.totalorder %s9, 2
    // Predicated region
    $region21: #{tpu_custom_call.1} parent=5 // pred_check
      %p168 = pneg %p167
    $region22: #{tpu_custom_call.1} parent=5 // pred_check_branch
      %170 = sbr.rel (%p168) target = $region24
    $region23: #{tpu_custom_call.1} parent=5 // pred_region
      // Predicated region
      $region25: #{tpu_custom_call.1} parent=23 // pred_check
        %p171 = pneg %p50
      $region26: #{tpu_custom_call.1} parent=23 // pred_check_branch
        %173 = sbr.rel (%p171) target = $region28
      $region27: #{tpu_custom_call.1} parent=23 // pred_region
        %p174 = scmp.lt.s32.totalorder %s16, 1
        %s175 = scalar_select %p174, %s16, 1
        %p176 = scmp.lt.s32.totalorder %s17, 0
        %s177 = scalar_select %p176, %s17, 0
        %s178 = smul.addr %s177, 64
        %s179 = smul.addr %s175, 64
        %s180 = sadd.s32 %s178, %s179
        %s181 = smul.addr %s180, 8
        %s182 = scalar_lea.vmem %s0, %s181
      $region28: #{tpu_custom_call.1} parent=23 // pred_fallthru
        _
    $region24: #{tpu_custom_call.1} parent=5 // pred_fallthru
      _
    %p183 = scmp.le.s32.totalorder 1, %s9
    %p184 = scmp.lt.s32.totalorder %s9, 3
    %p185 = pnand %p183, %p184
    %p186 = pneg %p185
    // Predicated region
    $region29: #{tpu_custom_call.1} parent=5 // pred_check
      _
    $region30: #{tpu_custom_call.1} parent=5 // pred_check_branch
      %188 = sbr.rel (%p185) target = $region32
    $region31: #{tpu_custom_call.1} parent=5 // pred_region
      %s189 = ssub.s32 %s9, 1
      %p190 = scmp.lt.s32.totalorder %s19, 1
      %s191 = scalar_select %p190, %s19, 1
      %p192 = scmp.lt.s32.totalorder %s20, 0
      %s193 = scalar_select %p192, %s20, 0
      %s194 = smul.addr %s193, 64
      %s195 = smul.addr %s191, 64
      %s196 = sadd.s32 %s194, %s195
      %s197 = smul.addr %s196, 8
      %s198 = scalar_lea.vmem %s0, %s197
      %p199 = pneg %p56
      %p200 = pneg %p53
      %p201 = scmp.lt.s32.totalorder %s20, 0
      %s202 = scalar_select %p201, %s20, 0
      %s203 = smul.addr %s202, 9
      %s204 = smul.addr %s203, 8
      %s205 = scalar_lea.vmem %s1, %s204
      %p206 = pneg %p82
      %p207 = pneg %p79
      %p208 = scmp.lt.s32.totalorder %s20, 0
      %s209 = scalar_select %p208, %s20, 0
      %s210 = scalar_lea.vmem %s2, %s209
      %p211 = pneg %p108
      %p212 = pneg %p105
      %p213 = pneg %p138
      %p214 = pneg %p135
      %s215 = smul.u32 48, %s21
      %p216 = scmp.lt.s32.totalorder %s19, 1
      %s217 = scalar_select %p216, %s19, 1
      %p218 = scmp.lt.s32.totalorder %s20, 0
      %s219 = scalar_select %p218, %s20, 0
      %p220 = scmp.lt.s32.totalorder %s215, 47
      %s221 = scalar_select %p220, %s215, 47
      %s222 = smul.addr %s219, 48
      %s223 = sadd.s32 %s221, %s222
      %s224 = smul.addr %s217, 48
      %s225 = sadd.s32 %s223, %s224
      %s226 = smul.addr %s225, 8
      %s227 = scalar_lea.vmem %s3, %s226
      %p228 = scmp.lt.s32.totalorder %s19, 1
      %s229 = scalar_select %p228, %s19, 1
      %p230 = scmp.lt.s32.totalorder %s20, 0
      %s231 = scalar_select %p230, %s20, 0
      %s232 = smul.addr %s231, 64
      %s233 = smul.addr %s229, 64
      %s234 = sadd.s32 %s232, %s233
      %s235 = smul.addr %s234, 8
      %s236 = scalar_lea.vmem %s0, %s235
      %p237 = scmp.lt.s32.totalorder %s20, 0
      %s238 = scalar_select %p237, %s20, 0
      %s239 = smul.addr %s238, 9
      %s240 = smul.addr %s239, 8
      %s241 = scalar_lea.vmem %s1, %s240
      %p242 = scmp.lt.s32.totalorder %s20, 0
      %s243 = scalar_select %p242, %s20, 0
      %s244 = scalar_lea.vmem %s2, %s243
      %s245 = smul.u32 48, %s21
      %p246 = scmp.lt.s32.totalorder %s19, 1
      %s247 = scalar_select %p246, %s19, 1
      %p248 = scmp.lt.s32.totalorder %s20, 0
      %s249 = scalar_select %p248, %s20, 0
      %p250 = scmp.lt.s32.totalorder %s245, 47
      %s251 = scalar_select %p250, %s245, 47
      %s252 = smul.addr %s249, 48
      %s253 = sadd.s32 %s251, %s252
      %s254 = smul.addr %s247, 48
      %s255 = sadd.s32 %s253, %s254
      %s256 = smul.addr %s255, 8
      %s257 = scalar_lea.vmem %s3, %s256
      %s258 = smul.u32 48, %s21
      %s259 = smul.u32 %s21, 384
      %s260 = scalar_lea.vmem %s236, %s259
      %v261 = vld [vmem:[%s260] sm:$0xff]
      %v262 = vld [vmem:[%s260 + $0x8] sm:$0xff]
      %v263 = vld [vmem:[%s260 + $0x10] sm:$0xff]
      %v264 = vld [vmem:[%s260 + $0x18] sm:$0xff]
      %v265 = vld [vmem:[%s260 + $0x20] sm:$0xff]
      %v266 = vld [vmem:[%s260 + $0x28] sm:$0xff]
      %v267 = vld [vmem:[%s260 + $0x30] sm:$0xff]
      %v268 = vld [vmem:[%s260 + $0x38] sm:$0xff]
      %v269 = vld [vmem:[%s260 + $0x40] sm:$0xff]
      %v270 = vld [vmem:[%s260 + $0x48] sm:$0xff]
      %v271 = vld [vmem:[%s260 + $0x50] sm:$0xff]
      %v272 = vld [vmem:[%s260 + $0x58] sm:$0xff]
      %v273 = vld [vmem:[%s260 + $0x60] sm:$0xff]
      %v274 = vld [vmem:[%s260 + $0x68] sm:$0xff]
      %v275 = vld [vmem:[%s260 + $0x70] sm:$0xff]
      %v276 = vld [vmem:[%s260 + $0x78] sm:$0xff]
      %v277 = vld [vmem:[%s260 + $0x80] sm:$0xff]
      %v278 = vld [vmem:[%s260 + $0x88] sm:$0xff]
      %v279 = vld [vmem:[%s260 + $0x90] sm:$0xff]
      %v280 = vld [vmem:[%s260 + $0x98] sm:$0xff]
      %v281 = vld [vmem:[%s260 + $0xa0] sm:$0xff]
      %v282 = vld [vmem:[%s260 + $0xa8] sm:$0xff]
      %v283 = vld [vmem:[%s260 + $0xb0] sm:$0xff]
      %v284 = vld [vmem:[%s260 + $0xb8] sm:$0xff]
      %v285 = vld [vmem:[%s260 + $0xc0] sm:$0xff]
      %v286 = vld [vmem:[%s260 + $0xc8] sm:$0xff]
      %v287 = vld [vmem:[%s260 + $0xd0] sm:$0xff]
      %v288 = vld [vmem:[%s260 + $0xd8] sm:$0xff]
      %v289 = vld [vmem:[%s260 + $0xe0] sm:$0xff]
      %v290 = vld [vmem:[%s260 + $0xe8] sm:$0xff]
      %v291 = vld [vmem:[%s260 + $0xf0] sm:$0xff]
      %v292 = vld [vmem:[%s260 + $0xf8] sm:$0xff]
      %v293 = vld [vmem:[%s260 + $0x100] sm:$0xff]
      %v294 = vld [vmem:[%s260 + $0x108] sm:$0xff]
      %v295 = vld [vmem:[%s260 + $0x110] sm:$0xff]
      %v296 = vld [vmem:[%s260 + $0x118] sm:$0xff]
      %v297 = vld [vmem:[%s260 + $0x120] sm:$0xff]
      %v298 = vld [vmem:[%s260 + $0x128] sm:$0xff]
      %v299 = vld [vmem:[%s260 + $0x130] sm:$0xff]
      %v300 = vld [vmem:[%s260 + $0x138] sm:$0xff]
      %v301 = vld [vmem:[%s260 + $0x140] sm:$0xff]
      %v302 = vld [vmem:[%s260 + $0x148] sm:$0xff]
      %v303 = vld [vmem:[%s260 + $0x150] sm:$0xff]
      %v304 = vld [vmem:[%s260 + $0x158] sm:$0xff]
      %v305 = vld [vmem:[%s260 + $0x160] sm:$0xff]
      %v306 = vld [vmem:[%s260 + $0x168] sm:$0xff]
      %v307 = vld [vmem:[%s260 + $0x170] sm:$0xff]
      %v308 = vld [vmem:[%s260 + $0x178] sm:$0xff]
      %v309 = vld [vmem:[%s241] sm:$0xff]
      %s310 = sadd.s32 %s259, 1
      %s311 = scalar_lea.vmem %s236, %s310
      %v312 = vld [vmem:[%s311] sm:$0xff]
      %v313 = vld [vmem:[%s311 + $0x8] sm:$0xff]
      %v314 = vld [vmem:[%s311 + $0x10] sm:$0xff]
      %v315 = vld [vmem:[%s311 + $0x18] sm:$0xff]
      %v316 = vld [vmem:[%s311 + $0x20] sm:$0xff]
      %v317 = vld [vmem:[%s311 + $0x28] sm:$0xff]
      %v318 = vld [vmem:[%s311 + $0x30] sm:$0xff]
      %v319 = vld [vmem:[%s311 + $0x38] sm:$0xff]
      %v320 = vld [vmem:[%s311 + $0x40] sm:$0xff]
      %v321 = vld [vmem:[%s311 + $0x48] sm:$0xff]
      %v322 = vld [vmem:[%s311 + $0x50] sm:$0xff]
      %v323 = vld [vmem:[%s311 + $0x58] sm:$0xff]
      %v324 = vld [vmem:[%s311 + $0x60] sm:$0xff]
      %v325 = vld [vmem:[%s311 + $0x68] sm:$0xff]
      %v326 = vld [vmem:[%s311 + $0x70] sm:$0xff]
      %v327 = vld [vmem:[%s311 + $0x78] sm:$0xff]
      %v328 = vld [vmem:[%s311 + $0x80] sm:$0xff]
      %v329 = vld [vmem:[%s311 + $0x88] sm:$0xff]
      %v330 = vld [vmem:[%s311 + $0x90] sm:$0xff]
      %v331 = vld [vmem:[%s311 + $0x98] sm:$0xff]
      %v332 = vld [vmem:[%s311 + $0xa0] sm:$0xff]
      %v333 = vld [vmem:[%s311 + $0xa8] sm:$0xff]
      %v334 = vld [vmem:[%s311 + $0xb0] sm:$0xff]
      %v335 = vld [vmem:[%s311 + $0xb8] sm:$0xff]
      %v336 = vld [vmem:[%s311 + $0xc0] sm:$0xff]
      %v337 = vld [vmem:[%s311 + $0xc8] sm:$0xff]
      %v338 = vld [vmem:[%s311 + $0xd0] sm:$0xff]
      %v339 = vld [vmem:[%s311 + $0xd8] sm:$0xff]
      %v340 = vld [vmem:[%s311 + $0xe0] sm:$0xff]
      %v341 = vld [vmem:[%s311 + $0xe8] sm:$0xff]
      %v342 = vld [vmem:[%s311 + $0xf0] sm:$0xff]
      %v343 = vld [vmem:[%s311 + $0xf8] sm:$0xff]
      %v344 = vld [vmem:[%s311 + $0x100] sm:$0xff]
      %v345 = vld [vmem:[%s311 + $0x108] sm:$0xff]
      %v346 = vld [vmem:[%s311 + $0x110] sm:$0xff]
      %v347 = vld [vmem:[%s311 + $0x118] sm:$0xff]
      %v348 = vld [vmem:[%s311 + $0x120] sm:$0xff]
      %v349 = vld [vmem:[%s311 + $0x128] sm:$0xff]
      %v350 = vld [vmem:[%s311 + $0x130] sm:$0xff]
      %v351 = vld [vmem:[%s311 + $0x138] sm:$0xff]
      %v352 = vld [vmem:[%s311 + $0x140] sm:$0xff]
      %v353 = vld [vmem:[%s311 + $0x148] sm:$0xff]
      %v354 = vld [vmem:[%s311 + $0x150] sm:$0xff]
      %v355 = vld [vmem:[%s311 + $0x158] sm:$0xff]
      %v356 = vld [vmem:[%s311 + $0x160] sm:$0xff]
      %v357 = vld [vmem:[%s311 + $0x168] sm:$0xff]
      %v358 = vld [vmem:[%s311 + $0x170] sm:$0xff]
      %v359 = vld [vmem:[%s311 + $0x178] sm:$0xff]
      %s360 = scalar_lea.vmem %s241, 8
      %v361 = vld [vmem:[%s360] sm:$0xff]
      %vm362 = vcmask 64512
      %v364 = vsel %vm362, %v312, 0
      %v367 = vsel %vm362, %v313, 0
      %v370 = vsel %vm362, %v314, 0
      %v373 = vsel %vm362, %v315, 0
      %v376 = vsel %vm362, %v316, 0
      %v379 = vsel %vm362, %v317, 0
      %v382 = vsel %vm362, %v318, 0
      %v385 = vsel %vm362, %v319, 0
      %v388 = vsel %vm362, %v320, 0
      %v391 = vsel %vm362, %v321, 0
      %v394 = vsel %vm362, %v322, 0
      %v397 = vsel %vm362, %v323, 0
      %v400 = vsel %vm362, %v324, 0
      %v403 = vsel %vm362, %v325, 0
      %v406 = vsel %vm362, %v326, 0
      %v409 = vsel %vm362, %v327, 0
      %v412 = vsel %vm362, %v328, 0
      %v415 = vsel %vm362, %v329, 0
      %v418 = vsel %vm362, %v330, 0
      %v421 = vsel %vm362, %v331, 0
      %v424 = vsel %vm362, %v332, 0
      %v427 = vsel %vm362, %v333, 0
      %v430 = vsel %vm362, %v334, 0
      %v433 = vsel %vm362, %v335, 0
      %v436 = vsel %vm362, %v336, 0
      %v439 = vsel %vm362, %v337, 0
      %v442 = vsel %vm362, %v338, 0
      %v445 = vsel %vm362, %v339, 0
      %v448 = vsel %vm362, %v340, 0
      %v451 = vsel %vm362, %v341, 0
      %v454 = vsel %vm362, %v342, 0
      %v457 = vsel %vm362, %v343, 0
      %v460 = vsel %vm362, %v344, 0
      %v463 = vsel %vm362, %v345, 0
      %v466 = vsel %vm362, %v346, 0
      %v469 = vsel %vm362, %v347, 0
      %v472 = vsel %vm362, %v348, 0
      %v475 = vsel %vm362, %v349, 0
      %v478 = vsel %vm362, %v350, 0
      %v481 = vsel %vm362, %v351, 0
      %v484 = vsel %vm362, %v352, 0
      %v487 = vsel %vm362, %v353, 0
      %v490 = vsel %vm362, %v354, 0
      %v493 = vsel %vm362, %v355, 0
      %v496 = vsel %vm362, %v356, 0
      %v499 = vsel %vm362, %v357, 0
      %v502 = vsel %vm362, %v358, 0
      %v505 = vsel %vm362, %v359, 0
      %507 = vmatprep.subr.mxu0 0.0
      %508 = vmatpush1.msra.mxu0 0.0
      %509 = vmatprep.subr.mxu0 0.0
      %510 = vmatpush1.msra.mxu0 0.0
      %511 = vmatprep.subr.mxu0 0.0
      %512 = vmatpush1.msra.mxu0 0.0
      %513 = vmatprep.subr.mxu0 0.0
      %514 = vmatpush1.msra.mxu0 0.0
      %515 = vmatprep.subr.mxu0 0.0
      %516 = vmatpush1.msra.mxu0 0.0
      %517 = vmatprep.subr.mxu0 0.0
      %518 = vmatpush1.msra.mxu0 0.0
      %519 = vmatprep.subr.mxu0 0.0
      %520 = vmatpush1.msra.mxu0 0.0
      %521 = vmatprep.subr.mxu0 0.0
      %522 = vmatpush1.msra.mxu0 0.0
      %523 = vmatprep.subr.mxu0 0.0
      %524 = vmatpush1.msra.mxu0 0.0
      %525 = vmatprep.subr.mxu0 0.0
      %526 = vmatpush1.msra.mxu0 0.0
      %527 = vmatprep.subr.mxu0 0.0
      %528 = vmatpush1.msra.mxu0 0.0
      %529 = vmatprep.subr.mxu0 0.0
      %530 = vmatpush1.msra.mxu0 0.0
      %531 = vmatprep.subr.mxu0 0.0
      %532 = vmatpush1.msra.mxu0 0.0
      %533 = vmatprep.subr.mxu0 0.0
      %534 = vmatpush1.msra.mxu0 0.0
      %535 = vmatprep.subr.mxu0 0.0
      %536 = vmatpush1.msra.mxu0 0.0
      %537 = vmatprep.subr.mxu0 0.0
      %538 = vmatpush1.msra.mxu0 %v361
      %539 = vmatprep.subr.mxu0 0.0
      %540 = vmatpush2.msra.mxu0 0.0
      %541 = vmatprep.subr.mxu0 0.0
      %542 = vmatpush2.msra.mxu0 0.0
      %543 = vmatprep.subr.mxu0 0.0
      %544 = vmatpush2.msra.mxu0 0.0
      %545 = vmatprep.subr.mxu0 0.0
      %546 = vmatpush2.msra.mxu0 0.0
      %547 = vmatprep.subr.mxu0 0.0
      %548 = vmatpush2.msra.mxu0 0.0
      %549 = vmatprep.subr.mxu0 0.0
      %550 = vmatpush2.msra.mxu0 0.0
      %551 = vmatprep.subr.mxu0 0.0
      %552 = vmatpush2.msra.mxu0 0.0
      %553 = vmatprep.subr.mxu0 0.0
      %554 = vmatpush2.msra.mxu0 0.0
      %555 = vmatprep.subr.mxu0 0.0
      %556 = vmatpush2.msra.mxu0 0.0
      %557 = vmatprep.subr.mxu0 0.0
      %558 = vmatpush2.msra.mxu0 0.0
      %559 = vmatprep.subr.mxu0 0.0
      %560 = vmatpush2.msra.mxu0 0.0
      %561 = vmatprep.subr.mxu0 0.0
      %562 = vmatpush2.msra.mxu0 0.0
      %563 = vmatprep.subr.mxu0 0.0
      %564 = vmatpush2.msra.mxu0 0.0
      %565 = vmatprep.subr.mxu0 0.0
      %566 = vmatpush2.msra.mxu0 0.0
      %567 = vmatprep.subr.mxu0 0.0
      %568 = vmatpush2.msra.mxu0 0.0
      %569 = vmatprep.subr.mxu0 0.0
      %570 = vmatpush2.msra.mxu0 0.0
      %571 = vmatprep.mubr.f32.mxu0 0.0
      %572 = vmatmul.mubr.f32.gmra.mxu0 %v364
      %v573 = vpop.f32.mrf.mxu0
      %v574 = vadd.f32 0.0, %v573
      %v575 = vpop.f32.mrf.mxu0
      %576 = vmatprep.mubr.f32.mxu0 0.0
      %577 = vmatmul.mubr.f32.gmra.mxu0 %v367
      %v578 = vpop.f32.mrf.mxu0
      %v579 = vadd.f32 0.0, %v578
      %v580 = vpop.f32.mrf.mxu0
      %581 = vmatprep.mubr.f32.mxu0 0.0
      %582 = vmatmul.mubr.f32.gmra.mxu0 %v370
      %v583 = vpop.f32.mrf.mxu0
      %v584 = vadd.f32 0.0, %v583
      %v585 = vpop.f32.mrf.mxu0
      %586 = vmatprep.mubr.f32.mxu0 0.0
      %587 = vmatmul.mubr.f32.gmra.mxu0 %v373
      %v588 = vpop.f32.mrf.mxu0
      %v589 = vadd.f32 0.0, %v588
      %v590 = vpop.f32.mrf.mxu0
      %591 = vmatprep.mubr.f32.mxu0 0.0
      %592 = vmatmul.mubr.f32.gmra.mxu0 %v376
      %v593 = vpop.f32.mrf.mxu0
      %v594 = vadd.f32 0.0, %v593
      %v595 = vpop.f32.mrf.mxu0
      %596 = vmatprep.mubr.f32.mxu0 0.0
      %597 = vmatmul.mubr.f32.gmra.mxu0 %v379
      %v598 = vpop.f32.mrf.mxu0
      %v599 = vadd.f32 0.0, %v598
      %v600 = vpop.f32.mrf.mxu0
      %601 = vmatprep.mubr.f32.mxu0 0.0
      %602 = vmatmul.mubr.f32.gmra.mxu0 %v382
      %v603 = vpop.f32.mrf.mxu0
      %v604 = vadd.f32 0.0, %v603
      %v605 = vpop.f32.mrf.mxu0
      %606 = vmatprep.mubr.f32.mxu0 0.0
      %607 = vmatmul.mubr.f32.gmra.mxu0 %v385
      %v608 = vpop.f32.mrf.mxu0
      %v609 = vadd.f32 0.0, %v608
      %v610 = vpop.f32.mrf.mxu0
      %611 = vmatprep.mubr.f32.mxu0 0.0
      %612 = vmatmul.mubr.f32.gmra.mxu0 %v388
      %v613 = vpop.f32.mrf.mxu0
      %v614 = vadd.f32 0.0, %v613
      %v615 = vpop.f32.mrf.mxu0
      %616 = vmatprep.mubr.f32.mxu0 0.0
      %617 = vmatmul.mubr.f32.gmra.mxu0 %v391
      %v618 = vpop.f32.mrf.mxu0
      %v619 = vadd.f32 0.0, %v618
      %v620 = vpop.f32.mrf.mxu0
      %621 = vmatprep.mubr.f32.mxu0 0.0
      %622 = vmatmul.mubr.f32.gmra.mxu0 %v394
      %v623 = vpop.f32.mrf.mxu0
      %v624 = vadd.f32 0.0, %v623
      %v625 = vpop.f32.mrf.mxu0
      %626 = vmatprep.mubr.f32.mxu0 0.0
      %627 = vmatmul.mubr.f32.gmra.mxu0 %v397
      %v628 = vpop.f32.mrf.mxu0
      %v629 = vadd.f32 0.0, %v628
      %v630 = vpop.f32.mrf.mxu0
      %631 = vmatprep.mubr.f32.mxu0 0.0
      %632 = vmatmul.mubr.f32.gmra.mxu0 %v400
      %v633 = vpop.f32.mrf.mxu0
      %v634 = vadd.f32 0.0, %v633
      %v635 = vpop.f32.mrf.mxu0
      %636 = vmatprep.mubr.f32.mxu0 0.0
      %637 = vmatmul.mubr.f32.gmra.mxu0 %v403
      %v638 = vpop.f32.mrf.mxu0
      %v639 = vadd.f32 0.0, %v638
      %v640 = vpop.f32.mrf.mxu0
      %641 = vmatprep.mubr.f32.mxu0 0.0
      %642 = vmatmul.mubr.f32.gmra.mxu0 %v406
      %v643 = vpop.f32.mrf.mxu0
      %v644 = vadd.f32 0.0, %v643
      %v645 = vpop.f32.mrf.mxu0
      %646 = vmatprep.mubr.f32.mxu0 0.0
      %647 = vmatmul.mubr.f32.gmra.mxu0 %v409
      %v648 = vpop.f32.mrf.mxu0
      %v649 = vadd.f32 0.0, %v648
      %v650 = vpop.f32.mrf.mxu0
      %651 = vmatprep.mubr.f32.mxu0 0.0
      %652 = vmatmul.mubr.f32.gmra.mxu0 %v412
      %v653 = vpop.f32.mrf.mxu0
      %v654 = vadd.f32 0.0, %v653
      %v655 = vpop.f32.mrf.mxu0
      %656 = vmatprep.mubr.f32.mxu0 0.0
      %657 = vmatmul.mubr.f32.gmra.mxu0 %v415
      %v658 = vpop.f32.mrf.mxu0
      %v659 = vadd.f32 0.0, %v658
      %v660 = vpop.f32.mrf.mxu0
      %661 = vmatprep.mubr.f32.mxu0 0.0
      %662 = vmatmul.mubr.f32.gmra.mxu0 %v418
      %v663 = vpop.f32.mrf.mxu0
      %v664 = vadd.f32 0.0, %v663
      %v665 = vpop.f32.mrf.mxu0
      %666 = vmatprep.mubr.f32.mxu0 0.0
      %667 = vmatmul.mubr.f32.gmra.mxu0 %v421
      %v668 = vpop.f32.mrf.mxu0
      %v669 = vadd.f32 0.0, %v668
      %v670 = vpop.f32.mrf.mxu0
      %671 = vmatprep.mubr.f32.mxu0 0.0
      %672 = vmatmul.mubr.f32.gmra.mxu0 %v424
      %v673 = vpop.f32.mrf.mxu0
      %v674 = vadd.f32 0.0, %v673
      %v675 = vpop.f32.mrf.mxu0
      %676 = vmatprep.mubr.f32.mxu0 0.0
      %677 = vmatmul.mubr.f32.gmra.mxu0 %v427
      %v678 = vpop.f32.mrf.mxu0
      %v679 = vadd.f32 0.0, %v678
      %v680 = vpop.f32.mrf.mxu0
      %681 = vmatprep.mubr.f32.mxu0 0.0
      %682 = vmatmul.mubr.f32.gmra.mxu0 %v430
      %v683 = vpop.f32.mrf.mxu0
      %v684 = vadd.f32 0.0, %v683
      %v685 = vpop.f32.mrf.mxu0
      %686 = vmatprep.mubr.f32.mxu0 0.0
      %687 = vmatmul.mubr.f32.gmra.mxu0 %v433
      %v688 = vpop.f32.mrf.mxu0
      %v689 = vadd.f32 0.0, %v688
      %v690 = vpop.f32.mrf.mxu0
      %691 = vmatprep.mubr.f32.mxu0 0.0
      %692 = vmatmul.mubr.f32.gmra.mxu0 %v436
      %v693 = vpop.f32.mrf.mxu0
      %v694 = vadd.f32 0.0, %v693
      %v695 = vpop.f32.mrf.mxu0
      %696 = vmatprep.mubr.f32.mxu0 0.0
      %697 = vmatmul.mubr.f32.gmra.mxu0 %v439
      %v698 = vpop.f32.mrf.mxu0
      %v699 = vadd.f32 0.0, %v698
      %v700 = vpop.f32.mrf.mxu0
      %701 = vmatprep.mubr.f32.mxu0 0.0
      %702 = vmatmul.mubr.f32.gmra.mxu0 %v442
      %v703 = vpop.f32.mrf.mxu0
      %v704 = vadd.f32 0.0, %v703
      %v705 = vpop.f32.mrf.mxu0
      %706 = vmatprep.mubr.f32.mxu0 0.0
      %707 = vmatmul.mubr.f32.gmra.mxu0 %v445
      %v708 = vpop.f32.mrf.mxu0
      %v709 = vadd.f32 0.0, %v708
      %v710 = vpop.f32.mrf.mxu0
      %711 = vmatprep.mubr.f32.mxu0 0.0
      %712 = vmatmul.mubr.f32.gmra.mxu0 %v448
      %v713 = vpop.f32.mrf.mxu0
      %v714 = vadd.f32 0.0, %v713
      %v715 = vpop.f32.mrf.mxu0
      %716 = vmatprep.mubr.f32.mxu0 0.0
      %717 = vmatmul.mubr.f32.gmra.mxu0 %v451
      %v718 = vpop.f32.mrf.mxu0
      %v719 = vadd.f32 0.0, %v718
      %v720 = vpop.f32.mrf.mxu0
      %721 = vmatprep.mubr.f32.mxu0 0.0
      %722 = vmatmul.mubr.f32.gmra.mxu0 %v454
      %v723 = vpop.f32.mrf.mxu0
      %v724 = vadd.f32 0.0, %v723
      %v725 = vpop.f32.mrf.mxu0
      %726 = vmatprep.mubr.f32.mxu0 0.0
      %727 = vmatmul.mubr.f32.gmra.mxu0 %v457
      %v728 = vpop.f32.mrf.mxu0
      %v729 = vadd.f32 0.0, %v728
      %v730 = vpop.f32.mrf.mxu0
      %731 = vmatprep.mubr.f32.mxu0 0.0
      %732 = vmatmul.mubr.f32.gmra.mxu0 %v460
      %v733 = vpop.f32.mrf.mxu0
      %v734 = vadd.f32 0.0, %v733
      %v735 = vpop.f32.mrf.mxu0
      %736 = vmatprep.mubr.f32.mxu0 0.0
      %737 = vmatmul.mubr.f32.gmra.mxu0 %v463
      %v738 = vpop.f32.mrf.mxu0
      %v739 = vadd.f32 0.0, %v738
      %v740 = vpop.f32.mrf.mxu0
      %741 = vmatprep.mubr.f32.mxu0 0.0
      %742 = vmatmul.mubr.f32.gmra.mxu0 %v466
      %v743 = vpop.f32.mrf.mxu0
      %v744 = vadd.f32 0.0, %v743
      %v745 = vpop.f32.mrf.mxu0
      %746 = vmatprep.mubr.f32.mxu0 0.0
      %747 = vmatmul.mubr.f32.gmra.mxu0 %v469
      %v748 = vpop.f32.mrf.mxu0
      %v749 = vadd.f32 0.0, %v748
      %v750 = vpop.f32.mrf.mxu0
      %751 = vmatprep.mubr.f32.mxu0 0.0
      %752 = vmatmul.mubr.f32.gmra.mxu0 %v472
      %v753 = vpop.f32.mrf.mxu0
      %v754 = vadd.f32 0.0, %v753
      %v755 = vpop.f32.mrf.mxu0
      %756 = vmatprep.mubr.f32.mxu0 0.0
      %757 = vmatmul.mubr.f32.gmra.mxu0 %v475
      %v758 = vpop.f32.mrf.mxu0
      %v759 = vadd.f32 0.0, %v758
      %v760 = vpop.f32.mrf.mxu0
      %761 = vmatprep.mubr.f32.mxu0 0.0
      %762 = vmatmul.mubr.f32.gmra.mxu0 %v478
      %v763 = vpop.f32.mrf.mxu0
      %v764 = vadd.f32 0.0, %v763
      %v765 = vpop.f32.mrf.mxu0
      %766 = vmatprep.mubr.f32.mxu0 0.0
      %767 = vmatmul.mubr.f32.gmra.mxu0 %v481
      %v768 = vpop.f32.mrf.mxu0
      %v769 = vadd.f32 0.0, %v768
      %v770 = vpop.f32.mrf.mxu0
      %771 = vmatprep.mubr.f32.mxu0 0.0
      %772 = vmatmul.mubr.f32.gmra.mxu0 %v484
      %v773 = vpop.f32.mrf.mxu0
      %v774 = vadd.f32 0.0, %v773
      %v775 = vpop.f32.mrf.mxu0
      %776 = vmatprep.mubr.f32.mxu0 0.0
      %777 = vmatmul.mubr.f32.gmra.mxu0 %v487
      %v778 = vpop.f32.mrf.mxu0
      %v779 = vadd.f32 0.0, %v778
      %v780 = vpop.f32.mrf.mxu0
      %781 = vmatprep.mubr.f32.mxu0 0.0
      %782 = vmatmul.mubr.f32.gmra.mxu0 %v490
      %v783 = vpop.f32.mrf.mxu0
      %v784 = vadd.f32 0.0, %v783
      %v785 = vpop.f32.mrf.mxu0
      %786 = vmatprep.mubr.f32.mxu0 0.0
      %787 = vmatmul.mubr.f32.gmra.mxu0 %v493
      %v788 = vpop.f32.mrf.mxu0
      %v789 = vadd.f32 0.0, %v788
      %v790 = vpop.f32.mrf.mxu0
      %791 = vmatprep.mubr.f32.mxu0 0.0
      %792 = vmatmul.mubr.f32.gmra.mxu0 %v496
      %v793 = vpop.f32.mrf.mxu0
      %v794 = vadd.f32 0.0, %v793
      %v795 = vpop.f32.mrf.mxu0
      %796 = vmatprep.mubr.f32.mxu0 0.0
      %797 = vmatmul.mubr.f32.gmra.mxu0 %v499
      %v798 = vpop.f32.mrf.mxu0
      %v799 = vadd.f32 0.0, %v798
      %v800 = vpop.f32.mrf.mxu0
      %801 = vmatprep.mubr.f32.mxu0 0.0
      %802 = vmatmul.mubr.f32.gmra.mxu0 %v502
      %v803 = vpop.f32.mrf.mxu0
      %v804 = vadd.f32 0.0, %v803
      %v805 = vpop.f32.mrf.mxu0
      %806 = vmatprep.mubr.f32.mxu0 0.0
      %807 = vmatmul.mubr.f32.gmra.mxu0 %v505
      %v808 = vpop.f32.mrf.mxu0
      %v809 = vadd.f32 0.0, %v808
      %v810 = vpop.f32.mrf.mxu0
      %811 = vdwg.mxu0
      %v813 = vsel %vm362, %v261, 0
      %v816 = vsel %vm362, %v262, 0
      %v819 = vsel %vm362, %v263, 0
      %v822 = vsel %vm362, %v264, 0
      %v825 = vsel %vm362, %v265, 0
      %v828 = vsel %vm362, %v266, 0
      %v831 = vsel %vm362, %v267, 0
      %v834 = vsel %vm362, %v268, 0
      %v837 = vsel %vm362, %v269, 0
      %v840 = vsel %vm362, %v270, 0
      %v843 = vsel %vm362, %v271, 0
      %v846 = vsel %vm362, %v272, 0
      %v849 = vsel %vm362, %v273, 0
      %v852 = vsel %vm362, %v274, 0
      %v855 = vsel %vm362, %v275, 0
      %v858 = vsel %vm362, %v276, 0
      %v861 = vsel %vm362, %v277, 0
      %v864 = vsel %vm362, %v278, 0
      %v867 = vsel %vm362, %v279, 0
      %v870 = vsel %vm362, %v280, 0
      %v873 = vsel %vm362, %v281, 0
      %v876 = vsel %vm362, %v282, 0
      %v879 = vsel %vm362, %v283, 0
      %v882 = vsel %vm362, %v284, 0
      %v885 = vsel %vm362, %v285, 0
      %v888 = vsel %vm362, %v286, 0
      %v891 = vsel %vm362, %v287, 0
      %v894 = vsel %vm362, %v288, 0
      %v897 = vsel %vm362, %v289, 0
      %v900 = vsel %vm362, %v290, 0
      %v903 = vsel %vm362, %v291, 0
      %v906 = vsel %vm362, %v292, 0
      %v909 = vsel %vm362, %v293, 0
      %v912 = vsel %vm362, %v294, 0
      %v915 = vsel %vm362, %v295, 0
      %v918 = vsel %vm362, %v296, 0
      %v921 = vsel %vm362, %v297, 0
      %v924 = vsel %vm362, %v298, 0
      %v927 = vsel %vm362, %v299, 0
      %v930 = vsel %vm362, %v300, 0
      %v933 = vsel %vm362, %v301, 0
      %v936 = vsel %vm362, %v302, 0
      %v939 = vsel %vm362, %v303, 0
      %v942 = vsel %vm362, %v304, 0
      %v945 = vsel %vm362, %v305, 0
      %v948 = vsel %vm362, %v306, 0
      %v951 = vsel %vm362, %v307, 0
      %v954 = vsel %vm362, %v308, 0
      %956 = vmatprep.subr.mxu0 0.0
      %957 = vmatpush1.msra.mxu0 0.0
      %958 = vmatprep.subr.mxu0 0.0
      %959 = vmatpush1.msra.mxu0 0.0
      %960 = vmatprep.subr.mxu0 0.0
      %961 = vmatpush1.msra.mxu0 0.0
      %962 = vmatprep.subr.mxu0 0.0
      %963 = vmatpush1.msra.mxu0 0.0
      %964 = vmatprep.subr.mxu0 0.0
      %965 = vmatpush1.msra.mxu0 0.0
      %966 = vmatprep.subr.mxu0 0.0
      %967 = vmatpush1.msra.mxu0 0.0
      %968 = vmatprep.subr.mxu0 0.0
      %969 = vmatpush1.msra.mxu0 0.0
      %970 = vmatprep.subr.mxu0 0.0
      %971 = vmatpush1.msra.mxu0 0.0
      %972 = vmatprep.subr.mxu0 0.0
      %973 = vmatpush1.msra.mxu0 0.0
      %974 = vmatprep.subr.mxu0 0.0
      %975 = vmatpush1.msra.mxu0 0.0
      %976 = vmatprep.subr.mxu0 0.0
      %977 = vmatpush1.msra.mxu0 0.0
      %978 = vmatprep.subr.mxu0 0.0
      %979 = vmatpush1.msra.mxu0 0.0
      %980 = vmatprep.subr.mxu0 0.0
      %981 = vmatpush1.msra.mxu0 0.0
      %982 = vmatprep.subr.mxu0 0.0
      %983 = vmatpush1.msra.mxu0 0.0
      %984 = vmatprep.subr.mxu0 0.0
      %985 = vmatpush1.msra.mxu0 0.0
      %986 = vmatprep.subr.mxu0 0.0
      %987 = vmatpush1.msra.mxu0 %v309
      %988 = vmatprep.subr.mxu0 0.0
      %989 = vmatpush2.msra.mxu0 0.0
      %990 = vmatprep.subr.mxu0 0.0
      %991 = vmatpush2.msra.mxu0 0.0
      %992 = vmatprep.subr.mxu0 0.0
      %993 = vmatpush2.msra.mxu0 0.0
      %994 = vmatprep.subr.mxu0 0.0
      %995 = vmatpush2.msra.mxu0 0.0
      %996 = vmatprep.subr.mxu0 0.0
      %997 = vmatpush2.msra.mxu0 0.0
      %998 = vmatprep.subr.mxu0 0.0
      %999 = vmatpush2.msra.mxu0 0.0
      %1000 = vmatprep.subr.mxu0 0.0
      %1001 = vmatpush2.msra.mxu0 0.0
      %1002 = vmatprep.subr.mxu0 0.0
      %1003 = vmatpush2.msra.mxu0 0.0
      %1004 = vmatprep.subr.mxu0 0.0
      %1005 = vmatpush2.msra.mxu0 0.0
      %1006 = vmatprep.subr.mxu0 0.0
      %1007 = vmatpush2.msra.mxu0 0.0
      %1008 = vmatprep.subr.mxu0 0.0
      %1009 = vmatpush2.msra.mxu0 0.0
      %1010 = vmatprep.subr.mxu0 0.0
      %1011 = vmatpush2.msra.mxu0 0.0
      %1012 = vmatprep.subr.mxu0 0.0
      %1013 = vmatpush2.msra.mxu0 0.0
      %1014 = vmatprep.subr.mxu0 0.0
      %1015 = vmatpush2.msra.mxu0 0.0
      %1016 = vmatprep.subr.mxu0 0.0
      %1017 = vmatpush2.msra.mxu0 0.0
      %1018 = vmatprep.subr.mxu0 0.0
      %1019 = vmatpush2.msra.mxu0 0.0
      %1020 = vmatprep.mubr.f32.mxu0 0.0
      %1021 = vmatmul.mubr.f32.gmra.mxu0 %v813
      %v1022 = vpop.f32.mrf.mxu0
      %v1023 = vadd.f32 %v574, %v1022
      %v1024 = vpop.f32.mrf.mxu0
      %1025 = vmatprep.mubr.f32.mxu0 0.0
      %1026 = vmatmul.mubr.f32.gmra.mxu0 %v816
      %v1027 = vpop.f32.mrf.mxu0
      %v1028 = vadd.f32 %v579, %v1027
      %v1029 = vpop.f32.mrf.mxu0
      %1030 = vmatprep.mubr.f32.mxu0 0.0
      %1031 = vmatmul.mubr.f32.gmra.mxu0 %v819
      %v1032 = vpop.f32.mrf.mxu0
      %v1033 = vadd.f32 %v584, %v1032
      %v1034 = vpop.f32.mrf.mxu0
      %1035 = vmatprep.mubr.f32.mxu0 0.0
      %1036 = vmatmul.mubr.f32.gmra.mxu0 %v822
      %v1037 = vpop.f32.mrf.mxu0
      %v1038 = vadd.f32 %v589, %v1037
      %v1039 = vpop.f32.mrf.mxu0
      %1040 = vmatprep.mubr.f32.mxu0 0.0
      %1041 = vmatmul.mubr.f32.gmra.mxu0 %v825
      %v1042 = vpop.f32.mrf.mxu0
      %v1043 = vadd.f32 %v594, %v1042
      %v1044 = vpop.f32.mrf.mxu0
      %1045 = vmatprep.mubr.f32.mxu0 0.0
      %1046 = vmatmul.mubr.f32.gmra.mxu0 %v828
      %v1047 = vpop.f32.mrf.mxu0
      %v1048 = vadd.f32 %v599, %v1047
      %v1049 = vpop.f32.mrf.mxu0
      %1050 = vmatprep.mubr.f32.mxu0 0.0
      %1051 = vmatmul.mubr.f32.gmra.mxu0 %v831
      %v1052 = vpop.f32.mrf.mxu0
      %v1053 = vadd.f32 %v604, %v1052
      %v1054 = vpop.f32.mrf.mxu0
      %1055 = vmatprep.mubr.f32.mxu0 0.0
      %1056 = vmatmul.mubr.f32.gmra.mxu0 %v834
      %v1057 = vpop.f32.mrf.mxu0
      %v1058 = vadd.f32 %v609, %v1057
      %v1059 = vpop.f32.mrf.mxu0
      %1060 = vmatprep.mubr.f32.mxu0 0.0
      %1061 = vmatmul.mubr.f32.gmra.mxu0 %v837
      %v1062 = vpop.f32.mrf.mxu0
      %v1063 = vadd.f32 %v614, %v1062
      %v1064 = vpop.f32.mrf.mxu0
      %1065 = vmatprep.mubr.f32.mxu0 0.0
      %1066 = vmatmul.mubr.f32.gmra.mxu0 %v840
      %v1067 = vpop.f32.mrf.mxu0
      %v1068 = vadd.f32 %v619, %v1067
      %v1069 = vpop.f32.mrf.mxu0
      %1070 = vmatprep.mubr.f32.mxu0 0.0
      %1071 = vmatmul.mubr.f32.gmra.mxu0 %v843
      %v1072 = vpop.f32.mrf.mxu0
      %v1073 = vadd.f32 %v624, %v1072
      %v1074 = vpop.f32.mrf.mxu0
      %1075 = vmatprep.mubr.f32.mxu0 0.0
      %1076 = vmatmul.mubr.f32.gmra.mxu0 %v846
      %v1077 = vpop.f32.mrf.mxu0
      %v1078 = vadd.f32 %v629, %v1077
      %v1079 = vpop.f32.mrf.mxu0
      %1080 = vmatprep.mubr.f32.mxu0 0.0
      %1081 = vmatmul.mubr.f32.gmra.mxu0 %v849
      %v1082 = vpop.f32.mrf.mxu0
      %v1083 = vadd.f32 %v634, %v1082
      %v1084 = vpop.f32.mrf.mxu0
      %1085 = vmatprep.mubr.f32.mxu0 0.0
      %1086 = vmatmul.mubr.f32.gmra.mxu0 %v852
      %v1087 = vpop.f32.mrf.mxu0
      %v1088 = vadd.f32 %v639, %v1087
      %v1089 = vpop.f32.mrf.mxu0
      %1090 = vmatprep.mubr.f32.mxu0 0.0
      %1091 = vmatmul.mubr.f32.gmra.mxu0 %v855
      %v1092 = vpop.f32.mrf.mxu0
      %v1093 = vadd.f32 %v644, %v1092
      %v1094 = vpop.f32.mrf.mxu0
      %1095 = vmatprep.mubr.f32.mxu0 0.0
      %1096 = vmatmul.mubr.f32.gmra.mxu0 %v858
      %v1097 = vpop.f32.mrf.mxu0
      %v1098 = vadd.f32 %v649, %v1097
      %v1099 = vpop.f32.mrf.mxu0
      %1100 = vmatprep.mubr.f32.mxu0 0.0
      %1101 = vmatmul.mubr.f32.gmra.mxu0 %v861
      %v1102 = vpop.f32.mrf.mxu0
      %v1103 = vadd.f32 %v654, %v1102
      %v1104 = vpop.f32.mrf.mxu0
      %1105 = vmatprep.mubr.f32.mxu0 0.0
      %1106 = vmatmul.mubr.f32.gmra.mxu0 %v864
      %v1107 = vpop.f32.mrf.mxu0
      %v1108 = vadd.f32 %v659, %v1107
      %v1109 = vpop.f32.mrf.mxu0
      %1110 = vmatprep.mubr.f32.mxu0 0.0
      %1111 = vmatmul.mubr.f32.gmra.mxu0 %v867
      %v1112 = vpop.f32.mrf.mxu0
      %v1113 = vadd.f32 %v664, %v1112
      %v1114 = vpop.f32.mrf.mxu0
      %1115 = vmatprep.mubr.f32.mxu0 0.0
      %1116 = vmatmul.mubr.f32.gmra.mxu0 %v870
      %v1117 = vpop.f32.mrf.mxu0
      %v1118 = vadd.f32 %v669, %v1117
      %v1119 = vpop.f32.mrf.mxu0
      %1120 = vmatprep.mubr.f32.mxu0 0.0
      %1121 = vmatmul.mubr.f32.gmra.mxu0 %v873
      %v1122 = vpop.f32.mrf.mxu0
      %v1123 = vadd.f32 %v674, %v1122
      %v1124 = vpop.f32.mrf.mxu0
      %1125 = vmatprep.mubr.f32.mxu0 0.0
      %1126 = vmatmul.mubr.f32.gmra.mxu0 %v876
      %v1127 = vpop.f32.mrf.mxu0
      %v1128 = vadd.f32 %v679, %v1127
      %v1129 = vpop.f32.mrf.mxu0
      %1130 = vmatprep.mubr.f32.mxu0 0.0
      %1131 = vmatmul.mubr.f32.gmra.mxu0 %v879
      %v1132 = vpop.f32.mrf.mxu0
      %v1133 = vadd.f32 %v684, %v1132
      %v1134 = vpop.f32.mrf.mxu0
      %1135 = vmatprep.mubr.f32.mxu0 0.0
      %1136 = vmatmul.mubr.f32.gmra.mxu0 %v882
      %v1137 = vpop.f32.mrf.mxu0
      %v1138 = vadd.f32 %v689, %v1137
      %v1139 = vpop.f32.mrf.mxu0
      %1140 = vmatprep.mubr.f32.mxu0 0.0
      %1141 = vmatmul.mubr.f32.gmra.mxu0 %v885
      %v1142 = vpop.f32.mrf.mxu0
      %v1143 = vadd.f32 %v694, %v1142
      %v1144 = vpop.f32.mrf.mxu0
      %1145 = vmatprep.mubr.f32.mxu0 0.0
      %1146 = vmatmul.mubr.f32.gmra.mxu0 %v888
      %v1147 = vpop.f32.mrf.mxu0
      %v1148 = vadd.f32 %v699, %v1147
      %v1149 = vpop.f32.mrf.mxu0
      %1150 = vmatprep.mubr.f32.mxu0 0.0
      %1151 = vmatmul.mubr.f32.gmra.mxu0 %v891
      %v1152 = vpop.f32.mrf.mxu0
      %v1153 = vadd.f32 %v704, %v1152
      %v1154 = vpop.f32.mrf.mxu0
      %1155 = vmatprep.mubr.f32.mxu0 0.0
      %1156 = vmatmul.mubr.f32.gmra.mxu0 %v894
      %v1157 = vpop.f32.mrf.mxu0
      %v1158 = vadd.f32 %v709, %v1157
      %v1159 = vpop.f32.mrf.mxu0
      %1160 = vmatprep.mubr.f32.mxu0 0.0
      %1161 = vmatmul.mubr.f32.gmra.mxu0 %v897
      %v1162 = vpop.f32.mrf.mxu0
      %v1163 = vadd.f32 %v714, %v1162
      %v1164 = vpop.f32.mrf.mxu0
      %1165 = vmatprep.mubr.f32.mxu0 0.0
      %1166 = vmatmul.mubr.f32.gmra.mxu0 %v900
      %v1167 = vpop.f32.mrf.mxu0
      %v1168 = vadd.f32 %v719, %v1167
      %v1169 = vpop.f32.mrf.mxu0
      %1170 = vmatprep.mubr.f32.mxu0 0.0
      %1171 = vmatmul.mubr.f32.gmra.mxu0 %v903
      %v1172 = vpop.f32.mrf.mxu0
      %v1173 = vadd.f32 %v724, %v1172
      %v1174 = vpop.f32.mrf.mxu0
      %1175 = vmatprep.mubr.f32.mxu0 0.0
      %1176 = vmatmul.mubr.f32.gmra.mxu0 %v906
      %v1177 = vpop.f32.mrf.mxu0
      %v1178 = vadd.f32 %v729, %v1177
      %v1179 = vpop.f32.mrf.mxu0
      %1180 = vmatprep.mubr.f32.mxu0 0.0
      %1181 = vmatmul.mubr.f32.gmra.mxu0 %v909
      %v1182 = vpop.f32.mrf.mxu0
      %v1183 = vadd.f32 %v734, %v1182
      %v1184 = vpop.f32.mrf.mxu0
      %1185 = vmatprep.mubr.f32.mxu0 0.0
      %1186 = vmatmul.mubr.f32.gmra.mxu0 %v912
      %v1187 = vpop.f32.mrf.mxu0
      %v1188 = vadd.f32 %v739, %v1187
      %v1189 = vpop.f32.mrf.mxu0
      %1190 = vmatprep.mubr.f32.mxu0 0.0
      %1191 = vmatmul.mubr.f32.gmra.mxu0 %v915
      %v1192 = vpop.f32.mrf.mxu0
      %v1193 = vadd.f32 %v744, %v1192
      %v1194 = vpop.f32.mrf.mxu0
      %1195 = vmatprep.mubr.f32.mxu0 0.0
      %1196 = vmatmul.mubr.f32.gmra.mxu0 %v918
      %v1197 = vpop.f32.mrf.mxu0
      %v1198 = vadd.f32 %v749, %v1197
      %v1199 = vpop.f32.mrf.mxu0
      %1200 = vmatprep.mubr.f32.mxu0 0.0
      %1201 = vmatmul.mubr.f32.gmra.mxu0 %v921
      %v1202 = vpop.f32.mrf.mxu0
      %v1203 = vadd.f32 %v754, %v1202
      %v1204 = vpop.f32.mrf.mxu0
      %1205 = vmatprep.mubr.f32.mxu0 0.0
      %1206 = vmatmul.mubr.f32.gmra.mxu0 %v924
      %v1207 = vpop.f32.mrf.mxu0
      %v1208 = vadd.f32 %v759, %v1207
      %v1209 = vpop.f32.mrf.mxu0
      %1210 = vmatprep.mubr.f32.mxu0 0.0
      %1211 = vmatmul.mubr.f32.gmra.mxu0 %v927
      %v1212 = vpop.f32.mrf.mxu0
      %v1213 = vadd.f32 %v764, %v1212
      %v1214 = vpop.f32.mrf.mxu0
      %1215 = vmatprep.mubr.f32.mxu0 0.0
      %1216 = vmatmul.mubr.f32.gmra.mxu0 %v930
      %v1217 = vpop.f32.mrf.mxu0
      %v1218 = vadd.f32 %v769, %v1217
      %v1219 = vpop.f32.mrf.mxu0
      %1220 = vmatprep.mubr.f32.mxu0 0.0
      %1221 = vmatmul.mubr.f32.gmra.mxu0 %v933
      %v1222 = vpop.f32.mrf.mxu0
      %v1223 = vadd.f32 %v774, %v1222
      %v1224 = vpop.f32.mrf.mxu0
      %1225 = vmatprep.mubr.f32.mxu0 0.0
      %1226 = vmatmul.mubr.f32.gmra.mxu0 %v936
      %v1227 = vpop.f32.mrf.mxu0
      %v1228 = vadd.f32 %v779, %v1227
      %v1229 = vpop.f32.mrf.mxu0
      %1230 = vmatprep.mubr.f32.mxu0 0.0
      %1231 = vmatmul.mubr.f32.gmra.mxu0 %v939
      %v1232 = vpop.f32.mrf.mxu0
      %v1233 = vadd.f32 %v784, %v1232
      %v1234 = vpop.f32.mrf.mxu0
      %1235 = vmatprep.mubr.f32.mxu0 0.0
      %1236 = vmatmul.mubr.f32.gmra.mxu0 %v942
      %v1237 = vpop.f32.mrf.mxu0
      %v1238 = vadd.f32 %v789, %v1237
      %v1239 = vpop.f32.mrf.mxu0
      %1240 = vmatprep.mubr.f32.mxu0 0.0
      %1241 = vmatmul.mubr.f32.gmra.mxu0 %v945
      %v1242 = vpop.f32.mrf.mxu0
      %v1243 = vadd.f32 %v794, %v1242
      %v1244 = vpop.f32.mrf.mxu0
      %1245 = vmatprep.mubr.f32.mxu0 0.0
      %1246 = vmatmul.mubr.f32.gmra.mxu0 %v948
      %v1247 = vpop.f32.mrf.mxu0
      %v1248 = vadd.f32 %v799, %v1247
      %v1249 = vpop.f32.mrf.mxu0
      %1250 = vmatprep.mubr.f32.mxu0 0.0
      %1251 = vmatmul.mubr.f32.gmra.mxu0 %v951
      %v1252 = vpop.f32.mrf.mxu0
      %v1253 = vadd.f32 %v804, %v1252
      %v1254 = vpop.f32.mrf.mxu0
      %1255 = vmatprep.mubr.f32.mxu0 0.0
      %1256 = vmatmul.mubr.f32.gmra.mxu0 %v954
      %v1257 = vpop.f32.mrf.mxu0
      %v1258 = vadd.f32 %v809, %v1257
      %v1259 = vpop.f32.mrf.mxu0
      %1260 = vdwg.mxu0
      %s1261 = sadd.s32 %s259, 2
      %s1262 = scalar_lea.vmem %s236, %s1261
      %v1263 = vld [vmem:[%s1262] sm:$0xff]
      %v1264 = vld [vmem:[%s1262 + $0x8] sm:$0xff]
      %v1265 = vld [vmem:[%s1262 + $0x10] sm:$0xff]
      %v1266 = vld [vmem:[%s1262 + $0x18] sm:$0xff]
      %v1267 = vld [vmem:[%s1262 + $0x20] sm:$0xff]
      %v1268 = vld [vmem:[%s1262 + $0x28] sm:$0xff]
      %v1269 = vld [vmem:[%s1262 + $0x30] sm:$0xff]
      %v1270 = vld [vmem:[%s1262 + $0x38] sm:$0xff]
      %v1271 = vld [vmem:[%s1262 + $0x40] sm:$0xff]
      %v1272 = vld [vmem:[%s1262 + $0x48] sm:$0xff]
      %v1273 = vld [vmem:[%s1262 + $0x50] sm:$0xff]
      %v1274 = vld [vmem:[%s1262 + $0x58] sm:$0xff]
      %v1275 = vld [vmem:[%s1262 + $0x60] sm:$0xff]
      %v1276 = vld [vmem:[%s1262 + $0x68] sm:$0xff]
      %v1277 = vld [vmem:[%s1262 + $0x70] sm:$0xff]
      %v1278 = vld [vmem:[%s1262 + $0x78] sm:$0xff]
      %v1279 = vld [vmem:[%s1262 + $0x80] sm:$0xff]
      %v1280 = vld [vmem:[%s1262 + $0x88] sm:$0xff]
      %v1281 = vld [vmem:[%s1262 + $0x90] sm:$0xff]
      %v1282 = vld [vmem:[%s1262 + $0x98] sm:$0xff]
      %v1283 = vld [vmem:[%s1262 + $0xa0] sm:$0xff]
      %v1284 = vld [vmem:[%s1262 + $0xa8] sm:$0xff]
      %v1285 = vld [vmem:[%s1262 + $0xb0] sm:$0xff]
      %v1286 = vld [vmem:[%s1262 + $0xb8] sm:$0xff]
      %v1287 = vld [vmem:[%s1262 + $0xc0] sm:$0xff]
      %v1288 = vld [vmem:[%s1262 + $0xc8] sm:$0xff]
      %v1289 = vld [vmem:[%s1262 + $0xd0] sm:$0xff]
      %v1290 = vld [vmem:[%s1262 + $0xd8] sm:$0xff]
      %v1291 = vld [vmem:[%s1262 + $0xe0] sm:$0xff]
      %v1292 = vld [vmem:[%s1262 + $0xe8] sm:$0xff]
      %v1293 = vld [vmem:[%s1262 + $0xf0] sm:$0xff]
      %v1294 = vld [vmem:[%s1262 + $0xf8] sm:$0xff]
      %v1295 = vld [vmem:[%s1262 + $0x100] sm:$0xff]
      %v1296 = vld [vmem:[%s1262 + $0x108] sm:$0xff]
      %v1297 = vld [vmem:[%s1262 + $0x110] sm:$0xff]
      %v1298 = vld [vmem:[%s1262 + $0x118] sm:$0xff]
      %v1299 = vld [vmem:[%s1262 + $0x120] sm:$0xff]
      %v1300 = vld [vmem:[%s1262 + $0x128] sm:$0xff]
      %v1301 = vld [vmem:[%s1262 + $0x130] sm:$0xff]
      %v1302 = vld [vmem:[%s1262 + $0x138] sm:$0xff]
      %v1303 = vld [vmem:[%s1262 + $0x140] sm:$0xff]
      %v1304 = vld [vmem:[%s1262 + $0x148] sm:$0xff]
      %v1305 = vld [vmem:[%s1262 + $0x150] sm:$0xff]
      %v1306 = vld [vmem:[%s1262 + $0x158] sm:$0xff]
      %v1307 = vld [vmem:[%s1262 + $0x160] sm:$0xff]
      %v1308 = vld [vmem:[%s1262 + $0x168] sm:$0xff]
      %v1309 = vld [vmem:[%s1262 + $0x170] sm:$0xff]
      %v1310 = vld [vmem:[%s1262 + $0x178] sm:$0xff]
      %s1311 = scalar_lea.vmem %s241, 16
      %v1312 = vld [vmem:[%s1311] sm:$0xff]
      %v1314 = vsel %vm362, %v1263, 0
      %v1317 = vsel %vm362, %v1264, 0
      %v1320 = vsel %vm362, %v1265, 0
      %v1323 = vsel %vm362, %v1266, 0
      %v1326 = vsel %vm362, %v1267, 0
      %v1329 = vsel %vm362, %v1268, 0
      %v1332 = vsel %vm362, %v1269, 0
      %v1335 = vsel %vm362, %v1270, 0
      %v1338 = vsel %vm362, %v1271, 0
      %v1341 = vsel %vm362, %v1272, 0
      %v1344 = vsel %vm362, %v1273, 0
      %v1347 = vsel %vm362, %v1274, 0
      %v1350 = vsel %vm362, %v1275, 0
      %v1353 = vsel %vm362, %v1276, 0
      %v1356 = vsel %vm362, %v1277, 0
      %v1359 = vsel %vm362, %v1278, 0
      %v1362 = vsel %vm362, %v1279, 0
      %v1365 = vsel %vm362, %v1280, 0
      %v1368 = vsel %vm362, %v1281, 0
      %v1371 = vsel %vm362, %v1282, 0
      %v1374 = vsel %vm362, %v1283, 0
      %v1377 = vsel %vm362, %v1284, 0
      %v1380 = vsel %vm362, %v1285, 0
      %v1383 = vsel %vm362, %v1286, 0
      %v1386 = vsel %vm362, %v1287, 0
      %v1389 = vsel %vm362, %v1288, 0
      %v1392 = vsel %vm362, %v1289, 0
      %v1395 = vsel %vm362, %v1290, 0
      %v1398 = vsel %vm362, %v1291, 0
      %v1401 = vsel %vm362, %v1292, 0
      %v1404 = vsel %vm362, %v1293, 0
      %v1407 = vsel %vm362, %v1294, 0
      %v1410 = vsel %vm362, %v1295, 0
      %v1413 = vsel %vm362, %v1296, 0
      %v1416 = vsel %vm362, %v1297, 0
      %v1419 = vsel %vm362, %v1298, 0
      %v1422 = vsel %vm362, %v1299, 0
      %v1425 = vsel %vm362, %v1300, 0
      %v1428 = vsel %vm362, %v1301, 0
      %v1431 = vsel %vm362, %v1302, 0
      %v1434 = vsel %vm362, %v1303, 0
      %v1437 = vsel %vm362, %v1304, 0
      %v1440 = vsel %vm362, %v1305, 0
      %v1443 = vsel %vm362, %v1306, 0
      %v1446 = vsel %vm362, %v1307, 0
      %v1449 = vsel %vm362, %v1308, 0
      %v1452 = vsel %vm362, %v1309, 0
      %v1455 = vsel %vm362, %v1310, 0
      %1457 = vmatprep.subr.mxu0 0.0
      %1458 = vmatpush1.msra.mxu0 0.0
      %1459 = vmatprep.subr.mxu0 0.0
      %1460 = vmatpush1.msra.mxu0 0.0
      %1461 = vmatprep.subr.mxu0 0.0
      %1462 = vmatpush1.msra.mxu0 0.0
      %1463 = vmatprep.subr.mxu0 0.0
      %1464 = vmatpush1.msra.mxu0 0.0
      %1465 = vmatprep.subr.mxu0 0.0
      %1466 = vmatpush1.msra.mxu0 0.0
      %1467 = vmatprep.subr.mxu0 0.0
      %1468 = vmatpush1.msra.mxu0 0.0
      %1469 = vmatprep.subr.mxu0 0.0
      %1470 = vmatpush1.msra.mxu0 0.0
      %1471 = vmatprep.subr.mxu0 0.0
      %1472 = vmatpush1.msra.mxu0 0.0
      %1473 = vmatprep.subr.mxu0 0.0
      %1474 = vmatpush1.msra.mxu0 0.0
      %1475 = vmatprep.subr.mxu0 0.0
      %1476 = vmatpush1.msra.mxu0 0.0
      %1477 = vmatprep.subr.mxu0 0.0
      %1478 = vmatpush1.msra.mxu0 0.0
      %1479 = vmatprep.subr.mxu0 0.0
      %1480 = vmatpush1.msra.mxu0 0.0
      %1481 = vmatprep.subr.mxu0 0.0
      %1482 = vmatpush1.msra.mxu0 0.0
      %1483 = vmatprep.subr.mxu0 0.0
      %1484 = vmatpush1.msra.mxu0 0.0
      %1485 = vmatprep.subr.mxu0 0.0
      %1486 = vmatpush1.msra.mxu0 0.0
      %1487 = vmatprep.subr.mxu0 0.0
      %1488 = vmatpush1.msra.mxu0 %v1312
      %1489 = vmatprep.subr.mxu0 0.0
      %1490 = vmatpush2.msra.mxu0 0.0
      %1491 = vmatprep.subr.mxu0 0.0
      %1492 = vmatpush2.msra.mxu0 0.0
      %1493 = vmatprep.subr.mxu0 0.0
      %1494 = vmatpush2.msra.mxu0 0.0
      %1495 = vmatprep.subr.mxu0 0.0
      %1496 = vmatpush2.msra.mxu0 0.0
      %1497 = vmatprep.subr.mxu0 0.0
      %1498 = vmatpush2.msra.mxu0 0.0
      %1499 = vmatprep.subr.mxu0 0.0
      %1500 = vmatpush2.msra.mxu0 0.0
      %1501 = vmatprep.subr.mxu0 0.0
      %1502 = vmatpush2.msra.mxu0 0.0
      %1503 = vmatprep.subr.mxu0 0.0
      %1504 = vmatpush2.msra.mxu0 0.0
      %1505 = vmatprep.subr.mxu0 0.0
      %1506 = vmatpush2.msra.mxu0 0.0
      %1507 = vmatprep.subr.mxu0 0.0
      %1508 = vmatpush2.msra.mxu0 0.0
      %1509 = vmatprep.subr.mxu0 0.0
      %1510 = vmatpush2.msra.mxu0 0.0
      %1511 = vmatprep.subr.mxu0 0.0
      %1512 = vmatpush2.msra.mxu0 0.0
      %1513 = vmatprep.subr.mxu0 0.0
      %1514 = vmatpush2.msra.mxu0 0.0
      %1515 = vmatprep.subr.mxu0 0.0
      %1516 = vmatpush2.msra.mxu0 0.0
      %1517 = vmatprep.subr.mxu0 0.0
      %1518 = vmatpush2.msra.mxu0 0.0
      %1519 = vmatprep.subr.mxu0 0.0
      %1520 = vmatpush2.msra.mxu0 0.0
      %1521 = vmatprep.mubr.f32.mxu0 0.0
      %1522 = vmatmul.mubr.f32.gmra.mxu0 %v1314
      %v1523 = vpop.f32.mrf.mxu0
      %v1524 = vadd.f32 0.0, %v1523
      %v1525 = vpop.f32.mrf.mxu0
      %1526 = vmatprep.mubr.f32.mxu0 0.0
      %1527 = vmatmul.mubr.f32.gmra.mxu0 %v1317
      %v1528 = vpop.f32.mrf.mxu0
      %v1529 = vadd.f32 0.0, %v1528
      %v1530 = vpop.f32.mrf.mxu0
      %1531 = vmatprep.mubr.f32.mxu0 0.0
      %1532 = vmatmul.mubr.f32.gmra.mxu0 %v1320
      %v1533 = vpop.f32.mrf.mxu0
      %v1534 = vadd.f32 0.0, %v1533
      %v1535 = vpop.f32.mrf.mxu0
      %1536 = vmatprep.mubr.f32.mxu0 0.0
      %1537 = vmatmul.mubr.f32.gmra.mxu0 %v1323
      %v1538 = vpop.f32.mrf.mxu0
      %v1539 = vadd.f32 0.0, %v1538
      %v1540 = vpop.f32.mrf.mxu0
      %1541 = vmatprep.mubr.f32.mxu0 0.0
      %1542 = vmatmul.mubr.f32.gmra.mxu0 %v1326
      %v1543 = vpop.f32.mrf.mxu0
      %v1544 = vadd.f32 0.0, %v1543
      %v1545 = vpop.f32.mrf.mxu0
      %1546 = vmatprep.mubr.f32.mxu0 0.0
      %1547 = vmatmul.mubr.f32.gmra.mxu0 %v1329
      %v1548 = vpop.f32.mrf.mxu0
      %v1549 = vadd.f32 0.0, %v1548
      %v1550 = vpop.f32.mrf.mxu0
      %1551 = vmatprep.mubr.f32.mxu0 0.0
      %1552 = vmatmul.mubr.f32.gmra.mxu0 %v1332
      %v1553 = vpop.f32.mrf.mxu0
      %v1554 = vadd.f32 0.0, %v1553
      %v1555 = vpop.f32.mrf.mxu0
      %1556 = vmatprep.mubr.f32.mxu0 0.0
      %1557 = vmatmul.mubr.f32.gmra.mxu0 %v1335
      %v1558 = vpop.f32.mrf.mxu0
      %v1559 = vadd.f32 0.0, %v1558
      %v1560 = vpop.f32.mrf.mxu0
      %1561 = vmatprep.mubr.f32.mxu0 0.0
      %1562 = vmatmul.mubr.f32.gmra.mxu0 %v1338
      %v1563 = vpop.f32.mrf.mxu0
      %v1564 = vadd.f32 0.0, %v1563
      %v1565 = vpop.f32.mrf.mxu0
      %1566 = vmatprep.mubr.f32.mxu0 0.0
      %1567 = vmatmul.mubr.f32.gmra.mxu0 %v1341
      %v1568 = vpop.f32.mrf.mxu0
      %v1569 = vadd.f32 0.0, %v1568
      %v1570 = vpop.f32.mrf.mxu0
      %1571 = vmatprep.mubr.f32.mxu0 0.0
      %1572 = vmatmul.mubr.f32.gmra.mxu0 %v1344
      %v1573 = vpop.f32.mrf.mxu0
      %v1574 = vadd.f32 0.0, %v1573
      %v1575 = vpop.f32.mrf.mxu0
      %1576 = vmatprep.mubr.f32.mxu0 0.0
      %1577 = vmatmul.mubr.f32.gmra.mxu0 %v1347
      %v1578 = vpop.f32.mrf.mxu0
      %v1579 = vadd.f32 0.0, %v1578
      %v1580 = vpop.f32.mrf.mxu0
      %1581 = vmatprep.mubr.f32.mxu0 0.0
      %1582 = vmatmul.mubr.f32.gmra.mxu0 %v1350
      %v1583 = vpop.f32.mrf.mxu0
      %v1584 = vadd.f32 0.0, %v1583
      %v1585 = vpop.f32.mrf.mxu0
      %1586 = vmatprep.mubr.f32.mxu0 0.0
      %1587 = vmatmul.mubr.f32.gmra.mxu0 %v1353
      %v1588 = vpop.f32.mrf.mxu0
      %v1589 = vadd.f32 0.0, %v1588
      %v1590 = vpop.f32.mrf.mxu0
      %1591 = vmatprep.mubr.f32.mxu0 0.0
      %1592 = vmatmul.mubr.f32.gmra.mxu0 %v1356
      %v1593 = vpop.f32.mrf.mxu0
      %v1594 = vadd.f32 0.0, %v1593
      %v1595 = vpop.f32.mrf.mxu0
      %1596 = vmatprep.mubr.f32.mxu0 0.0
      %1597 = vmatmul.mubr.f32.gmra.mxu0 %v1359
      %v1598 = vpop.f32.mrf.mxu0
      %v1599 = vadd.f32 0.0, %v1598
      %v1600 = vpop.f32.mrf.mxu0
      %1601 = vmatprep.mubr.f32.mxu0 0.0
      %1602 = vmatmul.mubr.f32.gmra.mxu0 %v1362
      %v1603 = vpop.f32.mrf.mxu0
      %v1604 = vadd.f32 0.0, %v1603
      %v1605 = vpop.f32.mrf.mxu0
      %1606 = vmatprep.mubr.f32.mxu0 0.0
      %1607 = vmatmul.mubr.f32.gmra.mxu0 %v1365
      %v1608 = vpop.f32.mrf.mxu0
      %v1609 = vadd.f32 0.0, %v1608
      %v1610 = vpop.f32.mrf.mxu0
      %1611 = vmatprep.mubr.f32.mxu0 0.0
      %1612 = vmatmul.mubr.f32.gmra.mxu0 %v1368
      %v1613 = vpop.f32.mrf.mxu0
      %v1614 = vadd.f32 0.0, %v1613
      %v1615 = vpop.f32.mrf.mxu0
      %1616 = vmatprep.mubr.f32.mxu0 0.0
      %1617 = vmatmul.mubr.f32.gmra.mxu0 %v1371
      %v1618 = vpop.f32.mrf.mxu0
      %v1619 = vadd.f32 0.0, %v1618
      %v1620 = vpop.f32.mrf.mxu0
      %1621 = vmatprep.mubr.f32.mxu0 0.0
      %1622 = vmatmul.mubr.f32.gmra.mxu0 %v1374
      %v1623 = vpop.f32.mrf.mxu0
      %v1624 = vadd.f32 0.0, %v1623
      %v1625 = vpop.f32.mrf.mxu0
      %1626 = vmatprep.mubr.f32.mxu0 0.0
      %1627 = vmatmul.mubr.f32.gmra.mxu0 %v1377
      %v1628 = vpop.f32.mrf.mxu0
      %v1629 = vadd.f32 0.0, %v1628
      %v1630 = vpop.f32.mrf.mxu0
      %1631 = vmatprep.mubr.f32.mxu0 0.0
      %1632 = vmatmul.mubr.f32.gmra.mxu0 %v1380
      %v1633 = vpop.f32.mrf.mxu0
      %v1634 = vadd.f32 0.0, %v1633
      %v1635 = vpop.f32.mrf.mxu0
      %1636 = vmatprep.mubr.f32.mxu0 0.0
      %1637 = vmatmul.mubr.f32.gmra.mxu0 %v1383
      %v1638 = vpop.f32.mrf.mxu0
      %v1639 = vadd.f32 0.0, %v1638
      %v1640 = vpop.f32.mrf.mxu0
      %1641 = vmatprep.mubr.f32.mxu0 0.0
      %1642 = vmatmul.mubr.f32.gmra.mxu0 %v1386
      %v1643 = vpop.f32.mrf.mxu0
      %v1644 = vadd.f32 0.0, %v1643
      %v1645 = vpop.f32.mrf.mxu0
      %1646 = vmatprep.mubr.f32.mxu0 0.0
      %1647 = vmatmul.mubr.f32.gmra.mxu0 %v1389
      %v1648 = vpop.f32.mrf.mxu0
      %v1649 = vadd.f32 0.0, %v1648
      %v1650 = vpop.f32.mrf.mxu0
      %1651 = vmatprep.mubr.f32.mxu0 0.0
      %1652 = vmatmul.mubr.f32.gmra.mxu0 %v1392
      %v1653 = vpop.f32.mrf.mxu0
      %v1654 = vadd.f32 0.0, %v1653
      %v1655 = vpop.f32.mrf.mxu0
      %1656 = vmatprep.mubr.f32.mxu0 0.0
      %1657 = vmatmul.mubr.f32.gmra.mxu0 %v1395
      %v1658 = vpop.f32.mrf.mxu0
      %v1659 = vadd.f32 0.0, %v1658
      %v1660 = vpop.f32.mrf.mxu0
      %1661 = vmatprep.mubr.f32.mxu0 0.0
      %1662 = vmatmul.mubr.f32.gmra.mxu0 %v1398
      %v1663 = vpop.f32.mrf.mxu0
      %v1664 = vadd.f32 0.0, %v1663
      %v1665 = vpop.f32.mrf.mxu0
      %1666 = vmatprep.mubr.f32.mxu0 0.0
      %1667 = vmatmul.mubr.f32.gmra.mxu0 %v1401
      %v1668 = vpop.f32.mrf.mxu0
      %v1669 = vadd.f32 0.0, %v1668
      %v1670 = vpop.f32.mrf.mxu0
      %1671 = vmatprep.mubr.f32.mxu0 0.0
      %1672 = vmatmul.mubr.f32.gmra.mxu0 %v1404
      %v1673 = vpop.f32.mrf.mxu0
      %v1674 = vadd.f32 0.0, %v1673
      %v1675 = vpop.f32.mrf.mxu0
      %1676 = vmatprep.mubr.f32.mxu0 0.0
      %1677 = vmatmul.mubr.f32.gmra.mxu0 %v1407
      %v1678 = vpop.f32.mrf.mxu0
      %v1679 = vadd.f32 0.0, %v1678
      %v1680 = vpop.f32.mrf.mxu0
      %1681 = vmatprep.mubr.f32.mxu0 0.0
      %1682 = vmatmul.mubr.f32.gmra.mxu0 %v1410
      %v1683 = vpop.f32.mrf.mxu0
      %v1684 = vadd.f32 0.0, %v1683
      %v1685 = vpop.f32.mrf.mxu0
      %1686 = vmatprep.mubr.f32.mxu0 0.0
      %1687 = vmatmul.mubr.f32.gmra.mxu0 %v1413
      %v1688 = vpop.f32.mrf.mxu0
      %v1689 = vadd.f32 0.0, %v1688
      %v1690 = vpop.f32.mrf.mxu0
      %1691 = vmatprep.mubr.f32.mxu0 0.0
      %1692 = vmatmul.mubr.f32.gmra.mxu0 %v1416
      %v1693 = vpop.f32.mrf.mxu0
      %v1694 = vadd.f32 0.0, %v1693
      %v1695 = vpop.f32.mrf.mxu0
      %1696 = vmatprep.mubr.f32.mxu0 0.0
      %1697 = vmatmul.mubr.f32.gmra.mxu0 %v1419
      %v1698 = vpop.f32.mrf.mxu0
      %v1699 = vadd.f32 0.0, %v1698
      %v1700 = vpop.f32.mrf.mxu0
      %1701 = vmatprep.mubr.f32.mxu0 0.0
      %1702 = vmatmul.mubr.f32.gmra.mxu0 %v1422
      %v1703 = vpop.f32.mrf.mxu0
      %v1704 = vadd.f32 0.0, %v1703
      %v1705 = vpop.f32.mrf.mxu0
      %1706 = vmatprep.mubr.f32.mxu0 0.0
      %1707 = vmatmul.mubr.f32.gmra.mxu0 %v1425
      %v1708 = vpop.f32.mrf.mxu0
      %v1709 = vadd.f32 0.0, %v1708
      %v1710 = vpop.f32.mrf.mxu0
      %1711 = vmatprep.mubr.f32.mxu0 0.0
      %1712 = vmatmul.mubr.f32.gmra.mxu0 %v1428
      %v1713 = vpop.f32.mrf.mxu0
      %v1714 = vadd.f32 0.0, %v1713
      %v1715 = vpop.f32.mrf.mxu0
      %1716 = vmatprep.mubr.f32.mxu0 0.0
      %1717 = vmatmul.mubr.f32.gmra.mxu0 %v1431
      %v1718 = vpop.f32.mrf.mxu0
      %v1719 = vadd.f32 0.0, %v1718
      %v1720 = vpop.f32.mrf.mxu0
      %1721 = vmatprep.mubr.f32.mxu0 0.0
      %1722 = vmatmul.mubr.f32.gmra.mxu0 %v1434
      %v1723 = vpop.f32.mrf.mxu0
      %v1724 = vadd.f32 0.0, %v1723
      %v1725 = vpop.f32.mrf.mxu0
      %1726 = vmatprep.mubr.f32.mxu0 0.0
      %1727 = vmatmul.mubr.f32.gmra.mxu0 %v1437
      %v1728 = vpop.f32.mrf.mxu0
      %v1729 = vadd.f32 0.0, %v1728
      %v1730 = vpop.f32.mrf.mxu0
      %1731 = vmatprep.mubr.f32.mxu0 0.0
      %1732 = vmatmul.mubr.f32.gmra.mxu0 %v1440
      %v1733 = vpop.f32.mrf.mxu0
      %v1734 = vadd.f32 0.0, %v1733
      %v1735 = vpop.f32.mrf.mxu0
      %1736 = vmatprep.mubr.f32.mxu0 0.0
      %1737 = vmatmul.mubr.f32.gmra.mxu0 %v1443
      %v1738 = vpop.f32.mrf.mxu0
      %v1739 = vadd.f32 0.0, %v1738
      %v1740 = vpop.f32.mrf.mxu0
      %1741 = vmatprep.mubr.f32.mxu0 0.0
      %1742 = vmatmul.mubr.f32.gmra.mxu0 %v1446
      %v1743 = vpop.f32.mrf.mxu0
      %v1744 = vadd.f32 0.0, %v1743
      %v1745 = vpop.f32.mrf.mxu0
      %1746 = vmatprep.mubr.f32.mxu0 0.0
      %1747 = vmatmul.mubr.f32.gmra.mxu0 %v1449
      %v1748 = vpop.f32.mrf.mxu0
      %v1749 = vadd.f32 0.0, %v1748
      %v1750 = vpop.f32.mrf.mxu0
      %1751 = vmatprep.mubr.f32.mxu0 0.0
      %1752 = vmatmul.mubr.f32.gmra.mxu0 %v1452
      %v1753 = vpop.f32.mrf.mxu0
      %v1754 = vadd.f32 0.0, %v1753
      %v1755 = vpop.f32.mrf.mxu0
      %1756 = vmatprep.mubr.f32.mxu0 0.0
      %1757 = vmatmul.mubr.f32.gmra.mxu0 %v1455
      %v1758 = vpop.f32.mrf.mxu0
      %v1759 = vadd.f32 0.0, %v1758
      %v1760 = vpop.f32.mrf.mxu0
      %1761 = vdwg.mxu0
      %v1762 = vadd.f32 %v1023, %v1524
      %v1763 = vadd.f32 %v1028, %v1529
      %v1764 = vadd.f32 %v1033, %v1534
      %v1765 = vadd.f32 %v1038, %v1539
      %v1766 = vadd.f32 %v1043, %v1544
      %v1767 = vadd.f32 %v1048, %v1549
      %v1768 = vadd.f32 %v1053, %v1554
      %v1769 = vadd.f32 %v1058, %v1559
      %v1770 = vadd.f32 %v1063, %v1564
      %v1771 = vadd.f32 %v1068, %v1569
      %v1772 = vadd.f32 %v1073, %v1574
      %v1773 = vadd.f32 %v1078, %v1579
      %v1774 = vadd.f32 %v1083, %v1584
      %v1775 = vadd.f32 %v1088, %v1589
      %v1776 = vadd.f32 %v1093, %v1594
      %v1777 = vadd.f32 %v1098, %v1599
      %v1778 = vadd.f32 %v1103, %v1604
      %v1779 = vadd.f32 %v1108, %v1609
      %v1780 = vadd.f32 %v1113, %v1614
      %v1781 = vadd.f32 %v1118, %v1619
      %v1782 = vadd.f32 %v1123, %v1624
      %v1783 = vadd.f32 %v1128, %v1629
      %v1784 = vadd.f32 %v1133, %v1634
      %v1785 = vadd.f32 %v1138, %v1639
      %v1786 = vadd.f32 %v1143, %v1644
      %v1787 = vadd.f32 %v1148, %v1649
      %v1788 = vadd.f32 %v1153, %v1654
      %v1789 = vadd.f32 %v1158, %v1659
      %v1790 = vadd.f32 %v1163, %v1664
      %v1791 = vadd.f32 %v1168, %v1669
      %v1792 = vadd.f32 %v1173, %v1674
      %v1793 = vadd.f32 %v1178, %v1679
      %v1794 = vadd.f32 %v1183, %v1684
      %v1795 = vadd.f32 %v1188, %v1689
      %v1796 = vadd.f32 %v1193, %v1694
      %v1797 = vadd.f32 %v1198, %v1699
      %v1798 = vadd.f32 %v1203, %v1704
      %v1799 = vadd.f32 %v1208, %v1709
      %v1800 = vadd.f32 %v1213, %v1714
      %v1801 = vadd.f32 %v1218, %v1719
      %v1802 = vadd.f32 %v1223, %v1724
      %v1803 = vadd.f32 %v1228, %v1729
      %v1804 = vadd.f32 %v1233, %v1734
      %v1805 = vadd.f32 %v1238, %v1739
      %v1806 = vadd.f32 %v1243, %v1744
      %v1807 = vadd.f32 %v1248, %v1749
      %v1808 = vadd.f32 %v1253, %v1754
      %v1809 = vadd.f32 %v1258, %v1759
      %s1810 = sadd.s32 %s259, 18
      %s1811 = scalar_lea.vmem %s236, %s1810
      %v1812 = vld [vmem:[%s1811] sm:$0xff]
      %v1813 = vld [vmem:[%s1811 + $0x8] sm:$0xff]
      %v1814 = vld [vmem:[%s1811 + $0x10] sm:$0xff]
      %v1815 = vld [vmem:[%s1811 + $0x18] sm:$0xff]
      %v1816 = vld [vmem:[%s1811 + $0x20] sm:$0xff]
      %v1817 = vld [vmem:[%s1811 + $0x28] sm:$0xff]
      %v1818 = vld [vmem:[%s1811 + $0x30] sm:$0xff]
      %v1819 = vld [vmem:[%s1811 + $0x38] sm:$0xff]
      %v1820 = vld [vmem:[%s1811 + $0x40] sm:$0xff]
      %v1821 = vld [vmem:[%s1811 + $0x48] sm:$0xff]
      %v1822 = vld [vmem:[%s1811 + $0x50] sm:$0xff]
      %v1823 = vld [vmem:[%s1811 + $0x58] sm:$0xff]
      %v1824 = vld [vmem:[%s1811 + $0x60] sm:$0xff]
      %v1825 = vld [vmem:[%s1811 + $0x68] sm:$0xff]
      %v1826 = vld [vmem:[%s1811 + $0x70] sm:$0xff]
      %v1827 = vld [vmem:[%s1811 + $0x78] sm:$0xff]
      %v1828 = vld [vmem:[%s1811 + $0x80] sm:$0xff]
      %v1829 = vld [vmem:[%s1811 + $0x88] sm:$0xff]
      %v1830 = vld [vmem:[%s1811 + $0x90] sm:$0xff]
      %v1831 = vld [vmem:[%s1811 + $0x98] sm:$0xff]
      %v1832 = vld [vmem:[%s1811 + $0xa0] sm:$0xff]
      %v1833 = vld [vmem:[%s1811 + $0xa8] sm:$0xff]
      %v1834 = vld [vmem:[%s1811 + $0xb0] sm:$0xff]
      %v1835 = vld [vmem:[%s1811 + $0xb8] sm:$0xff]
      %v1836 = vld [vmem:[%s1811 + $0xc0] sm:$0xff]
      %v1837 = vld [vmem:[%s1811 + $0xc8] sm:$0xff]
      %v1838 = vld [vmem:[%s1811 + $0xd0] sm:$0xff]
      %v1839 = vld [vmem:[%s1811 + $0xd8] sm:$0xff]
      %v1840 = vld [vmem:[%s1811 + $0xe0] sm:$0xff]
      %v1841 = vld [vmem:[%s1811 + $0xe8] sm:$0xff]
      %v1842 = vld [vmem:[%s1811 + $0xf0] sm:$0xff]
      %v1843 = vld [vmem:[%s1811 + $0xf8] sm:$0xff]
      %v1844 = vld [vmem:[%s1811 + $0x100] sm:$0xff]
      %v1845 = vld [vmem:[%s1811 + $0x108] sm:$0xff]
      %v1846 = vld [vmem:[%s1811 + $0x110] sm:$0xff]
      %v1847 = vld [vmem:[%s1811 + $0x118] sm:$0xff]
      %v1848 = vld [vmem:[%s1811 + $0x120] sm:$0xff]
      %v1849 = vld [vmem:[%s1811 + $0x128] sm:$0xff]
      %v1850 = vld [vmem:[%s1811 + $0x130] sm:$0xff]
      %v1851 = vld [vmem:[%s1811 + $0x138] sm:$0xff]
      %v1852 = vld [vmem:[%s1811 + $0x140] sm:$0xff]
      %v1853 = vld [vmem:[%s1811 + $0x148] sm:$0xff]
      %v1854 = vld [vmem:[%s1811 + $0x150] sm:$0xff]
      %v1855 = vld [vmem:[%s1811 + $0x158] sm:$0xff]
      %v1856 = vld [vmem:[%s1811 + $0x160] sm:$0xff]
      %v1857 = vld [vmem:[%s1811 + $0x168] sm:$0xff]
      %v1858 = vld [vmem:[%s1811 + $0x170] sm:$0xff]
      %v1859 = vld [vmem:[%s1811 + $0x178] sm:$0xff]
      %s1860 = scalar_lea.vmem %s241, 24
      %v1861 = vld [vmem:[%s1860] sm:$0xff]
      %v1863 = vsel %vm362, %v1812, 0
      %v1866 = vsel %vm362, %v1813, 0
      %v1869 = vsel %vm362, %v1814, 0
      %v1872 = vsel %vm362, %v1815, 0
      %v1875 = vsel %vm362, %v1816, 0
      %v1878 = vsel %vm362, %v1817, 0
      %v1881 = vsel %vm362, %v1818, 0
      %v1884 = vsel %vm362, %v1819, 0
      %v1887 = vsel %vm362, %v1820, 0
      %v1890 = vsel %vm362, %v1821, 0
      %v1893 = vsel %vm362, %v1822, 0
      %v1896 = vsel %vm362, %v1823, 0
      %v1899 = vsel %vm362, %v1824, 0
      %v1902 = vsel %vm362, %v1825, 0
      %v1905 = vsel %vm362, %v1826, 0
      %v1908 = vsel %vm362, %v1827, 0
      %v1911 = vsel %vm362, %v1828, 0
      %v1914 = vsel %vm362, %v1829, 0
      %v1917 = vsel %vm362, %v1830, 0
      %v1920 = vsel %vm362, %v1831, 0
      %v1923 = vsel %vm362, %v1832, 0
      %v1926 = vsel %vm362, %v1833, 0
      %v1929 = vsel %vm362, %v1834, 0
      %v1932 = vsel %vm362, %v1835, 0
      %v1935 = vsel %vm362, %v1836, 0
      %v1938 = vsel %vm362, %v1837, 0
      %v1941 = vsel %vm362, %v1838, 0
      %v1944 = vsel %vm362, %v1839, 0
      %v1947 = vsel %vm362, %v1840, 0
      %v1950 = vsel %vm362, %v1841, 0
      %v1953 = vsel %vm362, %v1842, 0
      %v1956 = vsel %vm362, %v1843, 0
      %v1959 = vsel %vm362, %v1844, 0
      %v1962 = vsel %vm362, %v1845, 0
      %v1965 = vsel %vm362, %v1846, 0
      %v1968 = vsel %vm362, %v1847, 0
      %v1971 = vsel %vm362, %v1848, 0
      %v1974 = vsel %vm362, %v1849, 0
      %v1977 = vsel %vm362, %v1850, 0
      %v1980 = vsel %vm362, %v1851, 0
      %v1983 = vsel %vm362, %v1852, 0
      %v1986 = vsel %vm362, %v1853, 0
      %v1989 = vsel %vm362, %v1854, 0
      %v1992 = vsel %vm362, %v1855, 0
      %v1995 = vsel %vm362, %v1856, 0
      %v1998 = vsel %vm362, %v1857, 0
      %v2001 = vsel %vm362, %v1858, 0
      %v2004 = vsel %vm362, %v1859, 0
      %2006 = vmatprep.subr.mxu0 0.0
      %2007 = vmatpush1.msra.mxu0 0.0
      %2008 = vmatprep.subr.mxu0 0.0
      %2009 = vmatpush1.msra.mxu0 0.0
      %2010 = vmatprep.subr.mxu0 0.0
      %2011 = vmatpush1.msra.mxu0 0.0
      %2012 = vmatprep.subr.mxu0 0.0
      %2013 = vmatpush1.msra.mxu0 0.0
      %2014 = vmatprep.subr.mxu0 0.0
      %2015 = vmatpush1.msra.mxu0 0.0
      %2016 = vmatprep.subr.mxu0 0.0
      %2017 = vmatpush1.msra.mxu0 0.0
      %2018 = vmatprep.subr.mxu0 0.0
      %2019 = vmatpush1.msra.mxu0 0.0
      %2020 = vmatprep.subr.mxu0 0.0
      %2021 = vmatpush1.msra.mxu0 0.0
      %2022 = vmatprep.subr.mxu0 0.0
      %2023 = vmatpush1.msra.mxu0 0.0
      %2024 = vmatprep.subr.mxu0 0.0
      %2025 = vmatpush1.msra.mxu0 0.0
      %2026 = vmatprep.subr.mxu0 0.0
      %2027 = vmatpush1.msra.mxu0 0.0
      %2028 = vmatprep.subr.mxu0 0.0
      %2029 = vmatpush1.msra.mxu0 0.0
      %2030 = vmatprep.subr.mxu0 0.0
      %2031 = vmatpush1.msra.mxu0 0.0
      %2032 = vmatprep.subr.mxu0 0.0
      %2033 = vmatpush1.msra.mxu0 0.0
      %2034 = vmatprep.subr.mxu0 0.0
      %2035 = vmatpush1.msra.mxu0 0.0
      %2036 = vmatprep.subr.mxu0 0.0
      %2037 = vmatpush1.msra.mxu0 %v1861
      %2038 = vmatprep.subr.mxu0 0.0
      %2039 = vmatpush2.msra.mxu0 0.0
      %2040 = vmatprep.subr.mxu0 0.0
      %2041 = vmatpush2.msra.mxu0 0.0
      %2042 = vmatprep.subr.mxu0 0.0
      %2043 = vmatpush2.msra.mxu0 0.0
      %2044 = vmatprep.subr.mxu0 0.0
      %2045 = vmatpush2.msra.mxu0 0.0
      %2046 = vmatprep.subr.mxu0 0.0
      %2047 = vmatpush2.msra.mxu0 0.0
      %2048 = vmatprep.subr.mxu0 0.0
      %2049 = vmatpush2.msra.mxu0 0.0
      %2050 = vmatprep.subr.mxu0 0.0
      %2051 = vmatpush2.msra.mxu0 0.0
      %2052 = vmatprep.subr.mxu0 0.0
      %2053 = vmatpush2.msra.mxu0 0.0
      %2054 = vmatprep.subr.mxu0 0.0
      %2055 = vmatpush2.msra.mxu0 0.0
      %2056 = vmatprep.subr.mxu0 0.0
      %2057 = vmatpush2.msra.mxu0 0.0
      %2058 = vmatprep.subr.mxu0 0.0
      %2059 = vmatpush2.msra.mxu0 0.0
      %2060 = vmatprep.subr.mxu0 0.0
      %2061 = vmatpush2.msra.mxu0 0.0
      %2062 = vmatprep.subr.mxu0 0.0
      %2063 = vmatpush2.msra.mxu0 0.0
      %2064 = vmatprep.subr.mxu0 0.0
      %2065 = vmatpush2.msra.mxu0 0.0
      %2066 = vmatprep.subr.mxu0 0.0
      %2067 = vmatpush2.msra.mxu0 0.0
      %2068 = vmatprep.subr.mxu0 0.0
      %2069 = vmatpush2.msra.mxu0 0.0
      %2070 = vmatprep.mubr.f32.mxu0 0.0
      %2071 = vmatmul.mubr.f32.gmra.mxu0 %v1863
      %v2072 = vpop.f32.mrf.mxu0
      %v2073 = vadd.f32 0.0, %v2072
      %v2074 = vpop.f32.mrf.mxu0
      %2075 = vmatprep.mubr.f32.mxu0 0.0
      %2076 = vmatmul.mubr.f32.gmra.mxu0 %v1866
      %v2077 = vpop.f32.mrf.mxu0
      %v2078 = vadd.f32 0.0, %v2077
      %v2079 = vpop.f32.mrf.mxu0
      %2080 = vmatprep.mubr.f32.mxu0 0.0
      %2081 = vmatmul.mubr.f32.gmra.mxu0 %v1869
      %v2082 = vpop.f32.mrf.mxu0
      %v2083 = vadd.f32 0.0, %v2082
      %v2084 = vpop.f32.mrf.mxu0
      %2085 = vmatprep.mubr.f32.mxu0 0.0
      %2086 = vmatmul.mubr.f32.gmra.mxu0 %v1872
      %v2087 = vpop.f32.mrf.mxu0
      %v2088 = vadd.f32 0.0, %v2087
      %v2089 = vpop.f32.mrf.mxu0
      %2090 = vmatprep.mubr.f32.mxu0 0.0
      %2091 = vmatmul.mubr.f32.gmra.mxu0 %v1875
      %v2092 = vpop.f32.mrf.mxu0
      %v2093 = vadd.f32 0.0, %v2092
      %v2094 = vpop.f32.mrf.mxu0
      %2095 = vmatprep.mubr.f32.mxu0 0.0
      %2096 = vmatmul.mubr.f32.gmra.mxu0 %v1878
      %v2097 = vpop.f32.mrf.mxu0
      %v2098 = vadd.f32 0.0, %v2097
      %v2099 = vpop.f32.mrf.mxu0
      %2100 = vmatprep.mubr.f32.mxu0 0.0
      %2101 = vmatmul.mubr.f32.gmra.mxu0 %v1881
      %v2102 = vpop.f32.mrf.mxu0
      %v2103 = vadd.f32 0.0, %v2102
      %v2104 = vpop.f32.mrf.mxu0
      %2105 = vmatprep.mubr.f32.mxu0 0.0
      %2106 = vmatmul.mubr.f32.gmra.mxu0 %v1884
      %v2107 = vpop.f32.mrf.mxu0
      %v2108 = vadd.f32 0.0, %v2107
      %v2109 = vpop.f32.mrf.mxu0
      %2110 = vmatprep.mubr.f32.mxu0 0.0
      %2111 = vmatmul.mubr.f32.gmra.mxu0 %v1887
      %v2112 = vpop.f32.mrf.mxu0
      %v2113 = vadd.f32 0.0, %v2112
      %v2114 = vpop.f32.mrf.mxu0
      %2115 = vmatprep.mubr.f32.mxu0 0.0
      %2116 = vmatmul.mubr.f32.gmra.mxu0 %v1890
      %v2117 = vpop.f32.mrf.mxu0
      %v2118 = vadd.f32 0.0, %v2117
      %v2119 = vpop.f32.mrf.mxu0
      %2120 = vmatprep.mubr.f32.mxu0 0.0
      %2121 = vmatmul.mubr.f32.gmra.mxu0 %v1893
      %v2122 = vpop.f32.mrf.mxu0
      %v2123 = vadd.f32 0.0, %v2122
      %v2124 = vpop.f32.mrf.mxu0
      %2125 = vmatprep.mubr.f32.mxu0 0.0
      %2126 = vmatmul.mubr.f32.gmra.mxu0 %v1896
      %v2127 = vpop.f32.mrf.mxu0
      %v2128 = vadd.f32 0.0, %v2127
      %v2129 = vpop.f32.mrf.mxu0
      %2130 = vmatprep.mubr.f32.mxu0 0.0
      %2131 = vmatmul.mubr.f32.gmra.mxu0 %v1899
      %v2132 = vpop.f32.mrf.mxu0
      %v2133 = vadd.f32 0.0, %v2132
      %v2134 = vpop.f32.mrf.mxu0
      %2135 = vmatprep.mubr.f32.mxu0 0.0
      %2136 = vmatmul.mubr.f32.gmra.mxu0 %v1902
      %v2137 = vpop.f32.mrf.mxu0
      %v2138 = vadd.f32 0.0, %v2137
      %v2139 = vpop.f32.mrf.mxu0
      %2140 = vmatprep.mubr.f32.mxu0 0.0
      %2141 = vmatmul.mubr.f32.gmra.mxu0 %v1905
      %v2142 = vpop.f32.mrf.mxu0
      %v2143 = vadd.f32 0.0, %v2142
      %v2144 = vpop.f32.mrf.mxu0
      %2145 = vmatprep.mubr.f32.mxu0 0.0
      %2146 = vmatmul.mubr.f32.gmra.mxu0 %v1908
      %v2147 = vpop.f32.mrf.mxu0
      %v2148 = vadd.f32 0.0, %v2147
      %v2149 = vpop.f32.mrf.mxu0
      %2150 = vmatprep.mubr.f32.mxu0 0.0
      %2151 = vmatmul.mubr.f32.gmra.mxu0 %v1911
      %v2152 = vpop.f32.mrf.mxu0
      %v2153 = vadd.f32 0.0, %v2152
      %v2154 = vpop.f32.mrf.mxu0
      %2155 = vmatprep.mubr.f32.mxu0 0.0
      %2156 = vmatmul.mubr.f32.gmra.mxu0 %v1914
      %v2157 = vpop.f32.mrf.mxu0
      %v2158 = vadd.f32 0.0, %v2157
      %v2159 = vpop.f32.mrf.mxu0
      %2160 = vmatprep.mubr.f32.mxu0 0.0
      %2161 = vmatmul.mubr.f32.gmra.mxu0 %v1917
      %v2162 = vpop.f32.mrf.mxu0
      %v2163 = vadd.f32 0.0, %v2162
      %v2164 = vpop.f32.mrf.mxu0
      %2165 = vmatprep.mubr.f32.mxu0 0.0
      %2166 = vmatmul.mubr.f32.gmra.mxu0 %v1920
      %v2167 = vpop.f32.mrf.mxu0
      %v2168 = vadd.f32 0.0, %v2167
      %v2169 = vpop.f32.mrf.mxu0
      %2170 = vmatprep.mubr.f32.mxu0 0.0
      %2171 = vmatmul.mubr.f32.gmra.mxu0 %v1923
      %v2172 = vpop.f32.mrf.mxu0
      %v2173 = vadd.f32 0.0, %v2172
      %v2174 = vpop.f32.mrf.mxu0
      %2175 = vmatprep.mubr.f32.mxu0 0.0
      %2176 = vmatmul.mubr.f32.gmra.mxu0 %v1926
      %v2177 = vpop.f32.mrf.mxu0
      %v2178 = vadd.f32 0.0, %v2177
      %v2179 = vpop.f32.mrf.mxu0
      %2180 = vmatprep.mubr.f32.mxu0 0.0
      %2181 = vmatmul.mubr.f32.gmra.mxu0 %v1929
      %v2182 = vpop.f32.mrf.mxu0
      %v2183 = vadd.f32 0.0, %v2182
      %v2184 = vpop.f32.mrf.mxu0
      %2185 = vmatprep.mubr.f32.mxu0 0.0
      %2186 = vmatmul.mubr.f32.gmra.mxu0 %v1932
      %v2187 = vpop.f32.mrf.mxu0
      %v2188 = vadd.f32 0.0, %v2187
      %v2189 = vpop.f32.mrf.mxu0
      %2190 = vmatprep.mubr.f32.mxu0 0.0
      %2191 = vmatmul.mubr.f32.gmra.mxu0 %v1935
      %v2192 = vpop.f32.mrf.mxu0
      %v2193 = vadd.f32 0.0, %v2192
      %v2194 = vpop.f32.mrf.mxu0
      %2195 = vmatprep.mubr.f32.mxu0 0.0
      %2196 = vmatmul.mubr.f32.gmra.mxu0 %v1938
      %v2197 = vpop.f32.mrf.mxu0
      %v2198 = vadd.f32 0.0, %v2197
      %v2199 = vpop.f32.mrf.mxu0
      %2200 = vmatprep.mubr.f32.mxu0 0.0
      %2201 = vmatmul.mubr.f32.gmra.mxu0 %v1941
      %v2202 = vpop.f32.mrf.mxu0
      %v2203 = vadd.f32 0.0, %v2202
      %v2204 = vpop.f32.mrf.mxu0
      %2205 = vmatprep.mubr.f32.mxu0 0.0
      %2206 = vmatmul.mubr.f32.gmra.mxu0 %v1944
      %v2207 = vpop.f32.mrf.mxu0
      %v2208 = vadd.f32 0.0, %v2207
      %v2209 = vpop.f32.mrf.mxu0
      %2210 = vmatprep.mubr.f32.mxu0 0.0
      %2211 = vmatmul.mubr.f32.gmra.mxu0 %v1947
      %v2212 = vpop.f32.mrf.mxu0
      %v2213 = vadd.f32 0.0, %v2212
      %v2214 = vpop.f32.mrf.mxu0
      %2215 = vmatprep.mubr.f32.mxu0 0.0
      %2216 = vmatmul.mubr.f32.gmra.mxu0 %v1950
      %v2217 = vpop.f32.mrf.mxu0
      %v2218 = vadd.f32 0.0, %v2217
      %v2219 = vpop.f32.mrf.mxu0
      %2220 = vmatprep.mubr.f32.mxu0 0.0
      %2221 = vmatmul.mubr.f32.gmra.mxu0 %v1953
      %v2222 = vpop.f32.mrf.mxu0
      %v2223 = vadd.f32 0.0, %v2222
      %v2224 = vpop.f32.mrf.mxu0
      %2225 = vmatprep.mubr.f32.mxu0 0.0
      %2226 = vmatmul.mubr.f32.gmra.mxu0 %v1956
      %v2227 = vpop.f32.mrf.mxu0
      %v2228 = vadd.f32 0.0, %v2227
      %v2229 = vpop.f32.mrf.mxu0
      %2230 = vmatprep.mubr.f32.mxu0 0.0
      %2231 = vmatmul.mubr.f32.gmra.mxu0 %v1959
      %v2232 = vpop.f32.mrf.mxu0
      %v2233 = vadd.f32 0.0, %v2232
      %v2234 = vpop.f32.mrf.mxu0
      %2235 = vmatprep.mubr.f32.mxu0 0.0
      %2236 = vmatmul.mubr.f32.gmra.mxu0 %v1962
      %v2237 = vpop.f32.mrf.mxu0
      %v2238 = vadd.f32 0.0, %v2237
      %v2239 = vpop.f32.mrf.mxu0
      %2240 = vmatprep.mubr.f32.mxu0 0.0
      %2241 = vmatmul.mubr.f32.gmra.mxu0 %v1965
      %v2242 = vpop.f32.mrf.mxu0
      %v2243 = vadd.f32 0.0, %v2242
      %v2244 = vpop.f32.mrf.mxu0
      %2245 = vmatprep.mubr.f32.mxu0 0.0
      %2246 = vmatmul.mubr.f32.gmra.mxu0 %v1968
      %v2247 = vpop.f32.mrf.mxu0
      %v2248 = vadd.f32 0.0, %v2247
      %v2249 = vpop.f32.mrf.mxu0
      %2250 = vmatprep.mubr.f32.mxu0 0.0
      %2251 = vmatmul.mubr.f32.gmra.mxu0 %v1971
      %v2252 = vpop.f32.mrf.mxu0
      %v2253 = vadd.f32 0.0, %v2252
      %v2254 = vpop.f32.mrf.mxu0
      %2255 = vmatprep.mubr.f32.mxu0 0.0
      %2256 = vmatmul.mubr.f32.gmra.mxu0 %v1974
      %v2257 = vpop.f32.mrf.mxu0
      %v2258 = vadd.f32 0.0, %v2257
      %v2259 = vpop.f32.mrf.mxu0
      %2260 = vmatprep.mubr.f32.mxu0 0.0
      %2261 = vmatmul.mubr.f32.gmra.mxu0 %v1977
      %v2262 = vpop.f32.mrf.mxu0
      %v2263 = vadd.f32 0.0, %v2262
      %v2264 = vpop.f32.mrf.mxu0
      %2265 = vmatprep.mubr.f32.mxu0 0.0
      %2266 = vmatmul.mubr.f32.gmra.mxu0 %v1980
      %v2267 = vpop.f32.mrf.mxu0
      %v2268 = vadd.f32 0.0, %v2267
      %v2269 = vpop.f32.mrf.mxu0
      %2270 = vmatprep.mubr.f32.mxu0 0.0
      %2271 = vmatmul.mubr.f32.gmra.mxu0 %v1983
      %v2272 = vpop.f32.mrf.mxu0
      %v2273 = vadd.f32 0.0, %v2272
      %v2274 = vpop.f32.mrf.mxu0
      %2275 = vmatprep.mubr.f32.mxu0 0.0
      %2276 = vmatmul.mubr.f32.gmra.mxu0 %v1986
      %v2277 = vpop.f32.mrf.mxu0
      %v2278 = vadd.f32 0.0, %v2277
      %v2279 = vpop.f32.mrf.mxu0
      %2280 = vmatprep.mubr.f32.mxu0 0.0
      %2281 = vmatmul.mubr.f32.gmra.mxu0 %v1989
      %v2282 = vpop.f32.mrf.mxu0
      %v2283 = vadd.f32 0.0, %v2282
      %v2284 = vpop.f32.mrf.mxu0
      %2285 = vmatprep.mubr.f32.mxu0 0.0
      %2286 = vmatmul.mubr.f32.gmra.mxu0 %v1992
      %v2287 = vpop.f32.mrf.mxu0
      %v2288 = vadd.f32 0.0, %v2287
      %v2289 = vpop.f32.mrf.mxu0
      %2290 = vmatprep.mubr.f32.mxu0 0.0
      %2291 = vmatmul.mubr.f32.gmra.mxu0 %v1995
      %v2292 = vpop.f32.mrf.mxu0
      %v2293 = vadd.f32 0.0, %v2292
      %v2294 = vpop.f32.mrf.mxu0
      %2295 = vmatprep.mubr.f32.mxu0 0.0
      %2296 = vmatmul.mubr.f32.gmra.mxu0 %v1998
      %v2297 = vpop.f32.mrf.mxu0
      %v2298 = vadd.f32 0.0, %v2297
      %v2299 = vpop.f32.mrf.mxu0
      %2300 = vmatprep.mubr.f32.mxu0 0.0
      %2301 = vmatmul.mubr.f32.gmra.mxu0 %v2001
      %v2302 = vpop.f32.mrf.mxu0
      %v2303 = vadd.f32 0.0, %v2302
      %v2304 = vpop.f32.mrf.mxu0
      %2305 = vmatprep.mubr.f32.mxu0 0.0
      %2306 = vmatmul.mubr.f32.gmra.mxu0 %v2004
      %v2307 = vpop.f32.mrf.mxu0
      %v2308 = vadd.f32 0.0, %v2307
      %v2309 = vpop.f32.mrf.mxu0
      %2310 = vdwg.mxu0
      %v2311 = vadd.f32 %v1762, %v2073
      %v2312 = vadd.f32 %v1763, %v2078
      %v2313 = vadd.f32 %v1764, %v2083
      %v2314 = vadd.f32 %v1765, %v2088
      %v2315 = vadd.f32 %v1766, %v2093
      %v2316 = vadd.f32 %v1767, %v2098
      %v2317 = vadd.f32 %v1768, %v2103
      %v2318 = vadd.f32 %v1769, %v2108
      %v2319 = vadd.f32 %v1770, %v2113
      %v2320 = vadd.f32 %v1771, %v2118
      %v2321 = vadd.f32 %v1772, %v2123
      %v2322 = vadd.f32 %v1773, %v2128
      %v2323 = vadd.f32 %v1774, %v2133
      %v2324 = vadd.f32 %v1775, %v2138
      %v2325 = vadd.f32 %v1776, %v2143
      %v2326 = vadd.f32 %v1777, %v2148
      %v2327 = vadd.f32 %v1778, %v2153
      %v2328 = vadd.f32 %v1779, %v2158
      %v2329 = vadd.f32 %v1780, %v2163
      %v2330 = vadd.f32 %v1781, %v2168
      %v2331 = vadd.f32 %v1782, %v2173
      %v2332 = vadd.f32 %v1783, %v2178
      %v2333 = vadd.f32 %v1784, %v2183
      %v2334 = vadd.f32 %v1785, %v2188
      %v2335 = vadd.f32 %v1786, %v2193
      %v2336 = vadd.f32 %v1787, %v2198
      %v2337 = vadd.f32 %v1788, %v2203
      %v2338 = vadd.f32 %v1789, %v2208
      %v2339 = vadd.f32 %v1790, %v2213
      %v2340 = vadd.f32 %v1791, %v2218
      %v2341 = vadd.f32 %v1792, %v2223
      %v2342 = vadd.f32 %v1793, %v2228
      %v2343 = vadd.f32 %v1794, %v2233
      %v2344 = vadd.f32 %v1795, %v2238
      %v2345 = vadd.f32 %v1796, %v2243
      %v2346 = vadd.f32 %v1797, %v2248
      %v2347 = vadd.f32 %v1798, %v2253
      %v2348 = vadd.f32 %v1799, %v2258
      %v2349 = vadd.f32 %v1800, %v2263
      %v2350 = vadd.f32 %v1801, %v2268
      %v2351 = vadd.f32 %v1802, %v2273
      %v2352 = vadd.f32 %v1803, %v2278
      %v2353 = vadd.f32 %v1804, %v2283
      %v2354 = vadd.f32 %v1805, %v2288
      %v2355 = vadd.f32 %v1806, %v2293
      %v2356 = vadd.f32 %v1807, %v2298
      %v2357 = vadd.f32 %v1808, %v2303
      %v2358 = vadd.f32 %v1809, %v2308
      %s2359 = sadd.s32 %s259, 19
      %s2360 = scalar_lea.vmem %s236, %s2359
      %v2361 = vld [vmem:[%s2360] sm:$0xff]
      %v2362 = vld [vmem:[%s2360 + $0x8] sm:$0xff]
      %v2363 = vld [vmem:[%s2360 + $0x10] sm:$0xff]
      %v2364 = vld [vmem:[%s2360 + $0x18] sm:$0xff]
      %v2365 = vld [vmem:[%s2360 + $0x20] sm:$0xff]
      %v2366 = vld [vmem:[%s2360 + $0x28] sm:$0xff]
      %v2367 = vld [vmem:[%s2360 + $0x30] sm:$0xff]
      %v2368 = vld [vmem:[%s2360 + $0x38] sm:$0xff]
      %v2369 = vld [vmem:[%s2360 + $0x40] sm:$0xff]
      %v2370 = vld [vmem:[%s2360 + $0x48] sm:$0xff]
      %v2371 = vld [vmem:[%s2360 + $0x50] sm:$0xff]
      %v2372 = vld [vmem:[%s2360 + $0x58] sm:$0xff]
      %v2373 = vld [vmem:[%s2360 + $0x60] sm:$0xff]
      %v2374 = vld [vmem:[%s2360 + $0x68] sm:$0xff]
      %v2375 = vld [vmem:[%s2360 + $0x70] sm:$0xff]
      %v2376 = vld [vmem:[%s2360 + $0x78] sm:$0xff]
      %v2377 = vld [vmem:[%s2360 + $0x80] sm:$0xff]
      %v2378 = vld [vmem:[%s2360 + $0x88] sm:$0xff]
      %v2379 = vld [vmem:[%s2360 + $0x90] sm:$0xff]
      %v2380 = vld [vmem:[%s2360 + $0x98] sm:$0xff]
      %v2381 = vld [vmem:[%s2360 + $0xa0] sm:$0xff]
      %v2382 = vld [vmem:[%s2360 + $0xa8] sm:$0xff]
      %v2383 = vld [vmem:[%s2360 + $0xb0] sm:$0xff]
      %v2384 = vld [vmem:[%s2360 + $0xb8] sm:$0xff]
      %v2385 = vld [vmem:[%s2360 + $0xc0] sm:$0xff]
      %v2386 = vld [vmem:[%s2360 + $0xc8] sm:$0xff]
      %v2387 = vld [vmem:[%s2360 + $0xd0] sm:$0xff]
      %v2388 = vld [vmem:[%s2360 + $0xd8] sm:$0xff]
      %v2389 = vld [vmem:[%s2360 + $0xe0] sm:$0xff]
      %v2390 = vld [vmem:[%s2360 + $0xe8] sm:$0xff]
      %v2391 = vld [vmem:[%s2360 + $0xf0] sm:$0xff]
      %v2392 = vld [vmem:[%s2360 + $0xf8] sm:$0xff]
      %v2393 = vld [vmem:[%s2360 + $0x100] sm:$0xff]
      %v2394 = vld [vmem:[%s2360 + $0x108] sm:$0xff]
      %v2395 = vld [vmem:[%s2360 + $0x110] sm:$0xff]
      %v2396 = vld [vmem:[%s2360 + $0x118] sm:$0xff]
      %v2397 = vld [vmem:[%s2360 + $0x120] sm:$0xff]
      %v2398 = vld [vmem:[%s2360 + $0x128] sm:$0xff]
      %v2399 = vld [vmem:[%s2360 + $0x130] sm:$0xff]
      %v2400 = vld [vmem:[%s2360 + $0x138] sm:$0xff]
      %v2401 = vld [vmem:[%s2360 + $0x140] sm:$0xff]
      %v2402 = vld [vmem:[%s2360 + $0x148] sm:$0xff]
      %v2403 = vld [vmem:[%s2360 + $0x150] sm:$0xff]
      %v2404 = vld [vmem:[%s2360 + $0x158] sm:$0xff]
      %v2405 = vld [vmem:[%s2360 + $0x160] sm:$0xff]
      %v2406 = vld [vmem:[%s2360 + $0x168] sm:$0xff]
      %v2407 = vld [vmem:[%s2360 + $0x170] sm:$0xff]
      %v2408 = vld [vmem:[%s2360 + $0x178] sm:$0xff]
      %s2409 = scalar_lea.vmem %s241, 32
      %v2410 = vld [vmem:[%s2409] sm:$0xff]
      %v2412 = vsel %vm362, %v2361, 0
      %v2415 = vsel %vm362, %v2362, 0
      %v2418 = vsel %vm362, %v2363, 0
      %v2421 = vsel %vm362, %v2364, 0
      %v2424 = vsel %vm362, %v2365, 0
      %v2427 = vsel %vm362, %v2366, 0
      %v2430 = vsel %vm362, %v2367, 0
      %v2433 = vsel %vm362, %v2368, 0
      %v2436 = vsel %vm362, %v2369, 0
      %v2439 = vsel %vm362, %v2370, 0
      %v2442 = vsel %vm362, %v2371, 0
      %v2445 = vsel %vm362, %v2372, 0
      %v2448 = vsel %vm362, %v2373, 0
      %v2451 = vsel %vm362, %v2374, 0
      %v2454 = vsel %vm362, %v2375, 0
      %v2457 = vsel %vm362, %v2376, 0
      %v2460 = vsel %vm362, %v2377, 0
      %v2463 = vsel %vm362, %v2378, 0
      %v2466 = vsel %vm362, %v2379, 0
      %v2469 = vsel %vm362, %v2380, 0
      %v2472 = vsel %vm362, %v2381, 0
      %v2475 = vsel %vm362, %v2382, 0
      %v2478 = vsel %vm362, %v2383, 0
      %v2481 = vsel %vm362, %v2384, 0
      %v2484 = vsel %vm362, %v2385, 0
      %v2487 = vsel %vm362, %v2386, 0
      %v2490 = vsel %vm362, %v2387, 0
      %v2493 = vsel %vm362, %v2388, 0
      %v2496 = vsel %vm362, %v2389, 0
      %v2499 = vsel %vm362, %v2390, 0
      %v2502 = vsel %vm362, %v2391, 0
      %v2505 = vsel %vm362, %v2392, 0
      %v2508 = vsel %vm362, %v2393, 0
      %v2511 = vsel %vm362, %v2394, 0
      %v2514 = vsel %vm362, %v2395, 0
      %v2517 = vsel %vm362, %v2396, 0
      %v2520 = vsel %vm362, %v2397, 0
      %v2523 = vsel %vm362, %v2398, 0
      %v2526 = vsel %vm362, %v2399, 0
      %v2529 = vsel %vm362, %v2400, 0
      %v2532 = vsel %vm362, %v2401, 0
      %v2535 = vsel %vm362, %v2402, 0
      %v2538 = vsel %vm362, %v2403, 0
      %v2541 = vsel %vm362, %v2404, 0
      %v2544 = vsel %vm362, %v2405, 0
      %v2547 = vsel %vm362, %v2406, 0
      %v2550 = vsel %vm362, %v2407, 0
      %v2553 = vsel %vm362, %v2408, 0
      %2555 = vmatprep.subr.mxu0 0.0
      %2556 = vmatpush1.msra.mxu0 0.0
      %2557 = vmatprep.subr.mxu0 0.0
      %2558 = vmatpush1.msra.mxu0 0.0
      %2559 = vmatprep.subr.mxu0 0.0
      %2560 = vmatpush1.msra.mxu0 0.0
      %2561 = vmatprep.subr.mxu0 0.0
      %2562 = vmatpush1.msra.mxu0 0.0
      %2563 = vmatprep.subr.mxu0 0.0
      %2564 = vmatpush1.msra.mxu0 0.0
      %2565 = vmatprep.subr.mxu0 0.0
      %2566 = vmatpush1.msra.mxu0 0.0
      %2567 = vmatprep.subr.mxu0 0.0
      %2568 = vmatpush1.msra.mxu0 0.0
      %2569 = vmatprep.subr.mxu0 0.0
      %2570 = vmatpush1.msra.mxu0 0.0
      %2571 = vmatprep.subr.mxu0 0.0
      %2572 = vmatpush1.msra.mxu0 0.0
      %2573 = vmatprep.subr.mxu0 0.0
      %2574 = vmatpush1.msra.mxu0 0.0
      %2575 = vmatprep.subr.mxu0 0.0
      %2576 = vmatpush1.msra.mxu0 0.0
      %2577 = vmatprep.subr.mxu0 0.0
      %2578 = vmatpush1.msra.mxu0 0.0
      %2579 = vmatprep.subr.mxu0 0.0
      %2580 = vmatpush1.msra.mxu0 0.0
      %2581 = vmatprep.subr.mxu0 0.0
      %2582 = vmatpush1.msra.mxu0 0.0
      %2583 = vmatprep.subr.mxu0 0.0
      %2584 = vmatpush1.msra.mxu0 0.0
      %2585 = vmatprep.subr.mxu0 0.0
      %2586 = vmatpush1.msra.mxu0 %v2410
      %2587 = vmatprep.subr.mxu0 0.0
      %2588 = vmatpush2.msra.mxu0 0.0
      %2589 = vmatprep.subr.mxu0 0.0
      %2590 = vmatpush2.msra.mxu0 0.0
      %2591 = vmatprep.subr.mxu0 0.0
      %2592 = vmatpush2.msra.mxu0 0.0
      %2593 = vmatprep.subr.mxu0 0.0
      %2594 = vmatpush2.msra.mxu0 0.0
      %2595 = vmatprep.subr.mxu0 0.0
      %2596 = vmatpush2.msra.mxu0 0.0
      %2597 = vmatprep.subr.mxu0 0.0
      %2598 = vmatpush2.msra.mxu0 0.0
      %2599 = vmatprep.subr.mxu0 0.0
      %2600 = vmatpush2.msra.mxu0 0.0
      %2601 = vmatprep.subr.mxu0 0.0
      %2602 = vmatpush2.msra.mxu0 0.0
      %2603 = vmatprep.subr.mxu0 0.0
      %2604 = vmatpush2.msra.mxu0 0.0
      %2605 = vmatprep.subr.mxu0 0.0
      %2606 = vmatpush2.msra.mxu0 0.0
      %2607 = vmatprep.subr.mxu0 0.0
      %2608 = vmatpush2.msra.mxu0 0.0
      %2609 = vmatprep.subr.mxu0 0.0
      %2610 = vmatpush2.msra.mxu0 0.0
      %2611 = vmatprep.subr.mxu0 0.0
      %2612 = vmatpush2.msra.mxu0 0.0
      %2613 = vmatprep.subr.mxu0 0.0
      %2614 = vmatpush2.msra.mxu0 0.0
      %2615 = vmatprep.subr.mxu0 0.0
      %2616 = vmatpush2.msra.mxu0 0.0
      %2617 = vmatprep.subr.mxu0 0.0
      %2618 = vmatpush2.msra.mxu0 0.0
      %2619 = vmatprep.mubr.f32.mxu0 0.0
      %2620 = vmatmul.mubr.f32.gmra.mxu0 %v2412
      %v2621 = vpop.f32.mrf.mxu0
      %v2622 = vadd.f32 0.0, %v2621
      %v2623 = vpop.f32.mrf.mxu0
      %2624 = vmatprep.mubr.f32.mxu0 0.0
      %2625 = vmatmul.mubr.f32.gmra.mxu0 %v2415
      %v2626 = vpop.f32.mrf.mxu0
      %v2627 = vadd.f32 0.0, %v2626
      %v2628 = vpop.f32.mrf.mxu0
      %2629 = vmatprep.mubr.f32.mxu0 0.0
      %2630 = vmatmul.mubr.f32.gmra.mxu0 %v2418
      %v2631 = vpop.f32.mrf.mxu0
      %v2632 = vadd.f32 0.0, %v2631
      %v2633 = vpop.f32.mrf.mxu0
      %2634 = vmatprep.mubr.f32.mxu0 0.0
      %2635 = vmatmul.mubr.f32.gmra.mxu0 %v2421
      %v2636 = vpop.f32.mrf.mxu0
      %v2637 = vadd.f32 0.0, %v2636
      %v2638 = vpop.f32.mrf.mxu0
      %2639 = vmatprep.mubr.f32.mxu0 0.0
      %2640 = vmatmul.mubr.f32.gmra.mxu0 %v2424
      %v2641 = vpop.f32.mrf.mxu0
      %v2642 = vadd.f32 0.0, %v2641
      %v2643 = vpop.f32.mrf.mxu0
      %2644 = vmatprep.mubr.f32.mxu0 0.0
      %2645 = vmatmul.mubr.f32.gmra.mxu0 %v2427
      %v2646 = vpop.f32.mrf.mxu0
      %v2647 = vadd.f32 0.0, %v2646
      %v2648 = vpop.f32.mrf.mxu0
      %2649 = vmatprep.mubr.f32.mxu0 0.0
      %2650 = vmatmul.mubr.f32.gmra.mxu0 %v2430
      %v2651 = vpop.f32.mrf.mxu0
      %v2652 = vadd.f32 0.0, %v2651
      %v2653 = vpop.f32.mrf.mxu0
      %2654 = vmatprep.mubr.f32.mxu0 0.0
      %2655 = vmatmul.mubr.f32.gmra.mxu0 %v2433
      %v2656 = vpop.f32.mrf.mxu0
      %v2657 = vadd.f32 0.0, %v2656
      %v2658 = vpop.f32.mrf.mxu0
      %2659 = vmatprep.mubr.f32.mxu0 0.0
      %2660 = vmatmul.mubr.f32.gmra.mxu0 %v2436
      %v2661 = vpop.f32.mrf.mxu0
      %v2662 = vadd.f32 0.0, %v2661
      %v2663 = vpop.f32.mrf.mxu0
      %2664 = vmatprep.mubr.f32.mxu0 0.0
      %2665 = vmatmul.mubr.f32.gmra.mxu0 %v2439
      %v2666 = vpop.f32.mrf.mxu0
      %v2667 = vadd.f32 0.0, %v2666
      %v2668 = vpop.f32.mrf.mxu0
      %2669 = vmatprep.mubr.f32.mxu0 0.0
      %2670 = vmatmul.mubr.f32.gmra.mxu0 %v2442
      %v2671 = vpop.f32.mrf.mxu0
      %v2672 = vadd.f32 0.0, %v2671
      %v2673 = vpop.f32.mrf.mxu0
      %2674 = vmatprep.mubr.f32.mxu0 0.0
      %2675 = vmatmul.mubr.f32.gmra.mxu0 %v2445
      %v2676 = vpop.f32.mrf.mxu0
      %v2677 = vadd.f32 0.0, %v2676
      %v2678 = vpop.f32.mrf.mxu0
      %2679 = vmatprep.mubr.f32.mxu0 0.0
      %2680 = vmatmul.mubr.f32.gmra.mxu0 %v2448
      %v2681 = vpop.f32.mrf.mxu0
      %v2682 = vadd.f32 0.0, %v2681
      %v2683 = vpop.f32.mrf.mxu0
      %2684 = vmatprep.mubr.f32.mxu0 0.0
      %2685 = vmatmul.mubr.f32.gmra.mxu0 %v2451
      %v2686 = vpop.f32.mrf.mxu0
      %v2687 = vadd.f32 0.0, %v2686
      %v2688 = vpop.f32.mrf.mxu0
      %2689 = vmatprep.mubr.f32.mxu0 0.0
      %2690 = vmatmul.mubr.f32.gmra.mxu0 %v2454
      %v2691 = vpop.f32.mrf.mxu0
      %v2692 = vadd.f32 0.0, %v2691
      %v2693 = vpop.f32.mrf.mxu0
      %2694 = vmatprep.mubr.f32.mxu0 0.0
      %2695 = vmatmul.mubr.f32.gmra.mxu0 %v2457
      %v2696 = vpop.f32.mrf.mxu0
      %v2697 = vadd.f32 0.0, %v2696
      %v2698 = vpop.f32.mrf.mxu0
      %2699 = vmatprep.mubr.f32.mxu0 0.0
      %2700 = vmatmul.mubr.f32.gmra.mxu0 %v2460
      %v2701 = vpop.f32.mrf.mxu0
      %v2702 = vadd.f32 0.0, %v2701
      %v2703 = vpop.f32.mrf.mxu0
      %2704 = vmatprep.mubr.f32.mxu0 0.0
      %2705 = vmatmul.mubr.f32.gmra.mxu0 %v2463
      %v2706 = vpop.f32.mrf.mxu0
      %v2707 = vadd.f32 0.0, %v2706
      %v2708 = vpop.f32.mrf.mxu0
      %2709 = vmatprep.mubr.f32.mxu0 0.0
      %2710 = vmatmul.mubr.f32.gmra.mxu0 %v2466
      %v2711 = vpop.f32.mrf.mxu0
      %v2712 = vadd.f32 0.0, %v2711
      %v2713 = vpop.f32.mrf.mxu0
      %2714 = vmatprep.mubr.f32.mxu0 0.0
      %2715 = vmatmul.mubr.f32.gmra.mxu0 %v2469
      %v2716 = vpop.f32.mrf.mxu0
      %v2717 = vadd.f32 0.0, %v2716
      %v2718 = vpop.f32.mrf.mxu0
      %2719 = vmatprep.mubr.f32.mxu0 0.0
      %2720 = vmatmul.mubr.f32.gmra.mxu0 %v2472
      %v2721 = vpop.f32.mrf.mxu0
      %v2722 = vadd.f32 0.0, %v2721
      %v2723 = vpop.f32.mrf.mxu0
      %2724 = vmatprep.mubr.f32.mxu0 0.0
      %2725 = vmatmul.mubr.f32.gmra.mxu0 %v2475
      %v2726 = vpop.f32.mrf.mxu0
      %v2727 = vadd.f32 0.0, %v2726
      %v2728 = vpop.f32.mrf.mxu0
      %2729 = vmatprep.mubr.f32.mxu0 0.0
      %2730 = vmatmul.mubr.f32.gmra.mxu0 %v2478
      %v2731 = vpop.f32.mrf.mxu0
      %v2732 = vadd.f32 0.0, %v2731
      %v2733 = vpop.f32.mrf.mxu0
      %2734 = vmatprep.mubr.f32.mxu0 0.0
      %2735 = vmatmul.mubr.f32.gmra.mxu0 %v2481
      %v2736 = vpop.f32.mrf.mxu0
      %v2737 = vadd.f32 0.0, %v2736
      %v2738 = vpop.f32.mrf.mxu0
      %2739 = vmatprep.mubr.f32.mxu0 0.0
      %2740 = vmatmul.mubr.f32.gmra.mxu0 %v2484
      %v2741 = vpop.f32.mrf.mxu0
      %v2742 = vadd.f32 0.0, %v2741
      %v2743 = vpop.f32.mrf.mxu0
      %2744 = vmatprep.mubr.f32.mxu0 0.0
      %2745 = vmatmul.mubr.f32.gmra.mxu0 %v2487
      %v2746 = vpop.f32.mrf.mxu0
      %v2747 = vadd.f32 0.0, %v2746
      %v2748 = vpop.f32.mrf.mxu0
      %2749 = vmatprep.mubr.f32.mxu0 0.0
      %2750 = vmatmul.mubr.f32.gmra.mxu0 %v2490
      %v2751 = vpop.f32.mrf.mxu0
      %v2752 = vadd.f32 0.0, %v2751
      %v2753 = vpop.f32.mrf.mxu0
      %2754 = vmatprep.mubr.f32.mxu0 0.0
      %2755 = vmatmul.mubr.f32.gmra.mxu0 %v2493
      %v2756 = vpop.f32.mrf.mxu0
      %v2757 = vadd.f32 0.0, %v2756
      %v2758 = vpop.f32.mrf.mxu0
      %2759 = vmatprep.mubr.f32.mxu0 0.0
      %2760 = vmatmul.mubr.f32.gmra.mxu0 %v2496
      %v2761 = vpop.f32.mrf.mxu0
      %v2762 = vadd.f32 0.0, %v2761
      %v2763 = vpop.f32.mrf.mxu0
      %2764 = vmatprep.mubr.f32.mxu0 0.0
      %2765 = vmatmul.mubr.f32.gmra.mxu0 %v2499
      %v2766 = vpop.f32.mrf.mxu0
      %v2767 = vadd.f32 0.0, %v2766
      %v2768 = vpop.f32.mrf.mxu0
      %2769 = vmatprep.mubr.f32.mxu0 0.0
      %2770 = vmatmul.mubr.f32.gmra.mxu0 %v2502
      %v2771 = vpop.f32.mrf.mxu0
      %v2772 = vadd.f32 0.0, %v2771
      %v2773 = vpop.f32.mrf.mxu0
      %2774 = vmatprep.mubr.f32.mxu0 0.0
      %2775 = vmatmul.mubr.f32.gmra.mxu0 %v2505
      %v2776 = vpop.f32.mrf.mxu0
      %v2777 = vadd.f32 0.0, %v2776
      %v2778 = vpop.f32.mrf.mxu0
      %2779 = vmatprep.mubr.f32.mxu0 0.0
      %2780 = vmatmul.mubr.f32.gmra.mxu0 %v2508
      %v2781 = vpop.f32.mrf.mxu0
      %v2782 = vadd.f32 0.0, %v2781
      %v2783 = vpop.f32.mrf.mxu0
      %2784 = vmatprep.mubr.f32.mxu0 0.0
      %2785 = vmatmul.mubr.f32.gmra.mxu0 %v2511
      %v2786 = vpop.f32.mrf.mxu0
      %v2787 = vadd.f32 0.0, %v2786
      %v2788 = vpop.f32.mrf.mxu0
      %2789 = vmatprep.mubr.f32.mxu0 0.0
      %2790 = vmatmul.mubr.f32.gmra.mxu0 %v2514
      %v2791 = vpop.f32.mrf.mxu0
      %v2792 = vadd.f32 0.0, %v2791
      %v2793 = vpop.f32.mrf.mxu0
      %2794 = vmatprep.mubr.f32.mxu0 0.0
      %2795 = vmatmul.mubr.f32.gmra.mxu0 %v2517
      %v2796 = vpop.f32.mrf.mxu0
      %v2797 = vadd.f32 0.0, %v2796
      %v2798 = vpop.f32.mrf.mxu0
      %2799 = vmatprep.mubr.f32.mxu0 0.0
      %2800 = vmatmul.mubr.f32.gmra.mxu0 %v2520
      %v2801 = vpop.f32.mrf.mxu0
      %v2802 = vadd.f32 0.0, %v2801
      %v2803 = vpop.f32.mrf.mxu0
      %2804 = vmatprep.mubr.f32.mxu0 0.0
      %2805 = vmatmul.mubr.f32.gmra.mxu0 %v2523
      %v2806 = vpop.f32.mrf.mxu0
      %v2807 = vadd.f32 0.0, %v2806
      %v2808 = vpop.f32.mrf.mxu0
      %2809 = vmatprep.mubr.f32.mxu0 0.0
      %2810 = vmatmul.mubr.f32.gmra.mxu0 %v2526
      %v2811 = vpop.f32.mrf.mxu0
      %v2812 = vadd.f32 0.0, %v2811
      %v2813 = vpop.f32.mrf.mxu0
      %2814 = vmatprep.mubr.f32.mxu0 0.0
      %2815 = vmatmul.mubr.f32.gmra.mxu0 %v2529
      %v2816 = vpop.f32.mrf.mxu0
      %v2817 = vadd.f32 0.0, %v2816
      %v2818 = vpop.f32.mrf.mxu0
      %2819 = vmatprep.mubr.f32.mxu0 0.0
      %2820 = vmatmul.mubr.f32.gmra.mxu0 %v2532
      %v2821 = vpop.f32.mrf.mxu0
      %v2822 = vadd.f32 0.0, %v2821
      %v2823 = vpop.f32.mrf.mxu0
      %2824 = vmatprep.mubr.f32.mxu0 0.0
      %2825 = vmatmul.mubr.f32.gmra.mxu0 %v2535
      %v2826 = vpop.f32.mrf.mxu0
      %v2827 = vadd.f32 0.0, %v2826
      %v2828 = vpop.f32.mrf.mxu0
      %2829 = vmatprep.mubr.f32.mxu0 0.0
      %2830 = vmatmul.mubr.f32.gmra.mxu0 %v2538
      %v2831 = vpop.f32.mrf.mxu0
      %v2832 = vadd.f32 0.0, %v2831
      %v2833 = vpop.f32.mrf.mxu0
      %2834 = vmatprep.mubr.f32.mxu0 0.0
      %2835 = vmatmul.mubr.f32.gmra.mxu0 %v2541
      %v2836 = vpop.f32.mrf.mxu0
      %v2837 = vadd.f32 0.0, %v2836
      %v2838 = vpop.f32.mrf.mxu0
      %2839 = vmatprep.mubr.f32.mxu0 0.0
      %2840 = vmatmul.mubr.f32.gmra.mxu0 %v2544
      %v2841 = vpop.f32.mrf.mxu0
      %v2842 = vadd.f32 0.0, %v2841
      %v2843 = vpop.f32.mrf.mxu0
      %2844 = vmatprep.mubr.f32.mxu0 0.0
      %2845 = vmatmul.mubr.f32.gmra.mxu0 %v2547
      %v2846 = vpop.f32.mrf.mxu0
      %v2847 = vadd.f32 0.0, %v2846
      %v2848 = vpop.f32.mrf.mxu0
      %2849 = vmatprep.mubr.f32.mxu0 0.0
      %2850 = vmatmul.mubr.f32.gmra.mxu0 %v2550
      %v2851 = vpop.f32.mrf.mxu0
      %v2852 = vadd.f32 0.0, %v2851
      %v2853 = vpop.f32.mrf.mxu0
      %2854 = vmatprep.mubr.f32.mxu0 0.0
      %2855 = vmatmul.mubr.f32.gmra.mxu0 %v2553
      %v2856 = vpop.f32.mrf.mxu0
      %v2857 = vadd.f32 0.0, %v2856
      %v2858 = vpop.f32.mrf.mxu0
      %2859 = vdwg.mxu0
      %v2860 = vadd.f32 %v2311, %v2622
      %v2861 = vadd.f32 %v2312, %v2627
      %v2862 = vadd.f32 %v2313, %v2632
      %v2863 = vadd.f32 %v2314, %v2637
      %v2864 = vadd.f32 %v2315, %v2642
      %v2865 = vadd.f32 %v2316, %v2647
      %v2866 = vadd.f32 %v2317, %v2652
      %v2867 = vadd.f32 %v2318, %v2657
      %v2868 = vadd.f32 %v2319, %v2662
      %v2869 = vadd.f32 %v2320, %v2667
      %v2870 = vadd.f32 %v2321, %v2672
      %v2871 = vadd.f32 %v2322, %v2677
      %v2872 = vadd.f32 %v2323, %v2682
      %v2873 = vadd.f32 %v2324, %v2687
      %v2874 = vadd.f32 %v2325, %v2692
      %v2875 = vadd.f32 %v2326, %v2697
      %v2876 = vadd.f32 %v2327, %v2702
      %v2877 = vadd.f32 %v2328, %v2707
      %v2878 = vadd.f32 %v2329, %v2712
      %v2879 = vadd.f32 %v2330, %v2717
      %v2880 = vadd.f32 %v2331, %v2722
      %v2881 = vadd.f32 %v2332, %v2727
      %v2882 = vadd.f32 %v2333, %v2732
      %v2883 = vadd.f32 %v2334, %v2737
      %v2884 = vadd.f32 %v2335, %v2742
      %v2885 = vadd.f32 %v2336, %v2747
      %v2886 = vadd.f32 %v2337, %v2752
      %v2887 = vadd.f32 %v2338, %v2757
      %v2888 = vadd.f32 %v2339, %v2762
      %v2889 = vadd.f32 %v2340, %v2767
      %v2890 = vadd.f32 %v2341, %v2772
      %v2891 = vadd.f32 %v2342, %v2777
      %v2892 = vadd.f32 %v2343, %v2782
      %v2893 = vadd.f32 %v2344, %v2787
      %v2894 = vadd.f32 %v2345, %v2792
      %v2895 = vadd.f32 %v2346, %v2797
      %v2896 = vadd.f32 %v2347, %v2802
      %v2897 = vadd.f32 %v2348, %v2807
      %v2898 = vadd.f32 %v2349, %v2812
      %v2899 = vadd.f32 %v2350, %v2817
      %v2900 = vadd.f32 %v2351, %v2822
      %v2901 = vadd.f32 %v2352, %v2827
      %v2902 = vadd.f32 %v2353, %v2832
      %v2903 = vadd.f32 %v2354, %v2837
      %v2904 = vadd.f32 %v2355, %v2842
      %v2905 = vadd.f32 %v2356, %v2847
      %v2906 = vadd.f32 %v2357, %v2852
      %v2907 = vadd.f32 %v2358, %v2857
      %s2908 = sadd.s32 %s259, 20
      %s2909 = scalar_lea.vmem %s236, %s2908
      %v2910 = vld [vmem:[%s2909] sm:$0xff]
      %v2911 = vld [vmem:[%s2909 + $0x8] sm:$0xff]
      %v2912 = vld [vmem:[%s2909 + $0x10] sm:$0xff]
      %v2913 = vld [vmem:[%s2909 + $0x18] sm:$0xff]
      %v2914 = vld [vmem:[%s2909 + $0x20] sm:$0xff]
      %v2915 = vld [vmem:[%s2909 + $0x28] sm:$0xff]
      %v2916 = vld [vmem:[%s2909 + $0x30] sm:$0xff]
      %v2917 = vld [vmem:[%s2909 + $0x38] sm:$0xff]
      %v2918 = vld [vmem:[%s2909 + $0x40] sm:$0xff]
      %v2919 = vld [vmem:[%s2909 + $0x48] sm:$0xff]
      %v2920 = vld [vmem:[%s2909 + $0x50] sm:$0xff]
      %v2921 = vld [vmem:[%s2909 + $0x58] sm:$0xff]
      %v2922 = vld [vmem:[%s2909 + $0x60] sm:$0xff]
      %v2923 = vld [vmem:[%s2909 + $0x68] sm:$0xff]
      %v2924 = vld [vmem:[%s2909 + $0x70] sm:$0xff]
      %v2925 = vld [vmem:[%s2909 + $0x78] sm:$0xff]
      %v2926 = vld [vmem:[%s2909 + $0x80] sm:$0xff]
      %v2927 = vld [vmem:[%s2909 + $0x88] sm:$0xff]
      %v2928 = vld [vmem:[%s2909 + $0x90] sm:$0xff]
      %v2929 = vld [vmem:[%s2909 + $0x98] sm:$0xff]
      %v2930 = vld [vmem:[%s2909 + $0xa0] sm:$0xff]
      %v2931 = vld [vmem:[%s2909 + $0xa8] sm:$0xff]
      %v2932 = vld [vmem:[%s2909 + $0xb0] sm:$0xff]
      %v2933 = vld [vmem:[%s2909 + $0xb8] sm:$0xff]
      %v2934 = vld [vmem:[%s2909 + $0xc0] sm:$0xff]
      %v2935 = vld [vmem:[%s2909 + $0xc8] sm:$0xff]
      %v2936 = vld [vmem:[%s2909 + $0xd0] sm:$0xff]
      %v2937 = vld [vmem:[%s2909 + $0xd8] sm:$0xff]
      %v2938 = vld [vmem:[%s2909 + $0xe0] sm:$0xff]
      %v2939 = vld [vmem:[%s2909 + $0xe8] sm:$0xff]
      %v2940 = vld [vmem:[%s2909 + $0xf0] sm:$0xff]
      %v2941 = vld [vmem:[%s2909 + $0xf8] sm:$0xff]
      %v2942 = vld [vmem:[%s2909 + $0x100] sm:$0xff]
      %v2943 = vld [vmem:[%s2909 + $0x108] sm:$0xff]
      %v2944 = vld [vmem:[%s2909 + $0x110] sm:$0xff]
      %v2945 = vld [vmem:[%s2909 + $0x118] sm:$0xff]
      %v2946 = vld [vmem:[%s2909 + $0x120] sm:$0xff]
      %v2947 = vld [vmem:[%s2909 + $0x128] sm:$0xff]
      %v2948 = vld [vmem:[%s2909 + $0x130] sm:$0xff]
      %v2949 = vld [vmem:[%s2909 + $0x138] sm:$0xff]
      %v2950 = vld [vmem:[%s2909 + $0x140] sm:$0xff]
      %v2951 = vld [vmem:[%s2909 + $0x148] sm:$0xff]
      %v2952 = vld [vmem:[%s2909 + $0x150] sm:$0xff]
      %v2953 = vld [vmem:[%s2909 + $0x158] sm:$0xff]
      %v2954 = vld [vmem:[%s2909 + $0x160] sm:$0xff]
      %v2955 = vld [vmem:[%s2909 + $0x168] sm:$0xff]
      %v2956 = vld [vmem:[%s2909 + $0x170] sm:$0xff]
      %v2957 = vld [vmem:[%s2909 + $0x178] sm:$0xff]
      %s2958 = scalar_lea.vmem %s241, 40
      %v2959 = vld [vmem:[%s2958] sm:$0xff]
      %v2961 = vsel %vm362, %v2910, 0
      %v2964 = vsel %vm362, %v2911, 0
      %v2967 = vsel %vm362, %v2912, 0
      %v2970 = vsel %vm362, %v2913, 0
      %v2973 = vsel %vm362, %v2914, 0
      %v2976 = vsel %vm362, %v2915, 0
      %v2979 = vsel %vm362, %v2916, 0
      %v2982 = vsel %vm362, %v2917, 0
      %v2985 = vsel %vm362, %v2918, 0
      %v2988 = vsel %vm362, %v2919, 0
      %v2991 = vsel %vm362, %v2920, 0
      %v2994 = vsel %vm362, %v2921, 0
      %v2997 = vsel %vm362, %v2922, 0
      %v3000 = vsel %vm362, %v2923, 0
      %v3003 = vsel %vm362, %v2924, 0
      %v3006 = vsel %vm362, %v2925, 0
      %v3009 = vsel %vm362, %v2926, 0
      %v3012 = vsel %vm362, %v2927, 0
      %v3015 = vsel %vm362, %v2928, 0
      %v3018 = vsel %vm362, %v2929, 0
      %v3021 = vsel %vm362, %v2930, 0
      %v3024 = vsel %vm362, %v2931, 0
      %v3027 = vsel %vm362, %v2932, 0
      %v3030 = vsel %vm362, %v2933, 0
      %v3033 = vsel %vm362, %v2934, 0
      %v3036 = vsel %vm362, %v2935, 0
      %v3039 = vsel %vm362, %v2936, 0
      %v3042 = vsel %vm362, %v2937, 0
      %v3045 = vsel %vm362, %v2938, 0
      %v3048 = vsel %vm362, %v2939, 0
      %v3051 = vsel %vm362, %v2940, 0
      %v3054 = vsel %vm362, %v2941, 0
      %v3057 = vsel %vm362, %v2942, 0
      %v3060 = vsel %vm362, %v2943, 0
      %v3063 = vsel %vm362, %v2944, 0
      %v3066 = vsel %vm362, %v2945, 0
      %v3069 = vsel %vm362, %v2946, 0
      %v3072 = vsel %vm362, %v2947, 0
      %v3075 = vsel %vm362, %v2948, 0
      %v3078 = vsel %vm362, %v2949, 0
      %v3081 = vsel %vm362, %v2950, 0
      %v3084 = vsel %vm362, %v2951, 0
      %v3087 = vsel %vm362, %v2952, 0
      %v3090 = vsel %vm362, %v2953, 0
      %v3093 = vsel %vm362, %v2954, 0
      %v3096 = vsel %vm362, %v2955, 0
      %v3099 = vsel %vm362, %v2956, 0
      %v3102 = vsel %vm362, %v2957, 0
      %3104 = vmatprep.subr.mxu0 0.0
      %3105 = vmatpush1.msra.mxu0 0.0
      %3106 = vmatprep.subr.mxu0 0.0
      %3107 = vmatpush1.msra.mxu0 0.0
      %3108 = vmatprep.subr.mxu0 0.0
      %3109 = vmatpush1.msra.mxu0 0.0
      %3110 = vmatprep.subr.mxu0 0.0
      %3111 = vmatpush1.msra.mxu0 0.0
      %3112 = vmatprep.subr.mxu0 0.0
      %3113 = vmatpush1.msra.mxu0 0.0
      %3114 = vmatprep.subr.mxu0 0.0
      %3115 = vmatpush1.msra.mxu0 0.0
      %3116 = vmatprep.subr.mxu0 0.0
      %3117 = vmatpush1.msra.mxu0 0.0
      %3118 = vmatprep.subr.mxu0 0.0
      %3119 = vmatpush1.msra.mxu0 0.0
      %3120 = vmatprep.subr.mxu0 0.0
      %3121 = vmatpush1.msra.mxu0 0.0
      %3122 = vmatprep.subr.mxu0 0.0
      %3123 = vmatpush1.msra.mxu0 0.0
      %3124 = vmatprep.subr.mxu0 0.0
      %3125 = vmatpush1.msra.mxu0 0.0
      %3126 = vmatprep.subr.mxu0 0.0
      %3127 = vmatpush1.msra.mxu0 0.0
      %3128 = vmatprep.subr.mxu0 0.0
      %3129 = vmatpush1.msra.mxu0 0.0
      %3130 = vmatprep.subr.mxu0 0.0
      %3131 = vmatpush1.msra.mxu0 0.0
      %3132 = vmatprep.subr.mxu0 0.0
      %3133 = vmatpush1.msra.mxu0 0.0
      %3134 = vmatprep.subr.mxu0 0.0
      %3135 = vmatpush1.msra.mxu0 %v2959
      %3136 = vmatprep.subr.mxu0 0.0
      %3137 = vmatpush2.msra.mxu0 0.0
      %3138 = vmatprep.subr.mxu0 0.0
      %3139 = vmatpush2.msra.mxu0 0.0
      %3140 = vmatprep.subr.mxu0 0.0
      %3141 = vmatpush2.msra.mxu0 0.0
      %3142 = vmatprep.subr.mxu0 0.0
      %3143 = vmatpush2.msra.mxu0 0.0
      %3144 = vmatprep.subr.mxu0 0.0
      %3145 = vmatpush2.msra.mxu0 0.0
      %3146 = vmatprep.subr.mxu0 0.0
      %3147 = vmatpush2.msra.mxu0 0.0
      %3148 = vmatprep.subr.mxu0 0.0
      %3149 = vmatpush2.msra.mxu0 0.0
      %3150 = vmatprep.subr.mxu0 0.0
      %3151 = vmatpush2.msra.mxu0 0.0
      %3152 = vmatprep.subr.mxu0 0.0
      %3153 = vmatpush2.msra.mxu0 0.0
      %3154 = vmatprep.subr.mxu0 0.0
      %3155 = vmatpush2.msra.mxu0 0.0
      %3156 = vmatprep.subr.mxu0 0.0
      %3157 = vmatpush2.msra.mxu0 0.0
      %3158 = vmatprep.subr.mxu0 0.0
      %3159 = vmatpush2.msra.mxu0 0.0
      %3160 = vmatprep.subr.mxu0 0.0
      %3161 = vmatpush2.msra.mxu0 0.0
      %3162 = vmatprep.subr.mxu0 0.0
      %3163 = vmatpush2.msra.mxu0 0.0
      %3164 = vmatprep.subr.mxu0 0.0
      %3165 = vmatpush2.msra.mxu0 0.0
      %3166 = vmatprep.subr.mxu0 0.0
      %3167 = vmatpush2.msra.mxu0 0.0
      %3168 = vmatprep.mubr.f32.mxu0 0.0
      %3169 = vmatmul.mubr.f32.gmra.mxu0 %v2961
      %v3170 = vpop.f32.mrf.mxu0
      %v3171 = vadd.f32 0.0, %v3170
      %v3172 = vpop.f32.mrf.mxu0
      %3173 = vmatprep.mubr.f32.mxu0 0.0
      %3174 = vmatmul.mubr.f32.gmra.mxu0 %v2964
      %v3175 = vpop.f32.mrf.mxu0
      %v3176 = vadd.f32 0.0, %v3175
      %v3177 = vpop.f32.mrf.mxu0
      %3178 = vmatprep.mubr.f32.mxu0 0.0
      %3179 = vmatmul.mubr.f32.gmra.mxu0 %v2967
      %v3180 = vpop.f32.mrf.mxu0
      %v3181 = vadd.f32 0.0, %v3180
      %v3182 = vpop.f32.mrf.mxu0
      %3183 = vmatprep.mubr.f32.mxu0 0.0
      %3184 = vmatmul.mubr.f32.gmra.mxu0 %v2970
      %v3185 = vpop.f32.mrf.mxu0
      %v3186 = vadd.f32 0.0, %v3185
      %v3187 = vpop.f32.mrf.mxu0
      %3188 = vmatprep.mubr.f32.mxu0 0.0
      %3189 = vmatmul.mubr.f32.gmra.mxu0 %v2973
      %v3190 = vpop.f32.mrf.mxu0
      %v3191 = vadd.f32 0.0, %v3190
      %v3192 = vpop.f32.mrf.mxu0
      %3193 = vmatprep.mubr.f32.mxu0 0.0
      %3194 = vmatmul.mubr.f32.gmra.mxu0 %v2976
      %v3195 = vpop.f32.mrf.mxu0
      %v3196 = vadd.f32 0.0, %v3195
      %v3197 = vpop.f32.mrf.mxu0
      %3198 = vmatprep.mubr.f32.mxu0 0.0
      %3199 = vmatmul.mubr.f32.gmra.mxu0 %v2979
      %v3200 = vpop.f32.mrf.mxu0
      %v3201 = vadd.f32 0.0, %v3200
      %v3202 = vpop.f32.mrf.mxu0
      %3203 = vmatprep.mubr.f32.mxu0 0.0
      %3204 = vmatmul.mubr.f32.gmra.mxu0 %v2982
      %v3205 = vpop.f32.mrf.mxu0
      %v3206 = vadd.f32 0.0, %v3205
      %v3207 = vpop.f32.mrf.mxu0
      %3208 = vmatprep.mubr.f32.mxu0 0.0
      %3209 = vmatmul.mubr.f32.gmra.mxu0 %v2985
      %v3210 = vpop.f32.mrf.mxu0
      %v3211 = vadd.f32 0.0, %v3210
      %v3212 = vpop.f32.mrf.mxu0
      %3213 = vmatprep.mubr.f32.mxu0 0.0
      %3214 = vmatmul.mubr.f32.gmra.mxu0 %v2988
      %v3215 = vpop.f32.mrf.mxu0
      %v3216 = vadd.f32 0.0, %v3215
      %v3217 = vpop.f32.mrf.mxu0
      %3218 = vmatprep.mubr.f32.mxu0 0.0
      %3219 = vmatmul.mubr.f32.gmra.mxu0 %v2991
      %v3220 = vpop.f32.mrf.mxu0
      %v3221 = vadd.f32 0.0, %v3220
      %v3222 = vpop.f32.mrf.mxu0
      %3223 = vmatprep.mubr.f32.mxu0 0.0
      %3224 = vmatmul.mubr.f32.gmra.mxu0 %v2994
      %v3225 = vpop.f32.mrf.mxu0
      %v3226 = vadd.f32 0.0, %v3225
      %v3227 = vpop.f32.mrf.mxu0
      %3228 = vmatprep.mubr.f32.mxu0 0.0
      %3229 = vmatmul.mubr.f32.gmra.mxu0 %v2997
      %v3230 = vpop.f32.mrf.mxu0
      %v3231 = vadd.f32 0.0, %v3230
      %v3232 = vpop.f32.mrf.mxu0
      %3233 = vmatprep.mubr.f32.mxu0 0.0
      %3234 = vmatmul.mubr.f32.gmra.mxu0 %v3000
      %v3235 = vpop.f32.mrf.mxu0
      %v3236 = vadd.f32 0.0, %v3235
      %v3237 = vpop.f32.mrf.mxu0
      %3238 = vmatprep.mubr.f32.mxu0 0.0
      %3239 = vmatmul.mubr.f32.gmra.mxu0 %v3003
      %v3240 = vpop.f32.mrf.mxu0
      %v3241 = vadd.f32 0.0, %v3240
      %v3242 = vpop.f32.mrf.mxu0
      %3243 = vmatprep.mubr.f32.mxu0 0.0
      %3244 = vmatmul.mubr.f32.gmra.mxu0 %v3006
      %v3245 = vpop.f32.mrf.mxu0
      %v3246 = vadd.f32 0.0, %v3245
      %v3247 = vpop.f32.mrf.mxu0
      %3248 = vmatprep.mubr.f32.mxu0 0.0
      %3249 = vmatmul.mubr.f32.gmra.mxu0 %v3009
      %v3250 = vpop.f32.mrf.mxu0
      %v3251 = vadd.f32 0.0, %v3250
      %v3252 = vpop.f32.mrf.mxu0
      %3253 = vmatprep.mubr.f32.mxu0 0.0
      %3254 = vmatmul.mubr.f32.gmra.mxu0 %v3012
      %v3255 = vpop.f32.mrf.mxu0
      %v3256 = vadd.f32 0.0, %v3255
      %v3257 = vpop.f32.mrf.mxu0
      %3258 = vmatprep.mubr.f32.mxu0 0.0
      %3259 = vmatmul.mubr.f32.gmra.mxu0 %v3015
      %v3260 = vpop.f32.mrf.mxu0
      %v3261 = vadd.f32 0.0, %v3260
      %v3262 = vpop.f32.mrf.mxu0
      %3263 = vmatprep.mubr.f32.mxu0 0.0
      %3264 = vmatmul.mubr.f32.gmra.mxu0 %v3018
      %v3265 = vpop.f32.mrf.mxu0
      %v3266 = vadd.f32 0.0, %v3265
      %v3267 = vpop.f32.mrf.mxu0
      %3268 = vmatprep.mubr.f32.mxu0 0.0
      %3269 = vmatmul.mubr.f32.gmra.mxu0 %v3021
      %v3270 = vpop.f32.mrf.mxu0
      %v3271 = vadd.f32 0.0, %v3270
      %v3272 = vpop.f32.mrf.mxu0
      %3273 = vmatprep.mubr.f32.mxu0 0.0
      %3274 = vmatmul.mubr.f32.gmra.mxu0 %v3024
      %v3275 = vpop.f32.mrf.mxu0
      %v3276 = vadd.f32 0.0, %v3275
      %v3277 = vpop.f32.mrf.mxu0
      %3278 = vmatprep.mubr.f32.mxu0 0.0
      %3279 = vmatmul.mubr.f32.gmra.mxu0 %v3027
      %v3280 = vpop.f32.mrf.mxu0
      %v3281 = vadd.f32 0.0, %v3280
      %v3282 = vpop.f32.mrf.mxu0
      %3283 = vmatprep.mubr.f32.mxu0 0.0
      %3284 = vmatmul.mubr.f32.gmra.mxu0 %v3030
      %v3285 = vpop.f32.mrf.mxu0
      %v3286 = vadd.f32 0.0, %v3285
      %v3287 = vpop.f32.mrf.mxu0
      %3288 = vmatprep.mubr.f32.mxu0 0.0
      %3289 = vmatmul.mubr.f32.gmra.mxu0 %v3033
      %v3290 = vpop.f32.mrf.mxu0
      %v3291 = vadd.f32 0.0, %v3290
      %v3292 = vpop.f32.mrf.mxu0
      %3293 = vmatprep.mubr.f32.mxu0 0.0
      %3294 = vmatmul.mubr.f32.gmra.mxu0 %v3036
      %v3295 = vpop.f32.mrf.mxu0
      %v3296 = vadd.f32 0.0, %v3295
      %v3297 = vpop.f32.mrf.mxu0
      %3298 = vmatprep.mubr.f32.mxu0 0.0
      %3299 = vmatmul.mubr.f32.gmra.mxu0 %v3039
      %v3300 = vpop.f32.mrf.mxu0
      %v3301 = vadd.f32 0.0, %v3300
      %v3302 = vpop.f32.mrf.mxu0
      %3303 = vmatprep.mubr.f32.mxu0 0.0
      %3304 = vmatmul.mubr.f32.gmra.mxu0 %v3042
      %v3305 = vpop.f32.mrf.mxu0
      %v3306 = vadd.f32 0.0, %v3305
      %v3307 = vpop.f32.mrf.mxu0
      %3308 = vmatprep.mubr.f32.mxu0 0.0
      %3309 = vmatmul.mubr.f32.gmra.mxu0 %v3045
      %v3310 = vpop.f32.mrf.mxu0
      %v3311 = vadd.f32 0.0, %v3310
      %v3312 = vpop.f32.mrf.mxu0
      %3313 = vmatprep.mubr.f32.mxu0 0.0
      %3314 = vmatmul.mubr.f32.gmra.mxu0 %v3048
      %v3315 = vpop.f32.mrf.mxu0
      %v3316 = vadd.f32 0.0, %v3315
      %v3317 = vpop.f32.mrf.mxu0
      %3318 = vmatprep.mubr.f32.mxu0 0.0
      %3319 = vmatmul.mubr.f32.gmra.mxu0 %v3051
      %v3320 = vpop.f32.mrf.mxu0
      %v3321 = vadd.f32 0.0, %v3320
      %v3322 = vpop.f32.mrf.mxu0
      %3323 = vmatprep.mubr.f32.mxu0 0.0
      %3324 = vmatmul.mubr.f32.gmra.mxu0 %v3054
      %v3325 = vpop.f32.mrf.mxu0
      %v3326 = vadd.f32 0.0, %v3325
      %v3327 = vpop.f32.mrf.mxu0
      %3328 = vmatprep.mubr.f32.mxu0 0.0
      %3329 = vmatmul.mubr.f32.gmra.mxu0 %v3057
      %v3330 = vpop.f32.mrf.mxu0
      %v3331 = vadd.f32 0.0, %v3330
      %v3332 = vpop.f32.mrf.mxu0
      %3333 = vmatprep.mubr.f32.mxu0 0.0
      %3334 = vmatmul.mubr.f32.gmra.mxu0 %v3060
      %v3335 = vpop.f32.mrf.mxu0
      %v3336 = vadd.f32 0.0, %v3335
      %v3337 = vpop.f32.mrf.mxu0
      %3338 = vmatprep.mubr.f32.mxu0 0.0
      %3339 = vmatmul.mubr.f32.gmra.mxu0 %v3063
      %v3340 = vpop.f32.mrf.mxu0
      %v3341 = vadd.f32 0.0, %v3340
      %v3342 = vpop.f32.mrf.mxu0
      %3343 = vmatprep.mubr.f32.mxu0 0.0
      %3344 = vmatmul.mubr.f32.gmra.mxu0 %v3066
      %v3345 = vpop.f32.mrf.mxu0
      %v3346 = vadd.f32 0.0, %v3345
      %v3347 = vpop.f32.mrf.mxu0
      %3348 = vmatprep.mubr.f32.mxu0 0.0
      %3349 = vmatmul.mubr.f32.gmra.mxu0 %v3069
      %v3350 = vpop.f32.mrf.mxu0
      %v3351 = vadd.f32 0.0, %v3350
      %v3352 = vpop.f32.mrf.mxu0
      %3353 = vmatprep.mubr.f32.mxu0 0.0
      %3354 = vmatmul.mubr.f32.gmra.mxu0 %v3072
      %v3355 = vpop.f32.mrf.mxu0
      %v3356 = vadd.f32 0.0, %v3355
      %v3357 = vpop.f32.mrf.mxu0
      %3358 = vmatprep.mubr.f32.mxu0 0.0
      %3359 = vmatmul.mubr.f32.gmra.mxu0 %v3075
      %v3360 = vpop.f32.mrf.mxu0
      %v3361 = vadd.f32 0.0, %v3360
      %v3362 = vpop.f32.mrf.mxu0
      %3363 = vmatprep.mubr.f32.mxu0 0.0
      %3364 = vmatmul.mubr.f32.gmra.mxu0 %v3078
      %v3365 = vpop.f32.mrf.mxu0
      %v3366 = vadd.f32 0.0, %v3365
      %v3367 = vpop.f32.mrf.mxu0
      %3368 = vmatprep.mubr.f32.mxu0 0.0
      %3369 = vmatmul.mubr.f32.gmra.mxu0 %v3081
      %v3370 = vpop.f32.mrf.mxu0
      %v3371 = vadd.f32 0.0, %v3370
      %v3372 = vpop.f32.mrf.mxu0
      %3373 = vmatprep.mubr.f32.mxu0 0.0
      %3374 = vmatmul.mubr.f32.gmra.mxu0 %v3084
      %v3375 = vpop.f32.mrf.mxu0
      %v3376 = vadd.f32 0.0, %v3375
      %v3377 = vpop.f32.mrf.mxu0
      %3378 = vmatprep.mubr.f32.mxu0 0.0
      %3379 = vmatmul.mubr.f32.gmra.mxu0 %v3087
      %v3380 = vpop.f32.mrf.mxu0
      %v3381 = vadd.f32 0.0, %v3380
      %v3382 = vpop.f32.mrf.mxu0
      %3383 = vmatprep.mubr.f32.mxu0 0.0
      %3384 = vmatmul.mubr.f32.gmra.mxu0 %v3090
      %v3385 = vpop.f32.mrf.mxu0
      %v3386 = vadd.f32 0.0, %v3385
      %v3387 = vpop.f32.mrf.mxu0
      %3388 = vmatprep.mubr.f32.mxu0 0.0
      %3389 = vmatmul.mubr.f32.gmra.mxu0 %v3093
      %v3390 = vpop.f32.mrf.mxu0
      %v3391 = vadd.f32 0.0, %v3390
      %v3392 = vpop.f32.mrf.mxu0
      %3393 = vmatprep.mubr.f32.mxu0 0.0
      %3394 = vmatmul.mubr.f32.gmra.mxu0 %v3096
      %v3395 = vpop.f32.mrf.mxu0
      %v3396 = vadd.f32 0.0, %v3395
      %v3397 = vpop.f32.mrf.mxu0
      %3398 = vmatprep.mubr.f32.mxu0 0.0
      %3399 = vmatmul.mubr.f32.gmra.mxu0 %v3099
      %v3400 = vpop.f32.mrf.mxu0
      %v3401 = vadd.f32 0.0, %v3400
      %v3402 = vpop.f32.mrf.mxu0
      %3403 = vmatprep.mubr.f32.mxu0 0.0
      %3404 = vmatmul.mubr.f32.gmra.mxu0 %v3102
      %v3405 = vpop.f32.mrf.mxu0
      %v3406 = vadd.f32 0.0, %v3405
      %v3407 = vpop.f32.mrf.mxu0
      %3408 = vdwg.mxu0
      %v3409 = vadd.f32 %v2860, %v3171
      %v3410 = vadd.f32 %v2861, %v3176
      %v3411 = vadd.f32 %v2862, %v3181
      %v3412 = vadd.f32 %v2863, %v3186
      %v3413 = vadd.f32 %v2864, %v3191
      %v3414 = vadd.f32 %v2865, %v3196
      %v3415 = vadd.f32 %v2866, %v3201
      %v3416 = vadd.f32 %v2867, %v3206
      %v3417 = vadd.f32 %v2868, %v3211
      %v3418 = vadd.f32 %v2869, %v3216
      %v3419 = vadd.f32 %v2870, %v3221
      %v3420 = vadd.f32 %v2871, %v3226
      %v3421 = vadd.f32 %v2872, %v3231
      %v3422 = vadd.f32 %v2873, %v3236
      %v3423 = vadd.f32 %v2874, %v3241
      %v3424 = vadd.f32 %v2875, %v3246
      %v3425 = vadd.f32 %v2876, %v3251
      %v3426 = vadd.f32 %v2877, %v3256
      %v3427 = vadd.f32 %v2878, %v3261
      %v3428 = vadd.f32 %v2879, %v3266
      %v3429 = vadd.f32 %v2880, %v3271
      %v3430 = vadd.f32 %v2881, %v3276
      %v3431 = vadd.f32 %v2882, %v3281
      %v3432 = vadd.f32 %v2883, %v3286
      %v3433 = vadd.f32 %v2884, %v3291
      %v3434 = vadd.f32 %v2885, %v3296
      %v3435 = vadd.f32 %v2886, %v3301
      %v3436 = vadd.f32 %v2887, %v3306
      %v3437 = vadd.f32 %v2888, %v3311
      %v3438 = vadd.f32 %v2889, %v3316
      %v3439 = vadd.f32 %v2890, %v3321
      %v3440 = vadd.f32 %v2891, %v3326
      %v3441 = vadd.f32 %v2892, %v3331
      %v3442 = vadd.f32 %v2893, %v3336
      %v3443 = vadd.f32 %v2894, %v3341
      %v3444 = vadd.f32 %v2895, %v3346
      %v3445 = vadd.f32 %v2896, %v3351
      %v3446 = vadd.f32 %v2897, %v3356
      %v3447 = vadd.f32 %v2898, %v3361
      %v3448 = vadd.f32 %v2899, %v3366
      %v3449 = vadd.f32 %v2900, %v3371
      %v3450 = vadd.f32 %v2901, %v3376
      %v3451 = vadd.f32 %v2902, %v3381
      %v3452 = vadd.f32 %v2903, %v3386
      %v3453 = vadd.f32 %v2904, %v3391
      %v3454 = vadd.f32 %v2905, %v3396
      %v3455 = vadd.f32 %v2906, %v3401
      %v3456 = vadd.f32 %v2907, %v3406
      %s3457 = sadd.s32 %s259, 36
      %s3458 = scalar_lea.vmem %s236, %s3457
      %v3459 = vld [vmem:[%s3458] sm:$0xff]
      %v3460 = vld [vmem:[%s3458 + $0x8] sm:$0xff]
      %v3461 = vld [vmem:[%s3458 + $0x10] sm:$0xff]
      %v3462 = vld [vmem:[%s3458 + $0x18] sm:$0xff]
      %v3463 = vld [vmem:[%s3458 + $0x20] sm:$0xff]
      %v3464 = vld [vmem:[%s3458 + $0x28] sm:$0xff]
      %v3465 = vld [vmem:[%s3458 + $0x30] sm:$0xff]
      %v3466 = vld [vmem:[%s3458 + $0x38] sm:$0xff]
      %v3467 = vld [vmem:[%s3458 + $0x40] sm:$0xff]
      %v3468 = vld [vmem:[%s3458 + $0x48] sm:$0xff]
      %v3469 = vld [vmem:[%s3458 + $0x50] sm:$0xff]
      %v3470 = vld [vmem:[%s3458 + $0x58] sm:$0xff]
      %v3471 = vld [vmem:[%s3458 + $0x60] sm:$0xff]
      %v3472 = vld [vmem:[%s3458 + $0x68] sm:$0xff]
      %v3473 = vld [vmem:[%s3458 + $0x70] sm:$0xff]
      %v3474 = vld [vmem:[%s3458 + $0x78] sm:$0xff]
      %v3475 = vld [vmem:[%s3458 + $0x80] sm:$0xff]
      %v3476 = vld [vmem:[%s3458 + $0x88] sm:$0xff]
      %v3477 = vld [vmem:[%s3458 + $0x90] sm:$0xff]
      %v3478 = vld [vmem:[%s3458 + $0x98] sm:$0xff]
      %v3479 = vld [vmem:[%s3458 + $0xa0] sm:$0xff]
      %v3480 = vld [vmem:[%s3458 + $0xa8] sm:$0xff]
      %v3481 = vld [vmem:[%s3458 + $0xb0] sm:$0xff]
      %v3482 = vld [vmem:[%s3458 + $0xb8] sm:$0xff]
      %v3483 = vld [vmem:[%s3458 + $0xc0] sm:$0xff]
      %v3484 = vld [vmem:[%s3458 + $0xc8] sm:$0xff]
      %v3485 = vld [vmem:[%s3458 + $0xd0] sm:$0xff]
      %v3486 = vld [vmem:[%s3458 + $0xd8] sm:$0xff]
      %v3487 = vld [vmem:[%s3458 + $0xe0] sm:$0xff]
      %v3488 = vld [vmem:[%s3458 + $0xe8] sm:$0xff]
      %v3489 = vld [vmem:[%s3458 + $0xf0] sm:$0xff]
      %v3490 = vld [vmem:[%s3458 + $0xf8] sm:$0xff]
      %v3491 = vld [vmem:[%s3458 + $0x100] sm:$0xff]
      %v3492 = vld [vmem:[%s3458 + $0x108] sm:$0xff]
      %v3493 = vld [vmem:[%s3458 + $0x110] sm:$0xff]
      %v3494 = vld [vmem:[%s3458 + $0x118] sm:$0xff]
      %v3495 = vld [vmem:[%s3458 + $0x120] sm:$0xff]
      %v3496 = vld [vmem:[%s3458 + $0x128] sm:$0xff]
      %v3497 = vld [vmem:[%s3458 + $0x130] sm:$0xff]
      %v3498 = vld [vmem:[%s3458 + $0x138] sm:$0xff]
      %v3499 = vld [vmem:[%s3458 + $0x140] sm:$0xff]
      %v3500 = vld [vmem:[%s3458 + $0x148] sm:$0xff]
      %v3501 = vld [vmem:[%s3458 + $0x150] sm:$0xff]
      %v3502 = vld [vmem:[%s3458 + $0x158] sm:$0xff]
      %v3503 = vld [vmem:[%s3458 + $0x160] sm:$0xff]
      %v3504 = vld [vmem:[%s3458 + $0x168] sm:$0xff]
      %v3505 = vld [vmem:[%s3458 + $0x170] sm:$0xff]
      %v3506 = vld [vmem:[%s3458 + $0x178] sm:$0xff]
      %s3507 = scalar_lea.vmem %s241, 48
      %v3508 = vld [vmem:[%s3507] sm:$0xff]
      %v3510 = vsel %vm362, %v3459, 0
      %v3513 = vsel %vm362, %v3460, 0
      %v3516 = vsel %vm362, %v3461, 0
      %v3519 = vsel %vm362, %v3462, 0
      %v3522 = vsel %vm362, %v3463, 0
      %v3525 = vsel %vm362, %v3464, 0
      %v3528 = vsel %vm362, %v3465, 0
      %v3531 = vsel %vm362, %v3466, 0
      %v3534 = vsel %vm362, %v3467, 0
      %v3537 = vsel %vm362, %v3468, 0
      %v3540 = vsel %vm362, %v3469, 0
      %v3543 = vsel %vm362, %v3470, 0
      %v3546 = vsel %vm362, %v3471, 0
      %v3549 = vsel %vm362, %v3472, 0
      %v3552 = vsel %vm362, %v3473, 0
      %v3555 = vsel %vm362, %v3474, 0
      %v3558 = vsel %vm362, %v3475, 0
      %v3561 = vsel %vm362, %v3476, 0
      %v3564 = vsel %vm362, %v3477, 0
      %v3567 = vsel %vm362, %v3478, 0
      %v3570 = vsel %vm362, %v3479, 0
      %v3573 = vsel %vm362, %v3480, 0
      %v3576 = vsel %vm362, %v3481, 0
      %v3579 = vsel %vm362, %v3482, 0
      %v3582 = vsel %vm362, %v3483, 0
      %v3585 = vsel %vm362, %v3484, 0
      %v3588 = vsel %vm362, %v3485, 0
      %v3591 = vsel %vm362, %v3486, 0
      %v3594 = vsel %vm362, %v3487, 0
      %v3597 = vsel %vm362, %v3488, 0
      %v3600 = vsel %vm362, %v3489, 0
      %v3603 = vsel %vm362, %v3490, 0
      %v3606 = vsel %vm362, %v3491, 0
      %v3609 = vsel %vm362, %v3492, 0
      %v3612 = vsel %vm362, %v3493, 0
      %v3615 = vsel %vm362, %v3494, 0
      %v3618 = vsel %vm362, %v3495, 0
      %v3621 = vsel %vm362, %v3496, 0
      %v3624 = vsel %vm362, %v3497, 0
      %v3627 = vsel %vm362, %v3498, 0
      %v3630 = vsel %vm362, %v3499, 0
      %v3633 = vsel %vm362, %v3500, 0
      %v3636 = vsel %vm362, %v3501, 0
      %v3639 = vsel %vm362, %v3502, 0
      %v3642 = vsel %vm362, %v3503, 0
      %v3645 = vsel %vm362, %v3504, 0
      %v3648 = vsel %vm362, %v3505, 0
      %v3651 = vsel %vm362, %v3506, 0
      %3653 = vmatprep.subr.mxu0 0.0
      %3654 = vmatpush1.msra.mxu0 0.0
      %3655 = vmatprep.subr.mxu0 0.0
      %3656 = vmatpush1.msra.mxu0 0.0
      %3657 = vmatprep.subr.mxu0 0.0
      %3658 = vmatpush1.msra.mxu0 0.0
      %3659 = vmatprep.subr.mxu0 0.0
      %3660 = vmatpush1.msra.mxu0 0.0
      %3661 = vmatprep.subr.mxu0 0.0
      %3662 = vmatpush1.msra.mxu0 0.0
      %3663 = vmatprep.subr.mxu0 0.0
      %3664 = vmatpush1.msra.mxu0 0.0
      %3665 = vmatprep.subr.mxu0 0.0
      %3666 = vmatpush1.msra.mxu0 0.0
      %3667 = vmatprep.subr.mxu0 0.0
      %3668 = vmatpush1.msra.mxu0 0.0
      %3669 = vmatprep.subr.mxu0 0.0
      %3670 = vmatpush1.msra.mxu0 0.0
      %3671 = vmatprep.subr.mxu0 0.0
      %3672 = vmatpush1.msra.mxu0 0.0
      %3673 = vmatprep.subr.mxu0 0.0
      %3674 = vmatpush1.msra.mxu0 0.0
      %3675 = vmatprep.subr.mxu0 0.0
      %3676 = vmatpush1.msra.mxu0 0.0
      %3677 = vmatprep.subr.mxu0 0.0
      %3678 = vmatpush1.msra.mxu0 0.0
      %3679 = vmatprep.subr.mxu0 0.0
      %3680 = vmatpush1.msra.mxu0 0.0
      %3681 = vmatprep.subr.mxu0 0.0
      %3682 = vmatpush1.msra.mxu0 0.0
      %3683 = vmatprep.subr.mxu0 0.0
      %3684 = vmatpush1.msra.mxu0 %v3508
      %3685 = vmatprep.subr.mxu0 0.0
      %3686 = vmatpush2.msra.mxu0 0.0
      %3687 = vmatprep.subr.mxu0 0.0
      %3688 = vmatpush2.msra.mxu0 0.0
      %3689 = vmatprep.subr.mxu0 0.0
      %3690 = vmatpush2.msra.mxu0 0.0
      %3691 = vmatprep.subr.mxu0 0.0
      %3692 = vmatpush2.msra.mxu0 0.0
      %3693 = vmatprep.subr.mxu0 0.0
      %3694 = vmatpush2.msra.mxu0 0.0
      %3695 = vmatprep.subr.mxu0 0.0
      %3696 = vmatpush2.msra.mxu0 0.0
      %3697 = vmatprep.subr.mxu0 0.0
      %3698 = vmatpush2.msra.mxu0 0.0
      %3699 = vmatprep.subr.mxu0 0.0
      %3700 = vmatpush2.msra.mxu0 0.0
      %3701 = vmatprep.subr.mxu0 0.0
      %3702 = vmatpush2.msra.mxu0 0.0
      %3703 = vmatprep.subr.mxu0 0.0
      %3704 = vmatpush2.msra.mxu0 0.0
      %3705 = vmatprep.subr.mxu0 0.0
      %3706 = vmatpush2.msra.mxu0 0.0
      %3707 = vmatprep.subr.mxu0 0.0
      %3708 = vmatpush2.msra.mxu0 0.0
      %3709 = vmatprep.subr.mxu0 0.0
      %3710 = vmatpush2.msra.mxu0 0.0
      %3711 = vmatprep.subr.mxu0 0.0
      %3712 = vmatpush2.msra.mxu0 0.0
      %3713 = vmatprep.subr.mxu0 0.0
      %3714 = vmatpush2.msra.mxu0 0.0
      %3715 = vmatprep.subr.mxu0 0.0
      %3716 = vmatpush2.msra.mxu0 0.0
      %3717 = vmatprep.mubr.f32.mxu0 0.0
      %3718 = vmatmul.mubr.f32.gmra.mxu0 %v3510
      %v3719 = vpop.f32.mrf.mxu0
      %v3720 = vadd.f32 0.0, %v3719
      %v3721 = vpop.f32.mrf.mxu0
      %3722 = vmatprep.mubr.f32.mxu0 0.0
      %3723 = vmatmul.mubr.f32.gmra.mxu0 %v3513
      %v3724 = vpop.f32.mrf.mxu0
      %v3725 = vadd.f32 0.0, %v3724
      %v3726 = vpop.f32.mrf.mxu0
      %3727 = vmatprep.mubr.f32.mxu0 0.0
      %3728 = vmatmul.mubr.f32.gmra.mxu0 %v3516
      %v3729 = vpop.f32.mrf.mxu0
      %v3730 = vadd.f32 0.0, %v3729
      %v3731 = vpop.f32.mrf.mxu0
      %3732 = vmatprep.mubr.f32.mxu0 0.0
      %3733 = vmatmul.mubr.f32.gmra.mxu0 %v3519
      %v3734 = vpop.f32.mrf.mxu0
      %v3735 = vadd.f32 0.0, %v3734
      %v3736 = vpop.f32.mrf.mxu0
      %3737 = vmatprep.mubr.f32.mxu0 0.0
      %3738 = vmatmul.mubr.f32.gmra.mxu0 %v3522
      %v3739 = vpop.f32.mrf.mxu0
      %v3740 = vadd.f32 0.0, %v3739
      %v3741 = vpop.f32.mrf.mxu0
      %3742 = vmatprep.mubr.f32.mxu0 0.0
      %3743 = vmatmul.mubr.f32.gmra.mxu0 %v3525
      %v3744 = vpop.f32.mrf.mxu0
      %v3745 = vadd.f32 0.0, %v3744
      %v3746 = vpop.f32.mrf.mxu0
      %3747 = vmatprep.mubr.f32.mxu0 0.0
      %3748 = vmatmul.mubr.f32.gmra.mxu0 %v3528
      %v3749 = vpop.f32.mrf.mxu0
      %v3750 = vadd.f32 0.0, %v3749
      %v3751 = vpop.f32.mrf.mxu0
      %3752 = vmatprep.mubr.f32.mxu0 0.0
      %3753 = vmatmul.mubr.f32.gmra.mxu0 %v3531
      %v3754 = vpop.f32.mrf.mxu0
      %v3755 = vadd.f32 0.0, %v3754
      %v3756 = vpop.f32.mrf.mxu0
      %3757 = vmatprep.mubr.f32.mxu0 0.0
      %3758 = vmatmul.mubr.f32.gmra.mxu0 %v3534
      %v3759 = vpop.f32.mrf.mxu0
      %v3760 = vadd.f32 0.0, %v3759
      %v3761 = vpop.f32.mrf.mxu0
      %3762 = vmatprep.mubr.f32.mxu0 0.0
      %3763 = vmatmul.mubr.f32.gmra.mxu0 %v3537
      %v3764 = vpop.f32.mrf.mxu0
      %v3765 = vadd.f32 0.0, %v3764
      %v3766 = vpop.f32.mrf.mxu0
      %3767 = vmatprep.mubr.f32.mxu0 0.0
      %3768 = vmatmul.mubr.f32.gmra.mxu0 %v3540
      %v3769 = vpop.f32.mrf.mxu0
      %v3770 = vadd.f32 0.0, %v3769
      %v3771 = vpop.f32.mrf.mxu0
      %3772 = vmatprep.mubr.f32.mxu0 0.0
      %3773 = vmatmul.mubr.f32.gmra.mxu0 %v3543
      %v3774 = vpop.f32.mrf.mxu0
      %v3775 = vadd.f32 0.0, %v3774
      %v3776 = vpop.f32.mrf.mxu0
      %3777 = vmatprep.mubr.f32.mxu0 0.0
      %3778 = vmatmul.mubr.f32.gmra.mxu0 %v3546
      %v3779 = vpop.f32.mrf.mxu0
      %v3780 = vadd.f32 0.0, %v3779
      %v3781 = vpop.f32.mrf.mxu0
      %3782 = vmatprep.mubr.f32.mxu0 0.0
      %3783 = vmatmul.mubr.f32.gmra.mxu0 %v3549
      %v3784 = vpop.f32.mrf.mxu0
      %v3785 = vadd.f32 0.0, %v3784
      %v3786 = vpop.f32.mrf.mxu0
      %3787 = vmatprep.mubr.f32.mxu0 0.0
      %3788 = vmatmul.mubr.f32.gmra.mxu0 %v3552
      %v3789 = vpop.f32.mrf.mxu0
      %v3790 = vadd.f32 0.0, %v3789
      %v3791 = vpop.f32.mrf.mxu0
      %3792 = vmatprep.mubr.f32.mxu0 0.0
      %3793 = vmatmul.mubr.f32.gmra.mxu0 %v3555
      %v3794 = vpop.f32.mrf.mxu0
      %v3795 = vadd.f32 0.0, %v3794
      %v3796 = vpop.f32.mrf.mxu0
      %3797 = vmatprep.mubr.f32.mxu0 0.0
      %3798 = vmatmul.mubr.f32.gmra.mxu0 %v3558
      %v3799 = vpop.f32.mrf.mxu0
      %v3800 = vadd.f32 0.0, %v3799
      %v3801 = vpop.f32.mrf.mxu0
      %3802 = vmatprep.mubr.f32.mxu0 0.0
      %3803 = vmatmul.mubr.f32.gmra.mxu0 %v3561
      %v3804 = vpop.f32.mrf.mxu0
      %v3805 = vadd.f32 0.0, %v3804
      %v3806 = vpop.f32.mrf.mxu0
      %3807 = vmatprep.mubr.f32.mxu0 0.0
      %3808 = vmatmul.mubr.f32.gmra.mxu0 %v3564
      %v3809 = vpop.f32.mrf.mxu0
      %v3810 = vadd.f32 0.0, %v3809
      %v3811 = vpop.f32.mrf.mxu0
      %3812 = vmatprep.mubr.f32.mxu0 0.0
      %3813 = vmatmul.mubr.f32.gmra.mxu0 %v3567
      %v3814 = vpop.f32.mrf.mxu0
      %v3815 = vadd.f32 0.0, %v3814
      %v3816 = vpop.f32.mrf.mxu0
      %3817 = vmatprep.mubr.f32.mxu0 0.0
      %3818 = vmatmul.mubr.f32.gmra.mxu0 %v3570
      %v3819 = vpop.f32.mrf.mxu0
      %v3820 = vadd.f32 0.0, %v3819
      %v3821 = vpop.f32.mrf.mxu0
      %3822 = vmatprep.mubr.f32.mxu0 0.0
      %3823 = vmatmul.mubr.f32.gmra.mxu0 %v3573
      %v3824 = vpop.f32.mrf.mxu0
      %v3825 = vadd.f32 0.0, %v3824
      %v3826 = vpop.f32.mrf.mxu0
      %3827 = vmatprep.mubr.f32.mxu0 0.0
      %3828 = vmatmul.mubr.f32.gmra.mxu0 %v3576
      %v3829 = vpop.f32.mrf.mxu0
      %v3830 = vadd.f32 0.0, %v3829
      %v3831 = vpop.f32.mrf.mxu0
      %3832 = vmatprep.mubr.f32.mxu0 0.0
      %3833 = vmatmul.mubr.f32.gmra.mxu0 %v3579
      %v3834 = vpop.f32.mrf.mxu0
      %v3835 = vadd.f32 0.0, %v3834
      %v3836 = vpop.f32.mrf.mxu0
      %3837 = vmatprep.mubr.f32.mxu0 0.0
      %3838 = vmatmul.mubr.f32.gmra.mxu0 %v3582
      %v3839 = vpop.f32.mrf.mxu0
      %v3840 = vadd.f32 0.0, %v3839
      %v3841 = vpop.f32.mrf.mxu0
      %3842 = vmatprep.mubr.f32.mxu0 0.0
      %3843 = vmatmul.mubr.f32.gmra.mxu0 %v3585
      %v3844 = vpop.f32.mrf.mxu0
      %v3845 = vadd.f32 0.0, %v3844
      %v3846 = vpop.f32.mrf.mxu0
      %3847 = vmatprep.mubr.f32.mxu0 0.0
      %3848 = vmatmul.mubr.f32.gmra.mxu0 %v3588
      %v3849 = vpop.f32.mrf.mxu0
      %v3850 = vadd.f32 0.0, %v3849
      %v3851 = vpop.f32.mrf.mxu0
      %3852 = vmatprep.mubr.f32.mxu0 0.0
      %3853 = vmatmul.mubr.f32.gmra.mxu0 %v3591
      %v3854 = vpop.f32.mrf.mxu0
      %v3855 = vadd.f32 0.0, %v3854
      %v3856 = vpop.f32.mrf.mxu0
      %3857 = vmatprep.mubr.f32.mxu0 0.0
      %3858 = vmatmul.mubr.f32.gmra.mxu0 %v3594
      %v3859 = vpop.f32.mrf.mxu0
      %v3860 = vadd.f32 0.0, %v3859
      %v3861 = vpop.f32.mrf.mxu0
      %3862 = vmatprep.mubr.f32.mxu0 0.0
      %3863 = vmatmul.mubr.f32.gmra.mxu0 %v3597
      %v3864 = vpop.f32.mrf.mxu0
      %v3865 = vadd.f32 0.0, %v3864
      %v3866 = vpop.f32.mrf.mxu0
      %3867 = vmatprep.mubr.f32.mxu0 0.0
      %3868 = vmatmul.mubr.f32.gmra.mxu0 %v3600
      %v3869 = vpop.f32.mrf.mxu0
      %v3870 = vadd.f32 0.0, %v3869
      %v3871 = vpop.f32.mrf.mxu0
      %3872 = vmatprep.mubr.f32.mxu0 0.0
      %3873 = vmatmul.mubr.f32.gmra.mxu0 %v3603
      %v3874 = vpop.f32.mrf.mxu0
      %v3875 = vadd.f32 0.0, %v3874
      %v3876 = vpop.f32.mrf.mxu0
      %3877 = vmatprep.mubr.f32.mxu0 0.0
      %3878 = vmatmul.mubr.f32.gmra.mxu0 %v3606
      %v3879 = vpop.f32.mrf.mxu0
      %v3880 = vadd.f32 0.0, %v3879
      %v3881 = vpop.f32.mrf.mxu0
      %3882 = vmatprep.mubr.f32.mxu0 0.0
      %3883 = vmatmul.mubr.f32.gmra.mxu0 %v3609
      %v3884 = vpop.f32.mrf.mxu0
      %v3885 = vadd.f32 0.0, %v3884
      %v3886 = vpop.f32.mrf.mxu0
      %3887 = vmatprep.mubr.f32.mxu0 0.0
      %3888 = vmatmul.mubr.f32.gmra.mxu0 %v3612
      %v3889 = vpop.f32.mrf.mxu0
      %v3890 = vadd.f32 0.0, %v3889
      %v3891 = vpop.f32.mrf.mxu0
      %3892 = vmatprep.mubr.f32.mxu0 0.0
      %3893 = vmatmul.mubr.f32.gmra.mxu0 %v3615
      %v3894 = vpop.f32.mrf.mxu0
      %v3895 = vadd.f32 0.0, %v3894
      %v3896 = vpop.f32.mrf.mxu0
      %3897 = vmatprep.mubr.f32.mxu0 0.0
      %3898 = vmatmul.mubr.f32.gmra.mxu0 %v3618
      %v3899 = vpop.f32.mrf.mxu0
      %v3900 = vadd.f32 0.0, %v3899
      %v3901 = vpop.f32.mrf.mxu0
      %3902 = vmatprep.mubr.f32.mxu0 0.0
      %3903 = vmatmul.mubr.f32.gmra.mxu0 %v3621
      %v3904 = vpop.f32.mrf.mxu0
      %v3905 = vadd.f32 0.0, %v3904
      %v3906 = vpop.f32.mrf.mxu0
      %3907 = vmatprep.mubr.f32.mxu0 0.0
      %3908 = vmatmul.mubr.f32.gmra.mxu0 %v3624
      %v3909 = vpop.f32.mrf.mxu0
      %v3910 = vadd.f32 0.0, %v3909
      %v3911 = vpop.f32.mrf.mxu0
      %3912 = vmatprep.mubr.f32.mxu0 0.0
      %3913 = vmatmul.mubr.f32.gmra.mxu0 %v3627
      %v3914 = vpop.f32.mrf.mxu0
      %v3915 = vadd.f32 0.0, %v3914
      %v3916 = vpop.f32.mrf.mxu0
      %3917 = vmatprep.mubr.f32.mxu0 0.0
      %3918 = vmatmul.mubr.f32.gmra.mxu0 %v3630
      %v3919 = vpop.f32.mrf.mxu0
      %v3920 = vadd.f32 0.0, %v3919
      %v3921 = vpop.f32.mrf.mxu0
      %3922 = vmatprep.mubr.f32.mxu0 0.0
      %3923 = vmatmul.mubr.f32.gmra.mxu0 %v3633
      %v3924 = vpop.f32.mrf.mxu0
      %v3925 = vadd.f32 0.0, %v3924
      %v3926 = vpop.f32.mrf.mxu0
      %3927 = vmatprep.mubr.f32.mxu0 0.0
      %3928 = vmatmul.mubr.f32.gmra.mxu0 %v3636
      %v3929 = vpop.f32.mrf.mxu0
      %v3930 = vadd.f32 0.0, %v3929
      %v3931 = vpop.f32.mrf.mxu0
      %3932 = vmatprep.mubr.f32.mxu0 0.0
      %3933 = vmatmul.mubr.f32.gmra.mxu0 %v3639
      %v3934 = vpop.f32.mrf.mxu0
      %v3935 = vadd.f32 0.0, %v3934
      %v3936 = vpop.f32.mrf.mxu0
      %3937 = vmatprep.mubr.f32.mxu0 0.0
      %3938 = vmatmul.mubr.f32.gmra.mxu0 %v3642
      %v3939 = vpop.f32.mrf.mxu0
      %v3940 = vadd.f32 0.0, %v3939
      %v3941 = vpop.f32.mrf.mxu0
      %3942 = vmatprep.mubr.f32.mxu0 0.0
      %3943 = vmatmul.mubr.f32.gmra.mxu0 %v3645
      %v3944 = vpop.f32.mrf.mxu0
      %v3945 = vadd.f32 0.0, %v3944
      %v3946 = vpop.f32.mrf.mxu0
      %3947 = vmatprep.mubr.f32.mxu0 0.0
      %3948 = vmatmul.mubr.f32.gmra.mxu0 %v3648
      %v3949 = vpop.f32.mrf.mxu0
      %v3950 = vadd.f32 0.0, %v3949
      %v3951 = vpop.f32.mrf.mxu0
      %3952 = vmatprep.mubr.f32.mxu0 0.0
      %3953 = vmatmul.mubr.f32.gmra.mxu0 %v3651
      %v3954 = vpop.f32.mrf.mxu0
      %v3955 = vadd.f32 0.0, %v3954
      %v3956 = vpop.f32.mrf.mxu0
      %3957 = vdwg.mxu0
      %v3958 = vadd.f32 %v3409, %v3720
      %v3959 = vadd.f32 %v3410, %v3725
      %v3960 = vadd.f32 %v3411, %v3730
      %v3961 = vadd.f32 %v3412, %v3735
      %v3962 = vadd.f32 %v3413, %v3740
      %v3963 = vadd.f32 %v3414, %v3745
      %v3964 = vadd.f32 %v3415, %v3750
      %v3965 = vadd.f32 %v3416, %v3755
      %v3966 = vadd.f32 %v3417, %v3760
      %v3967 = vadd.f32 %v3418, %v3765
      %v3968 = vadd.f32 %v3419, %v3770
      %v3969 = vadd.f32 %v3420, %v3775
      %v3970 = vadd.f32 %v3421, %v3780
      %v3971 = vadd.f32 %v3422, %v3785
      %v3972 = vadd.f32 %v3423, %v3790
      %v3973 = vadd.f32 %v3424, %v3795
      %v3974 = vadd.f32 %v3425, %v3800
      %v3975 = vadd.f32 %v3426, %v3805
      %v3976 = vadd.f32 %v3427, %v3810
      %v3977 = vadd.f32 %v3428, %v3815
      %v3978 = vadd.f32 %v3429, %v3820
      %v3979 = vadd.f32 %v3430, %v3825
      %v3980 = vadd.f32 %v3431, %v3830
      %v3981 = vadd.f32 %v3432, %v3835
      %v3982 = vadd.f32 %v3433, %v3840
      %v3983 = vadd.f32 %v3434, %v3845
      %v3984 = vadd.f32 %v3435, %v3850
      %v3985 = vadd.f32 %v3436, %v3855
      %v3986 = vadd.f32 %v3437, %v3860
      %v3987 = vadd.f32 %v3438, %v3865
      %v3988 = vadd.f32 %v3439, %v3870
      %v3989 = vadd.f32 %v3440, %v3875
      %v3990 = vadd.f32 %v3441, %v3880
      %v3991 = vadd.f32 %v3442, %v3885
      %v3992 = vadd.f32 %v3443, %v3890
      %v3993 = vadd.f32 %v3444, %v3895
      %v3994 = vadd.f32 %v3445, %v3900
      %v3995 = vadd.f32 %v3446, %v3905
      %v3996 = vadd.f32 %v3447, %v3910
      %v3997 = vadd.f32 %v3448, %v3915
      %v3998 = vadd.f32 %v3449, %v3920
      %v3999 = vadd.f32 %v3450, %v3925
      %v4000 = vadd.f32 %v3451, %v3930
      %v4001 = vadd.f32 %v3452, %v3935
      %v4002 = vadd.f32 %v3453, %v3940
      %v4003 = vadd.f32 %v3454, %v3945
      %v4004 = vadd.f32 %v3455, %v3950
      %v4005 = vadd.f32 %v3456, %v3955
      %s4006 = sadd.s32 %s259, 37
      %s4007 = scalar_lea.vmem %s236, %s4006
      %v4008 = vld [vmem:[%s4007] sm:$0xff]
      %v4009 = vld [vmem:[%s4007 + $0x8] sm:$0xff]
      %v4010 = vld [vmem:[%s4007 + $0x10] sm:$0xff]
      %v4011 = vld [vmem:[%s4007 + $0x18] sm:$0xff]
      %v4012 = vld [vmem:[%s4007 + $0x20] sm:$0xff]
      %v4013 = vld [vmem:[%s4007 + $0x28] sm:$0xff]
      %v4014 = vld [vmem:[%s4007 + $0x30] sm:$0xff]
      %v4015 = vld [vmem:[%s4007 + $0x38] sm:$0xff]
      %v4016 = vld [vmem:[%s4007 + $0x40] sm:$0xff]
      %v4017 = vld [vmem:[%s4007 + $0x48] sm:$0xff]
      %v4018 = vld [vmem:[%s4007 + $0x50] sm:$0xff]
      %v4019 = vld [vmem:[%s4007 + $0x58] sm:$0xff]
      %v4020 = vld [vmem:[%s4007 + $0x60] sm:$0xff]
      %v4021 = vld [vmem:[%s4007 + $0x68] sm:$0xff]
      %v4022 = vld [vmem:[%s4007 + $0x70] sm:$0xff]
      %v4023 = vld [vmem:[%s4007 + $0x78] sm:$0xff]
      %v4024 = vld [vmem:[%s4007 + $0x80] sm:$0xff]
      %v4025 = vld [vmem:[%s4007 + $0x88] sm:$0xff]
      %v4026 = vld [vmem:[%s4007 + $0x90] sm:$0xff]
      %v4027 = vld [vmem:[%s4007 + $0x98] sm:$0xff]
      %v4028 = vld [vmem:[%s4007 + $0xa0] sm:$0xff]
      %v4029 = vld [vmem:[%s4007 + $0xa8] sm:$0xff]
      %v4030 = vld [vmem:[%s4007 + $0xb0] sm:$0xff]
      %v4031 = vld [vmem:[%s4007 + $0xb8] sm:$0xff]
      %v4032 = vld [vmem:[%s4007 + $0xc0] sm:$0xff]
      %v4033 = vld [vmem:[%s4007 + $0xc8] sm:$0xff]
      %v4034 = vld [vmem:[%s4007 + $0xd0] sm:$0xff]
      %v4035 = vld [vmem:[%s4007 + $0xd8] sm:$0xff]
      %v4036 = vld [vmem:[%s4007 + $0xe0] sm:$0xff]
      %v4037 = vld [vmem:[%s4007 + $0xe8] sm:$0xff]
      %v4038 = vld [vmem:[%s4007 + $0xf0] sm:$0xff]
      %v4039 = vld [vmem:[%s4007 + $0xf8] sm:$0xff]
      %v4040 = vld [vmem:[%s4007 + $0x100] sm:$0xff]
      %v4041 = vld [vmem:[%s4007 + $0x108] sm:$0xff]
      %v4042 = vld [vmem:[%s4007 + $0x110] sm:$0xff]
      %v4043 = vld [vmem:[%s4007 + $0x118] sm:$0xff]
      %v4044 = vld [vmem:[%s4007 + $0x120] sm:$0xff]
      %v4045 = vld [vmem:[%s4007 + $0x128] sm:$0xff]
      %v4046 = vld [vmem:[%s4007 + $0x130] sm:$0xff]
      %v4047 = vld [vmem:[%s4007 + $0x138] sm:$0xff]
      %v4048 = vld [vmem:[%s4007 + $0x140] sm:$0xff]
      %v4049 = vld [vmem:[%s4007 + $0x148] sm:$0xff]
      %v4050 = vld [vmem:[%s4007 + $0x150] sm:$0xff]
      %v4051 = vld [vmem:[%s4007 + $0x158] sm:$0xff]
      %v4052 = vld [vmem:[%s4007 + $0x160] sm:$0xff]
      %v4053 = vld [vmem:[%s4007 + $0x168] sm:$0xff]
      %v4054 = vld [vmem:[%s4007 + $0x170] sm:$0xff]
      %v4055 = vld [vmem:[%s4007 + $0x178] sm:$0xff]
      %s4056 = scalar_lea.vmem %s241, 56
      %v4057 = vld [vmem:[%s4056] sm:$0xff]
      %v4059 = vsel %vm362, %v4008, 0
      %v4062 = vsel %vm362, %v4009, 0
      %v4065 = vsel %vm362, %v4010, 0
      %v4068 = vsel %vm362, %v4011, 0
      %v4071 = vsel %vm362, %v4012, 0
      %v4074 = vsel %vm362, %v4013, 0
      %v4077 = vsel %vm362, %v4014, 0
      %v4080 = vsel %vm362, %v4015, 0
      %v4083 = vsel %vm362, %v4016, 0
      %v4086 = vsel %vm362, %v4017, 0
      %v4089 = vsel %vm362, %v4018, 0
      %v4092 = vsel %vm362, %v4019, 0
      %v4095 = vsel %vm362, %v4020, 0
      %v4098 = vsel %vm362, %v4021, 0
      %v4101 = vsel %vm362, %v4022, 0
      %v4104 = vsel %vm362, %v4023, 0
      %v4107 = vsel %vm362, %v4024, 0
      %v4110 = vsel %vm362, %v4025, 0
      %v4113 = vsel %vm362, %v4026, 0
      %v4116 = vsel %vm362, %v4027, 0
      %v4119 = vsel %vm362, %v4028, 0
      %v4122 = vsel %vm362, %v4029, 0
      %v4125 = vsel %vm362, %v4030, 0
      %v4128 = vsel %vm362, %v4031, 0
      %v4131 = vsel %vm362, %v4032, 0
      %v4134 = vsel %vm362, %v4033, 0
      %v4137 = vsel %vm362, %v4034, 0
      %v4140 = vsel %vm362, %v4035, 0
      %v4143 = vsel %vm362, %v4036, 0
      %v4146 = vsel %vm362, %v4037, 0
      %v4149 = vsel %vm362, %v4038, 0
      %v4152 = vsel %vm362, %v4039, 0
      %v4155 = vsel %vm362, %v4040, 0
      %v4158 = vsel %vm362, %v4041, 0
      %v4161 = vsel %vm362, %v4042, 0
      %v4164 = vsel %vm362, %v4043, 0
      %v4167 = vsel %vm362, %v4044, 0
      %v4170 = vsel %vm362, %v4045, 0
      %v4173 = vsel %vm362, %v4046, 0
      %v4176 = vsel %vm362, %v4047, 0
      %v4179 = vsel %vm362, %v4048, 0
      %v4182 = vsel %vm362, %v4049, 0
      %v4185 = vsel %vm362, %v4050, 0
      %v4188 = vsel %vm362, %v4051, 0
      %v4191 = vsel %vm362, %v4052, 0
      %v4194 = vsel %vm362, %v4053, 0
      %v4197 = vsel %vm362, %v4054, 0
      %v4200 = vsel %vm362, %v4055, 0
      %4202 = vmatprep.subr.mxu0 0.0
      %4203 = vmatpush1.msra.mxu0 0.0
      %4204 = vmatprep.subr.mxu0 0.0
      %4205 = vmatpush1.msra.mxu0 0.0
      %4206 = vmatprep.subr.mxu0 0.0
      %4207 = vmatpush1.msra.mxu0 0.0
      %4208 = vmatprep.subr.mxu0 0.0
      %4209 = vmatpush1.msra.mxu0 0.0
      %4210 = vmatprep.subr.mxu0 0.0
      %4211 = vmatpush1.msra.mxu0 0.0
      %4212 = vmatprep.subr.mxu0 0.0
      %4213 = vmatpush1.msra.mxu0 0.0
      %4214 = vmatprep.subr.mxu0 0.0
      %4215 = vmatpush1.msra.mxu0 0.0
      %4216 = vmatprep.subr.mxu0 0.0
      %4217 = vmatpush1.msra.mxu0 0.0
      %4218 = vmatprep.subr.mxu0 0.0
      %4219 = vmatpush1.msra.mxu0 0.0
      %4220 = vmatprep.subr.mxu0 0.0
      %4221 = vmatpush1.msra.mxu0 0.0
      %4222 = vmatprep.subr.mxu0 0.0
      %4223 = vmatpush1.msra.mxu0 0.0
      %4224 = vmatprep.subr.mxu0 0.0
      %4225 = vmatpush1.msra.mxu0 0.0
      %4226 = vmatprep.subr.mxu0 0.0
      %4227 = vmatpush1.msra.mxu0 0.0
      %4228 = vmatprep.subr.mxu0 0.0
      %4229 = vmatpush1.msra.mxu0 0.0
      %4230 = vmatprep.subr.mxu0 0.0
      %4231 = vmatpush1.msra.mxu0 0.0
      %4232 = vmatprep.subr.mxu0 0.0
      %4233 = vmatpush1.msra.mxu0 %v4057
      %4234 = vmatprep.subr.mxu0 0.0
      %4235 = vmatpush2.msra.mxu0 0.0
      %4236 = vmatprep.subr.mxu0 0.0
      %4237 = vmatpush2.msra.mxu0 0.0
      %4238 = vmatprep.subr.mxu0 0.0
      %4239 = vmatpush2.msra.mxu0 0.0
      %4240 = vmatprep.subr.mxu0 0.0
      %4241 = vmatpush2.msra.mxu0 0.0
      %4242 = vmatprep.subr.mxu0 0.0
      %4243 = vmatpush2.msra.mxu0 0.0
      %4244 = vmatprep.subr.mxu0 0.0
      %4245 = vmatpush2.msra.mxu0 0.0
      %4246 = vmatprep.subr.mxu0 0.0
      %4247 = vmatpush2.msra.mxu0 0.0
      %4248 = vmatprep.subr.mxu0 0.0
      %4249 = vmatpush2.msra.mxu0 0.0
      %4250 = vmatprep.subr.mxu0 0.0
      %4251 = vmatpush2.msra.mxu0 0.0
      %4252 = vmatprep.subr.mxu0 0.0
      %4253 = vmatpush2.msra.mxu0 0.0
      %4254 = vmatprep.subr.mxu0 0.0
      %4255 = vmatpush2.msra.mxu0 0.0
      %4256 = vmatprep.subr.mxu0 0.0
      %4257 = vmatpush2.msra.mxu0 0.0
      %4258 = vmatprep.subr.mxu0 0.0
      %4259 = vmatpush2.msra.mxu0 0.0
      %4260 = vmatprep.subr.mxu0 0.0
      %4261 = vmatpush2.msra.mxu0 0.0
      %4262 = vmatprep.subr.mxu0 0.0
      %4263 = vmatpush2.msra.mxu0 0.0
      %4264 = vmatprep.subr.mxu0 0.0
      %4265 = vmatpush2.msra.mxu0 0.0
      %4266 = vmatprep.mubr.f32.mxu0 0.0
      %4267 = vmatmul.mubr.f32.gmra.mxu0 %v4059
      %v4268 = vpop.f32.mrf.mxu0
      %v4269 = vadd.f32 0.0, %v4268
      %v4270 = vpop.f32.mrf.mxu0
      %4271 = vmatprep.mubr.f32.mxu0 0.0
      %4272 = vmatmul.mubr.f32.gmra.mxu0 %v4062
      %v4273 = vpop.f32.mrf.mxu0
      %v4274 = vadd.f32 0.0, %v4273
      %v4275 = vpop.f32.mrf.mxu0
      %4276 = vmatprep.mubr.f32.mxu0 0.0
      %4277 = vmatmul.mubr.f32.gmra.mxu0 %v4065
      %v4278 = vpop.f32.mrf.mxu0
      %v4279 = vadd.f32 0.0, %v4278
      %v4280 = vpop.f32.mrf.mxu0
      %4281 = vmatprep.mubr.f32.mxu0 0.0
      %4282 = vmatmul.mubr.f32.gmra.mxu0 %v4068
      %v4283 = vpop.f32.mrf.mxu0
      %v4284 = vadd.f32 0.0, %v4283
      %v4285 = vpop.f32.mrf.mxu0
      %4286 = vmatprep.mubr.f32.mxu0 0.0
      %4287 = vmatmul.mubr.f32.gmra.mxu0 %v4071
      %v4288 = vpop.f32.mrf.mxu0
      %v4289 = vadd.f32 0.0, %v4288
      %v4290 = vpop.f32.mrf.mxu0
      %4291 = vmatprep.mubr.f32.mxu0 0.0
      %4292 = vmatmul.mubr.f32.gmra.mxu0 %v4074
      %v4293 = vpop.f32.mrf.mxu0
      %v4294 = vadd.f32 0.0, %v4293
      %v4295 = vpop.f32.mrf.mxu0
      %4296 = vmatprep.mubr.f32.mxu0 0.0
      %4297 = vmatmul.mubr.f32.gmra.mxu0 %v4077
      %v4298 = vpop.f32.mrf.mxu0
      %v4299 = vadd.f32 0.0, %v4298
      %v4300 = vpop.f32.mrf.mxu0
      %4301 = vmatprep.mubr.f32.mxu0 0.0
      %4302 = vmatmul.mubr.f32.gmra.mxu0 %v4080
      %v4303 = vpop.f32.mrf.mxu0
      %v4304 = vadd.f32 0.0, %v4303
      %v4305 = vpop.f32.mrf.mxu0
      %4306 = vmatprep.mubr.f32.mxu0 0.0
      %4307 = vmatmul.mubr.f32.gmra.mxu0 %v4083
      %v4308 = vpop.f32.mrf.mxu0
      %v4309 = vadd.f32 0.0, %v4308
      %v4310 = vpop.f32.mrf.mxu0
      %4311 = vmatprep.mubr.f32.mxu0 0.0
      %4312 = vmatmul.mubr.f32.gmra.mxu0 %v4086
      %v4313 = vpop.f32.mrf.mxu0
      %v4314 = vadd.f32 0.0, %v4313
      %v4315 = vpop.f32.mrf.mxu0
      %4316 = vmatprep.mubr.f32.mxu0 0.0
      %4317 = vmatmul.mubr.f32.gmra.mxu0 %v4089
      %v4318 = vpop.f32.mrf.mxu0
      %v4319 = vadd.f32 0.0, %v4318
      %v4320 = vpop.f32.mrf.mxu0
      %4321 = vmatprep.mubr.f32.mxu0 0.0
      %4322 = vmatmul.mubr.f32.gmra.mxu0 %v4092
      %v4323 = vpop.f32.mrf.mxu0
      %v4324 = vadd.f32 0.0, %v4323
      %v4325 = vpop.f32.mrf.mxu0
      %4326 = vmatprep.mubr.f32.mxu0 0.0
      %4327 = vmatmul.mubr.f32.gmra.mxu0 %v4095
      %v4328 = vpop.f32.mrf.mxu0
      %v4329 = vadd.f32 0.0, %v4328
      %v4330 = vpop.f32.mrf.mxu0
      %4331 = vmatprep.mubr.f32.mxu0 0.0
      %4332 = vmatmul.mubr.f32.gmra.mxu0 %v4098
      %v4333 = vpop.f32.mrf.mxu0
      %v4334 = vadd.f32 0.0, %v4333
      %v4335 = vpop.f32.mrf.mxu0
      %4336 = vmatprep.mubr.f32.mxu0 0.0
      %4337 = vmatmul.mubr.f32.gmra.mxu0 %v4101
      %v4338 = vpop.f32.mrf.mxu0
      %v4339 = vadd.f32 0.0, %v4338
      %v4340 = vpop.f32.mrf.mxu0
      %4341 = vmatprep.mubr.f32.mxu0 0.0
      %4342 = vmatmul.mubr.f32.gmra.mxu0 %v4104
      %v4343 = vpop.f32.mrf.mxu0
      %v4344 = vadd.f32 0.0, %v4343
      %v4345 = vpop.f32.mrf.mxu0
      %4346 = vmatprep.mubr.f32.mxu0 0.0
      %4347 = vmatmul.mubr.f32.gmra.mxu0 %v4107
      %v4348 = vpop.f32.mrf.mxu0
      %v4349 = vadd.f32 0.0, %v4348
      %v4350 = vpop.f32.mrf.mxu0
      %4351 = vmatprep.mubr.f32.mxu0 0.0
      %4352 = vmatmul.mubr.f32.gmra.mxu0 %v4110
      %v4353 = vpop.f32.mrf.mxu0
      %v4354 = vadd.f32 0.0, %v4353
      %v4355 = vpop.f32.mrf.mxu0
      %4356 = vmatprep.mubr.f32.mxu0 0.0
      %4357 = vmatmul.mubr.f32.gmra.mxu0 %v4113
      %v4358 = vpop.f32.mrf.mxu0
      %v4359 = vadd.f32 0.0, %v4358
      %v4360 = vpop.f32.mrf.mxu0
      %4361 = vmatprep.mubr.f32.mxu0 0.0
      %4362 = vmatmul.mubr.f32.gmra.mxu0 %v4116
      %v4363 = vpop.f32.mrf.mxu0
      %v4364 = vadd.f32 0.0, %v4363
      %v4365 = vpop.f32.mrf.mxu0
      %4366 = vmatprep.mubr.f32.mxu0 0.0
      %4367 = vmatmul.mubr.f32.gmra.mxu0 %v4119
      %v4368 = vpop.f32.mrf.mxu0
      %v4369 = vadd.f32 0.0, %v4368
      %v4370 = vpop.f32.mrf.mxu0
      %4371 = vmatprep.mubr.f32.mxu0 0.0
      %4372 = vmatmul.mubr.f32.gmra.mxu0 %v4122
      %v4373 = vpop.f32.mrf.mxu0
      %v4374 = vadd.f32 0.0, %v4373
      %v4375 = vpop.f32.mrf.mxu0
      %4376 = vmatprep.mubr.f32.mxu0 0.0
      %4377 = vmatmul.mubr.f32.gmra.mxu0 %v4125
      %v4378 = vpop.f32.mrf.mxu0
      %v4379 = vadd.f32 0.0, %v4378
      %v4380 = vpop.f32.mrf.mxu0
      %4381 = vmatprep.mubr.f32.mxu0 0.0
      %4382 = vmatmul.mubr.f32.gmra.mxu0 %v4128
      %v4383 = vpop.f32.mrf.mxu0
      %v4384 = vadd.f32 0.0, %v4383
      %v4385 = vpop.f32.mrf.mxu0
      %4386 = vmatprep.mubr.f32.mxu0 0.0
      %4387 = vmatmul.mubr.f32.gmra.mxu0 %v4131
      %v4388 = vpop.f32.mrf.mxu0
      %v4389 = vadd.f32 0.0, %v4388
      %v4390 = vpop.f32.mrf.mxu0
      %4391 = vmatprep.mubr.f32.mxu0 0.0
      %4392 = vmatmul.mubr.f32.gmra.mxu0 %v4134
      %v4393 = vpop.f32.mrf.mxu0
      %v4394 = vadd.f32 0.0, %v4393
      %v4395 = vpop.f32.mrf.mxu0
      %4396 = vmatprep.mubr.f32.mxu0 0.0
      %4397 = vmatmul.mubr.f32.gmra.mxu0 %v4137
      %v4398 = vpop.f32.mrf.mxu0
      %v4399 = vadd.f32 0.0, %v4398
      %v4400 = vpop.f32.mrf.mxu0
      %4401 = vmatprep.mubr.f32.mxu0 0.0
      %4402 = vmatmul.mubr.f32.gmra.mxu0 %v4140
      %v4403 = vpop.f32.mrf.mxu0
      %v4404 = vadd.f32 0.0, %v4403
      %v4405 = vpop.f32.mrf.mxu0
      %4406 = vmatprep.mubr.f32.mxu0 0.0
      %4407 = vmatmul.mubr.f32.gmra.mxu0 %v4143
      %v4408 = vpop.f32.mrf.mxu0
      %v4409 = vadd.f32 0.0, %v4408
      %v4410 = vpop.f32.mrf.mxu0
      %4411 = vmatprep.mubr.f32.mxu0 0.0
      %4412 = vmatmul.mubr.f32.gmra.mxu0 %v4146
      %v4413 = vpop.f32.mrf.mxu0
      %v4414 = vadd.f32 0.0, %v4413
      %v4415 = vpop.f32.mrf.mxu0
      %4416 = vmatprep.mubr.f32.mxu0 0.0
      %4417 = vmatmul.mubr.f32.gmra.mxu0 %v4149
      %v4418 = vpop.f32.mrf.mxu0
      %v4419 = vadd.f32 0.0, %v4418
      %v4420 = vpop.f32.mrf.mxu0
      %4421 = vmatprep.mubr.f32.mxu0 0.0
      %4422 = vmatmul.mubr.f32.gmra.mxu0 %v4152
      %v4423 = vpop.f32.mrf.mxu0
      %v4424 = vadd.f32 0.0, %v4423
      %v4425 = vpop.f32.mrf.mxu0
      %4426 = vmatprep.mubr.f32.mxu0 0.0
      %4427 = vmatmul.mubr.f32.gmra.mxu0 %v4155
      %v4428 = vpop.f32.mrf.mxu0
      %v4429 = vadd.f32 0.0, %v4428
      %v4430 = vpop.f32.mrf.mxu0
      %4431 = vmatprep.mubr.f32.mxu0 0.0
      %4432 = vmatmul.mubr.f32.gmra.mxu0 %v4158
      %v4433 = vpop.f32.mrf.mxu0
      %v4434 = vadd.f32 0.0, %v4433
      %v4435 = vpop.f32.mrf.mxu0
      %4436 = vmatprep.mubr.f32.mxu0 0.0
      %4437 = vmatmul.mubr.f32.gmra.mxu0 %v4161
      %v4438 = vpop.f32.mrf.mxu0
      %v4439 = vadd.f32 0.0, %v4438
      %v4440 = vpop.f32.mrf.mxu0
      %4441 = vmatprep.mubr.f32.mxu0 0.0
      %4442 = vmatmul.mubr.f32.gmra.mxu0 %v4164
      %v4443 = vpop.f32.mrf.mxu0
      %v4444 = vadd.f32 0.0, %v4443
      %v4445 = vpop.f32.mrf.mxu0
      %4446 = vmatprep.mubr.f32.mxu0 0.0
      %4447 = vmatmul.mubr.f32.gmra.mxu0 %v4167
      %v4448 = vpop.f32.mrf.mxu0
      %v4449 = vadd.f32 0.0, %v4448
      %v4450 = vpop.f32.mrf.mxu0
      %4451 = vmatprep.mubr.f32.mxu0 0.0
      %4452 = vmatmul.mubr.f32.gmra.mxu0 %v4170
      %v4453 = vpop.f32.mrf.mxu0
      %v4454 = vadd.f32 0.0, %v4453
      %v4455 = vpop.f32.mrf.mxu0
      %4456 = vmatprep.mubr.f32.mxu0 0.0
      %4457 = vmatmul.mubr.f32.gmra.mxu0 %v4173
      %v4458 = vpop.f32.mrf.mxu0
      %v4459 = vadd.f32 0.0, %v4458
      %v4460 = vpop.f32.mrf.mxu0
      %4461 = vmatprep.mubr.f32.mxu0 0.0
      %4462 = vmatmul.mubr.f32.gmra.mxu0 %v4176
      %v4463 = vpop.f32.mrf.mxu0
      %v4464 = vadd.f32 0.0, %v4463
      %v4465 = vpop.f32.mrf.mxu0
      %4466 = vmatprep.mubr.f32.mxu0 0.0
      %4467 = vmatmul.mubr.f32.gmra.mxu0 %v4179
      %v4468 = vpop.f32.mrf.mxu0
      %v4469 = vadd.f32 0.0, %v4468
      %v4470 = vpop.f32.mrf.mxu0
      %4471 = vmatprep.mubr.f32.mxu0 0.0
      %4472 = vmatmul.mubr.f32.gmra.mxu0 %v4182
      %v4473 = vpop.f32.mrf.mxu0
      %v4474 = vadd.f32 0.0, %v4473
      %v4475 = vpop.f32.mrf.mxu0
      %4476 = vmatprep.mubr.f32.mxu0 0.0
      %4477 = vmatmul.mubr.f32.gmra.mxu0 %v4185
      %v4478 = vpop.f32.mrf.mxu0
      %v4479 = vadd.f32 0.0, %v4478
      %v4480 = vpop.f32.mrf.mxu0
      %4481 = vmatprep.mubr.f32.mxu0 0.0
      %4482 = vmatmul.mubr.f32.gmra.mxu0 %v4188
      %v4483 = vpop.f32.mrf.mxu0
      %v4484 = vadd.f32 0.0, %v4483
      %v4485 = vpop.f32.mrf.mxu0
      %4486 = vmatprep.mubr.f32.mxu0 0.0
      %4487 = vmatmul.mubr.f32.gmra.mxu0 %v4191
      %v4488 = vpop.f32.mrf.mxu0
      %v4489 = vadd.f32 0.0, %v4488
      %v4490 = vpop.f32.mrf.mxu0
      %4491 = vmatprep.mubr.f32.mxu0 0.0
      %4492 = vmatmul.mubr.f32.gmra.mxu0 %v4194
      %v4493 = vpop.f32.mrf.mxu0
      %v4494 = vadd.f32 0.0, %v4493
      %v4495 = vpop.f32.mrf.mxu0
      %4496 = vmatprep.mubr.f32.mxu0 0.0
      %4497 = vmatmul.mubr.f32.gmra.mxu0 %v4197
      %v4498 = vpop.f32.mrf.mxu0
      %v4499 = vadd.f32 0.0, %v4498
      %v4500 = vpop.f32.mrf.mxu0
      %4501 = vmatprep.mubr.f32.mxu0 0.0
      %4502 = vmatmul.mubr.f32.gmra.mxu0 %v4200
      %v4503 = vpop.f32.mrf.mxu0
      %v4504 = vadd.f32 0.0, %v4503
      %v4505 = vpop.f32.mrf.mxu0
      %4506 = vdwg.mxu0
      %v4507 = vadd.f32 %v3958, %v4269
      %v4508 = vadd.f32 %v3959, %v4274
      %v4509 = vadd.f32 %v3960, %v4279
      %v4510 = vadd.f32 %v3961, %v4284
      %v4511 = vadd.f32 %v3962, %v4289
      %v4512 = vadd.f32 %v3963, %v4294
      %v4513 = vadd.f32 %v3964, %v4299
      %v4514 = vadd.f32 %v3965, %v4304
      %v4515 = vadd.f32 %v3966, %v4309
      %v4516 = vadd.f32 %v3967, %v4314
      %v4517 = vadd.f32 %v3968, %v4319
      %v4518 = vadd.f32 %v3969, %v4324
      %v4519 = vadd.f32 %v3970, %v4329
      %v4520 = vadd.f32 %v3971, %v4334
      %v4521 = vadd.f32 %v3972, %v4339
      %v4522 = vadd.f32 %v3973, %v4344
      %v4523 = vadd.f32 %v3974, %v4349
      %v4524 = vadd.f32 %v3975, %v4354
      %v4525 = vadd.f32 %v3976, %v4359
      %v4526 = vadd.f32 %v3977, %v4364
      %v4527 = vadd.f32 %v3978, %v4369
      %v4528 = vadd.f32 %v3979, %v4374
      %v4529 = vadd.f32 %v3980, %v4379
      %v4530 = vadd.f32 %v3981, %v4384
      %v4531 = vadd.f32 %v3982, %v4389
      %v4532 = vadd.f32 %v3983, %v4394
      %v4533 = vadd.f32 %v3984, %v4399
      %v4534 = vadd.f32 %v3985, %v4404
      %v4535 = vadd.f32 %v3986, %v4409
      %v4536 = vadd.f32 %v3987, %v4414
      %v4537 = vadd.f32 %v3988, %v4419
      %v4538 = vadd.f32 %v3989, %v4424
      %v4539 = vadd.f32 %v3990, %v4429
      %v4540 = vadd.f32 %v3991, %v4434
      %v4541 = vadd.f32 %v3992, %v4439
      %v4542 = vadd.f32 %v3993, %v4444
      %v4543 = vadd.f32 %v3994, %v4449
      %v4544 = vadd.f32 %v3995, %v4454
      %v4545 = vadd.f32 %v3996, %v4459
      %v4546 = vadd.f32 %v3997, %v4464
      %v4547 = vadd.f32 %v3998, %v4469
      %v4548 = vadd.f32 %v3999, %v4474
      %v4549 = vadd.f32 %v4000, %v4479
      %v4550 = vadd.f32 %v4001, %v4484
      %v4551 = vadd.f32 %v4002, %v4489
      %v4552 = vadd.f32 %v4003, %v4494
      %v4553 = vadd.f32 %v4004, %v4499
      %v4554 = vadd.f32 %v4005, %v4504
      %s4555 = sadd.s32 %s259, 38
      %s4556 = scalar_lea.vmem %s236, %s4555
      %v4557 = vld [vmem:[%s4556] sm:$0xff]
      %v4558 = vld [vmem:[%s4556 + $0x8] sm:$0xff]
      %v4559 = vld [vmem:[%s4556 + $0x10] sm:$0xff]
      %v4560 = vld [vmem:[%s4556 + $0x18] sm:$0xff]
      %v4561 = vld [vmem:[%s4556 + $0x20] sm:$0xff]
      %v4562 = vld [vmem:[%s4556 + $0x28] sm:$0xff]
      %v4563 = vld [vmem:[%s4556 + $0x30] sm:$0xff]
      %v4564 = vld [vmem:[%s4556 + $0x38] sm:$0xff]
      %v4565 = vld [vmem:[%s4556 + $0x40] sm:$0xff]
      %v4566 = vld [vmem:[%s4556 + $0x48] sm:$0xff]
      %v4567 = vld [vmem:[%s4556 + $0x50] sm:$0xff]
      %v4568 = vld [vmem:[%s4556 + $0x58] sm:$0xff]
      %v4569 = vld [vmem:[%s4556 + $0x60] sm:$0xff]
      %v4570 = vld [vmem:[%s4556 + $0x68] sm:$0xff]
      %v4571 = vld [vmem:[%s4556 + $0x70] sm:$0xff]
      %v4572 = vld [vmem:[%s4556 + $0x78] sm:$0xff]
      %v4573 = vld [vmem:[%s4556 + $0x80] sm:$0xff]
      %v4574 = vld [vmem:[%s4556 + $0x88] sm:$0xff]
      %v4575 = vld [vmem:[%s4556 + $0x90] sm:$0xff]
      %v4576 = vld [vmem:[%s4556 + $0x98] sm:$0xff]
      %v4577 = vld [vmem:[%s4556 + $0xa0] sm:$0xff]
      %v4578 = vld [vmem:[%s4556 + $0xa8] sm:$0xff]
      %v4579 = vld [vmem:[%s4556 + $0xb0] sm:$0xff]
      %v4580 = vld [vmem:[%s4556 + $0xb8] sm:$0xff]
      %v4581 = vld [vmem:[%s4556 + $0xc0] sm:$0xff]
      %v4582 = vld [vmem:[%s4556 + $0xc8] sm:$0xff]
      %v4583 = vld [vmem:[%s4556 + $0xd0] sm:$0xff]
      %v4584 = vld [vmem:[%s4556 + $0xd8] sm:$0xff]
      %v4585 = vld [vmem:[%s4556 + $0xe0] sm:$0xff]
      %v4586 = vld [vmem:[%s4556 + $0xe8] sm:$0xff]
      %v4587 = vld [vmem:[%s4556 + $0xf0] sm:$0xff]
      %v4588 = vld [vmem:[%s4556 + $0xf8] sm:$0xff]
      %v4589 = vld [vmem:[%s4556 + $0x100] sm:$0xff]
      %v4590 = vld [vmem:[%s4556 + $0x108] sm:$0xff]
      %v4591 = vld [vmem:[%s4556 + $0x110] sm:$0xff]
      %v4592 = vld [vmem:[%s4556 + $0x118] sm:$0xff]
      %v4593 = vld [vmem:[%s4556 + $0x120] sm:$0xff]
      %v4594 = vld [vmem:[%s4556 + $0x128] sm:$0xff]
      %v4595 = vld [vmem:[%s4556 + $0x130] sm:$0xff]
      %v4596 = vld [vmem:[%s4556 + $0x138] sm:$0xff]
      %v4597 = vld [vmem:[%s4556 + $0x140] sm:$0xff]
      %v4598 = vld [vmem:[%s4556 + $0x148] sm:$0xff]
      %v4599 = vld [vmem:[%s4556 + $0x150] sm:$0xff]
      %v4600 = vld [vmem:[%s4556 + $0x158] sm:$0xff]
      %v4601 = vld [vmem:[%s4556 + $0x160] sm:$0xff]
      %v4602 = vld [vmem:[%s4556 + $0x168] sm:$0xff]
      %v4603 = vld [vmem:[%s4556 + $0x170] sm:$0xff]
      %v4604 = vld [vmem:[%s4556 + $0x178] sm:$0xff]
      %s4605 = scalar_lea.vmem %s241, 64
      %v4606 = vld [vmem:[%s4605] sm:$0xff]
      %v4608 = vsel %vm362, %v4557, 0
      %v4611 = vsel %vm362, %v4558, 0
      %v4614 = vsel %vm362, %v4559, 0
      %v4617 = vsel %vm362, %v4560, 0
      %v4620 = vsel %vm362, %v4561, 0
      %v4623 = vsel %vm362, %v4562, 0
      %v4626 = vsel %vm362, %v4563, 0
      %v4629 = vsel %vm362, %v4564, 0
      %v4632 = vsel %vm362, %v4565, 0
      %v4635 = vsel %vm362, %v4566, 0
      %v4638 = vsel %vm362, %v4567, 0
      %v4641 = vsel %vm362, %v4568, 0
      %v4644 = vsel %vm362, %v4569, 0
      %v4647 = vsel %vm362, %v4570, 0
      %v4650 = vsel %vm362, %v4571, 0
      %v4653 = vsel %vm362, %v4572, 0
      %v4656 = vsel %vm362, %v4573, 0
      %v4659 = vsel %vm362, %v4574, 0
      %v4662 = vsel %vm362, %v4575, 0
      %v4665 = vsel %vm362, %v4576, 0
      %v4668 = vsel %vm362, %v4577, 0
      %v4671 = vsel %vm362, %v4578, 0
      %v4674 = vsel %vm362, %v4579, 0
      %v4677 = vsel %vm362, %v4580, 0
      %v4680 = vsel %vm362, %v4581, 0
      %v4683 = vsel %vm362, %v4582, 0
      %v4686 = vsel %vm362, %v4583, 0
      %v4689 = vsel %vm362, %v4584, 0
      %v4692 = vsel %vm362, %v4585, 0
      %v4695 = vsel %vm362, %v4586, 0
      %v4698 = vsel %vm362, %v4587, 0
      %v4701 = vsel %vm362, %v4588, 0
      %v4704 = vsel %vm362, %v4589, 0
      %v4707 = vsel %vm362, %v4590, 0
      %v4710 = vsel %vm362, %v4591, 0
      %v4713 = vsel %vm362, %v4592, 0
      %v4716 = vsel %vm362, %v4593, 0
      %v4719 = vsel %vm362, %v4594, 0
      %v4722 = vsel %vm362, %v4595, 0
      %v4725 = vsel %vm362, %v4596, 0
      %v4728 = vsel %vm362, %v4597, 0
      %v4731 = vsel %vm362, %v4598, 0
      %v4734 = vsel %vm362, %v4599, 0
      %v4737 = vsel %vm362, %v4600, 0
      %v4740 = vsel %vm362, %v4601, 0
      %v4743 = vsel %vm362, %v4602, 0
      %v4746 = vsel %vm362, %v4603, 0
      %v4749 = vsel %vm362, %v4604, 0
      %4751 = vmatprep.subr.mxu0 0.0
      %4752 = vmatpush1.msra.mxu0 0.0
      %4753 = vmatprep.subr.mxu0 0.0
      %4754 = vmatpush1.msra.mxu0 0.0
      %4755 = vmatprep.subr.mxu0 0.0
      %4756 = vmatpush1.msra.mxu0 0.0
      %4757 = vmatprep.subr.mxu0 0.0
      %4758 = vmatpush1.msra.mxu0 0.0
      %4759 = vmatprep.subr.mxu0 0.0
      %4760 = vmatpush1.msra.mxu0 0.0
      %4761 = vmatprep.subr.mxu0 0.0
      %4762 = vmatpush1.msra.mxu0 0.0
      %4763 = vmatprep.subr.mxu0 0.0
      %4764 = vmatpush1.msra.mxu0 0.0
      %4765 = vmatprep.subr.mxu0 0.0
      %4766 = vmatpush1.msra.mxu0 0.0
      %4767 = vmatprep.subr.mxu0 0.0
      %4768 = vmatpush1.msra.mxu0 0.0
      %4769 = vmatprep.subr.mxu0 0.0
      %4770 = vmatpush1.msra.mxu0 0.0
      %4771 = vmatprep.subr.mxu0 0.0
      %4772 = vmatpush1.msra.mxu0 0.0
      %4773 = vmatprep.subr.mxu0 0.0
      %4774 = vmatpush1.msra.mxu0 0.0
      %4775 = vmatprep.subr.mxu0 0.0
      %4776 = vmatpush1.msra.mxu0 0.0
      %4777 = vmatprep.subr.mxu0 0.0
      %4778 = vmatpush1.msra.mxu0 0.0
      %4779 = vmatprep.subr.mxu0 0.0
      %4780 = vmatpush1.msra.mxu0 0.0
      %4781 = vmatprep.subr.mxu0 0.0
      %4782 = vmatpush1.msra.mxu0 %v4606
      %4783 = vmatprep.subr.mxu0 0.0
      %4784 = vmatpush2.msra.mxu0 0.0
      %4785 = vmatprep.subr.mxu0 0.0
      %4786 = vmatpush2.msra.mxu0 0.0
      %4787 = vmatprep.subr.mxu0 0.0
      %4788 = vmatpush2.msra.mxu0 0.0
      %4789 = vmatprep.subr.mxu0 0.0
      %4790 = vmatpush2.msra.mxu0 0.0
      %4791 = vmatprep.subr.mxu0 0.0
      %4792 = vmatpush2.msra.mxu0 0.0
      %4793 = vmatprep.subr.mxu0 0.0
      %4794 = vmatpush2.msra.mxu0 0.0
      %4795 = vmatprep.subr.mxu0 0.0
      %4796 = vmatpush2.msra.mxu0 0.0
      %4797 = vmatprep.subr.mxu0 0.0
      %4798 = vmatpush2.msra.mxu0 0.0
      %4799 = vmatprep.subr.mxu0 0.0
      %4800 = vmatpush2.msra.mxu0 0.0
      %4801 = vmatprep.subr.mxu0 0.0
      %4802 = vmatpush2.msra.mxu0 0.0
      %4803 = vmatprep.subr.mxu0 0.0
      %4804 = vmatpush2.msra.mxu0 0.0
      %4805 = vmatprep.subr.mxu0 0.0
      %4806 = vmatpush2.msra.mxu0 0.0
      %4807 = vmatprep.subr.mxu0 0.0
      %4808 = vmatpush2.msra.mxu0 0.0
      %4809 = vmatprep.subr.mxu0 0.0
      %4810 = vmatpush2.msra.mxu0 0.0
      %4811 = vmatprep.subr.mxu0 0.0
      %4812 = vmatpush2.msra.mxu0 0.0
      %4813 = vmatprep.subr.mxu0 0.0
      %4814 = vmatpush2.msra.mxu0 0.0
      %4815 = vmatprep.mubr.f32.mxu0 0.0
      %4816 = vmatmul.mubr.f32.gmra.mxu0 %v4608
      %v4817 = vpop.f32.mrf.mxu0
      %v4818 = vadd.f32 0.0, %v4817
      %v4819 = vpop.f32.mrf.mxu0
      %4820 = vmatprep.mubr.f32.mxu0 0.0
      %4821 = vmatmul.mubr.f32.gmra.mxu0 %v4611
      %v4822 = vpop.f32.mrf.mxu0
      %v4823 = vadd.f32 0.0, %v4822
      %v4824 = vpop.f32.mrf.mxu0
      %4825 = vmatprep.mubr.f32.mxu0 0.0
      %4826 = vmatmul.mubr.f32.gmra.mxu0 %v4614
      %v4827 = vpop.f32.mrf.mxu0
      %v4828 = vadd.f32 0.0, %v4827
      %v4829 = vpop.f32.mrf.mxu0
      %4830 = vmatprep.mubr.f32.mxu0 0.0
      %4831 = vmatmul.mubr.f32.gmra.mxu0 %v4617
      %v4832 = vpop.f32.mrf.mxu0
      %v4833 = vadd.f32 0.0, %v4832
      %v4834 = vpop.f32.mrf.mxu0
      %4835 = vmatprep.mubr.f32.mxu0 0.0
      %4836 = vmatmul.mubr.f32.gmra.mxu0 %v4620
      %v4837 = vpop.f32.mrf.mxu0
      %v4838 = vadd.f32 0.0, %v4837
      %v4839 = vpop.f32.mrf.mxu0
      %4840 = vmatprep.mubr.f32.mxu0 0.0
      %4841 = vmatmul.mubr.f32.gmra.mxu0 %v4623
      %v4842 = vpop.f32.mrf.mxu0
      %v4843 = vadd.f32 0.0, %v4842
      %v4844 = vpop.f32.mrf.mxu0
      %4845 = vmatprep.mubr.f32.mxu0 0.0
      %4846 = vmatmul.mubr.f32.gmra.mxu0 %v4626
      %v4847 = vpop.f32.mrf.mxu0
      %v4848 = vadd.f32 0.0, %v4847
      %v4849 = vpop.f32.mrf.mxu0
      %4850 = vmatprep.mubr.f32.mxu0 0.0
      %4851 = vmatmul.mubr.f32.gmra.mxu0 %v4629
      %v4852 = vpop.f32.mrf.mxu0
      %v4853 = vadd.f32 0.0, %v4852
      %v4854 = vpop.f32.mrf.mxu0
      %4855 = vmatprep.mubr.f32.mxu0 0.0
      %4856 = vmatmul.mubr.f32.gmra.mxu0 %v4632
      %v4857 = vpop.f32.mrf.mxu0
      %v4858 = vadd.f32 0.0, %v4857
      %v4859 = vpop.f32.mrf.mxu0
      %4860 = vmatprep.mubr.f32.mxu0 0.0
      %4861 = vmatmul.mubr.f32.gmra.mxu0 %v4635
      %v4862 = vpop.f32.mrf.mxu0
      %v4863 = vadd.f32 0.0, %v4862
      %v4864 = vpop.f32.mrf.mxu0
      %4865 = vmatprep.mubr.f32.mxu0 0.0
      %4866 = vmatmul.mubr.f32.gmra.mxu0 %v4638
      %v4867 = vpop.f32.mrf.mxu0
      %v4868 = vadd.f32 0.0, %v4867
      %v4869 = vpop.f32.mrf.mxu0
      %4870 = vmatprep.mubr.f32.mxu0 0.0
      %4871 = vmatmul.mubr.f32.gmra.mxu0 %v4641
      %v4872 = vpop.f32.mrf.mxu0
      %v4873 = vadd.f32 0.0, %v4872
      %v4874 = vpop.f32.mrf.mxu0
      %4875 = vmatprep.mubr.f32.mxu0 0.0
      %4876 = vmatmul.mubr.f32.gmra.mxu0 %v4644
      %v4877 = vpop.f32.mrf.mxu0
      %v4878 = vadd.f32 0.0, %v4877
      %v4879 = vpop.f32.mrf.mxu0
      %4880 = vmatprep.mubr.f32.mxu0 0.0
      %4881 = vmatmul.mubr.f32.gmra.mxu0 %v4647
      %v4882 = vpop.f32.mrf.mxu0
      %v4883 = vadd.f32 0.0, %v4882
      %v4884 = vpop.f32.mrf.mxu0
      %4885 = vmatprep.mubr.f32.mxu0 0.0
      %4886 = vmatmul.mubr.f32.gmra.mxu0 %v4650
      %v4887 = vpop.f32.mrf.mxu0
      %v4888 = vadd.f32 0.0, %v4887
      %v4889 = vpop.f32.mrf.mxu0
      %4890 = vmatprep.mubr.f32.mxu0 0.0
      %4891 = vmatmul.mubr.f32.gmra.mxu0 %v4653
      %v4892 = vpop.f32.mrf.mxu0
      %v4893 = vadd.f32 0.0, %v4892
      %v4894 = vpop.f32.mrf.mxu0
      %4895 = vmatprep.mubr.f32.mxu0 0.0
      %4896 = vmatmul.mubr.f32.gmra.mxu0 %v4656
      %v4897 = vpop.f32.mrf.mxu0
      %v4898 = vadd.f32 0.0, %v4897
      %v4899 = vpop.f32.mrf.mxu0
      %4900 = vmatprep.mubr.f32.mxu0 0.0
      %4901 = vmatmul.mubr.f32.gmra.mxu0 %v4659
      %v4902 = vpop.f32.mrf.mxu0
      %v4903 = vadd.f32 0.0, %v4902
      %v4904 = vpop.f32.mrf.mxu0
      %4905 = vmatprep.mubr.f32.mxu0 0.0
      %4906 = vmatmul.mubr.f32.gmra.mxu0 %v4662
      %v4907 = vpop.f32.mrf.mxu0
      %v4908 = vadd.f32 0.0, %v4907
      %v4909 = vpop.f32.mrf.mxu0
      %4910 = vmatprep.mubr.f32.mxu0 0.0
      %4911 = vmatmul.mubr.f32.gmra.mxu0 %v4665
      %v4912 = vpop.f32.mrf.mxu0
      %v4913 = vadd.f32 0.0, %v4912
      %v4914 = vpop.f32.mrf.mxu0
      %4915 = vmatprep.mubr.f32.mxu0 0.0
      %4916 = vmatmul.mubr.f32.gmra.mxu0 %v4668
      %v4917 = vpop.f32.mrf.mxu0
      %v4918 = vadd.f32 0.0, %v4917
      %v4919 = vpop.f32.mrf.mxu0
      %4920 = vmatprep.mubr.f32.mxu0 0.0
      %4921 = vmatmul.mubr.f32.gmra.mxu0 %v4671
      %v4922 = vpop.f32.mrf.mxu0
      %v4923 = vadd.f32 0.0, %v4922
      %v4924 = vpop.f32.mrf.mxu0
      %4925 = vmatprep.mubr.f32.mxu0 0.0
      %4926 = vmatmul.mubr.f32.gmra.mxu0 %v4674
      %v4927 = vpop.f32.mrf.mxu0
      %v4928 = vadd.f32 0.0, %v4927
      %v4929 = vpop.f32.mrf.mxu0
      %4930 = vmatprep.mubr.f32.mxu0 0.0
      %4931 = vmatmul.mubr.f32.gmra.mxu0 %v4677
      %v4932 = vpop.f32.mrf.mxu0
      %v4933 = vadd.f32 0.0, %v4932
      %v4934 = vpop.f32.mrf.mxu0
      %4935 = vmatprep.mubr.f32.mxu0 0.0
      %4936 = vmatmul.mubr.f32.gmra.mxu0 %v4680
      %v4937 = vpop.f32.mrf.mxu0
      %v4938 = vadd.f32 0.0, %v4937
      %v4939 = vpop.f32.mrf.mxu0
      %4940 = vmatprep.mubr.f32.mxu0 0.0
      %4941 = vmatmul.mubr.f32.gmra.mxu0 %v4683
      %v4942 = vpop.f32.mrf.mxu0
      %v4943 = vadd.f32 0.0, %v4942
      %v4944 = vpop.f32.mrf.mxu0
      %4945 = vmatprep.mubr.f32.mxu0 0.0
      %4946 = vmatmul.mubr.f32.gmra.mxu0 %v4686
      %v4947 = vpop.f32.mrf.mxu0
      %v4948 = vadd.f32 0.0, %v4947
      %v4949 = vpop.f32.mrf.mxu0
      %4950 = vmatprep.mubr.f32.mxu0 0.0
      %4951 = vmatmul.mubr.f32.gmra.mxu0 %v4689
      %v4952 = vpop.f32.mrf.mxu0
      %v4953 = vadd.f32 0.0, %v4952
      %v4954 = vpop.f32.mrf.mxu0
      %4955 = vmatprep.mubr.f32.mxu0 0.0
      %4956 = vmatmul.mubr.f32.gmra.mxu0 %v4692
      %v4957 = vpop.f32.mrf.mxu0
      %v4958 = vadd.f32 0.0, %v4957
      %v4959 = vpop.f32.mrf.mxu0
      %4960 = vmatprep.mubr.f32.mxu0 0.0
      %4961 = vmatmul.mubr.f32.gmra.mxu0 %v4695
      %v4962 = vpop.f32.mrf.mxu0
      %v4963 = vadd.f32 0.0, %v4962
      %v4964 = vpop.f32.mrf.mxu0
      %4965 = vmatprep.mubr.f32.mxu0 0.0
      %4966 = vmatmul.mubr.f32.gmra.mxu0 %v4698
      %v4967 = vpop.f32.mrf.mxu0
      %v4968 = vadd.f32 0.0, %v4967
      %v4969 = vpop.f32.mrf.mxu0
      %4970 = vmatprep.mubr.f32.mxu0 0.0
      %4971 = vmatmul.mubr.f32.gmra.mxu0 %v4701
      %v4972 = vpop.f32.mrf.mxu0
      %v4973 = vadd.f32 0.0, %v4972
      %v4974 = vpop.f32.mrf.mxu0
      %4975 = vmatprep.mubr.f32.mxu0 0.0
      %4976 = vmatmul.mubr.f32.gmra.mxu0 %v4704
      %v4977 = vpop.f32.mrf.mxu0
      %v4978 = vadd.f32 0.0, %v4977
      %v4979 = vpop.f32.mrf.mxu0
      %4980 = vmatprep.mubr.f32.mxu0 0.0
      %4981 = vmatmul.mubr.f32.gmra.mxu0 %v4707
      %v4982 = vpop.f32.mrf.mxu0
      %v4983 = vadd.f32 0.0, %v4982
      %v4984 = vpop.f32.mrf.mxu0
      %4985 = vmatprep.mubr.f32.mxu0 0.0
      %4986 = vmatmul.mubr.f32.gmra.mxu0 %v4710
      %v4987 = vpop.f32.mrf.mxu0
      %v4988 = vadd.f32 0.0, %v4987
      %v4989 = vpop.f32.mrf.mxu0
      %4990 = vmatprep.mubr.f32.mxu0 0.0
      %4991 = vmatmul.mubr.f32.gmra.mxu0 %v4713
      %v4992 = vpop.f32.mrf.mxu0
      %v4993 = vadd.f32 0.0, %v4992
      %v4994 = vpop.f32.mrf.mxu0
      %4995 = vmatprep.mubr.f32.mxu0 0.0
      %4996 = vmatmul.mubr.f32.gmra.mxu0 %v4716
      %v4997 = vpop.f32.mrf.mxu0
      %v4998 = vadd.f32 0.0, %v4997
      %v4999 = vpop.f32.mrf.mxu0
      %5000 = vmatprep.mubr.f32.mxu0 0.0
      %5001 = vmatmul.mubr.f32.gmra.mxu0 %v4719
      %v5002 = vpop.f32.mrf.mxu0
      %v5003 = vadd.f32 0.0, %v5002
      %v5004 = vpop.f32.mrf.mxu0
      %5005 = vmatprep.mubr.f32.mxu0 0.0
      %5006 = vmatmul.mubr.f32.gmra.mxu0 %v4722
      %v5007 = vpop.f32.mrf.mxu0
      %v5008 = vadd.f32 0.0, %v5007
      %v5009 = vpop.f32.mrf.mxu0
      %5010 = vmatprep.mubr.f32.mxu0 0.0
      %5011 = vmatmul.mubr.f32.gmra.mxu0 %v4725
      %v5012 = vpop.f32.mrf.mxu0
      %v5013 = vadd.f32 0.0, %v5012
      %v5014 = vpop.f32.mrf.mxu0
      %5015 = vmatprep.mubr.f32.mxu0 0.0
      %5016 = vmatmul.mubr.f32.gmra.mxu0 %v4728
      %v5017 = vpop.f32.mrf.mxu0
      %v5018 = vadd.f32 0.0, %v5017
      %v5019 = vpop.f32.mrf.mxu0
      %5020 = vmatprep.mubr.f32.mxu0 0.0
      %5021 = vmatmul.mubr.f32.gmra.mxu0 %v4731
      %v5022 = vpop.f32.mrf.mxu0
      %v5023 = vadd.f32 0.0, %v5022
      %v5024 = vpop.f32.mrf.mxu0
      %5025 = vmatprep.mubr.f32.mxu0 0.0
      %5026 = vmatmul.mubr.f32.gmra.mxu0 %v4734
      %v5027 = vpop.f32.mrf.mxu0
      %v5028 = vadd.f32 0.0, %v5027
      %v5029 = vpop.f32.mrf.mxu0
      %5030 = vmatprep.mubr.f32.mxu0 0.0
      %5031 = vmatmul.mubr.f32.gmra.mxu0 %v4737
      %v5032 = vpop.f32.mrf.mxu0
      %v5033 = vadd.f32 0.0, %v5032
      %v5034 = vpop.f32.mrf.mxu0
      %5035 = vmatprep.mubr.f32.mxu0 0.0
      %5036 = vmatmul.mubr.f32.gmra.mxu0 %v4740
      %v5037 = vpop.f32.mrf.mxu0
      %v5038 = vadd.f32 0.0, %v5037
      %v5039 = vpop.f32.mrf.mxu0
      %5040 = vmatprep.mubr.f32.mxu0 0.0
      %5041 = vmatmul.mubr.f32.gmra.mxu0 %v4743
      %v5042 = vpop.f32.mrf.mxu0
      %v5043 = vadd.f32 0.0, %v5042
      %v5044 = vpop.f32.mrf.mxu0
      %5045 = vmatprep.mubr.f32.mxu0 0.0
      %5046 = vmatmul.mubr.f32.gmra.mxu0 %v4746
      %v5047 = vpop.f32.mrf.mxu0
      %v5048 = vadd.f32 0.0, %v5047
      %v5049 = vpop.f32.mrf.mxu0
      %5050 = vmatprep.mubr.f32.mxu0 0.0
      %5051 = vmatmul.mubr.f32.gmra.mxu0 %v4749
      %v5052 = vpop.f32.mrf.mxu0
      %v5053 = vadd.f32 0.0, %v5052
      %v5054 = vpop.f32.mrf.mxu0
      %5055 = vdwg.mxu0
      %v5056 = vadd.f32 %v4507, %v4818
      %v5057 = vadd.f32 %v4508, %v4823
      %v5058 = vadd.f32 %v4509, %v4828
      %v5059 = vadd.f32 %v4510, %v4833
      %v5060 = vadd.f32 %v4511, %v4838
      %v5061 = vadd.f32 %v4512, %v4843
      %v5062 = vadd.f32 %v4513, %v4848
      %v5063 = vadd.f32 %v4514, %v4853
      %v5064 = vadd.f32 %v4515, %v4858
      %v5065 = vadd.f32 %v4516, %v4863
      %v5066 = vadd.f32 %v4517, %v4868
      %v5067 = vadd.f32 %v4518, %v4873
      %v5068 = vadd.f32 %v4519, %v4878
      %v5069 = vadd.f32 %v4520, %v4883
      %v5070 = vadd.f32 %v4521, %v4888
      %v5071 = vadd.f32 %v4522, %v4893
      %v5072 = vadd.f32 %v4523, %v4898
      %v5073 = vadd.f32 %v4524, %v4903
      %v5074 = vadd.f32 %v4525, %v4908
      %v5075 = vadd.f32 %v4526, %v4913
      %v5076 = vadd.f32 %v4527, %v4918
      %v5077 = vadd.f32 %v4528, %v4923
      %v5078 = vadd.f32 %v4529, %v4928
      %v5079 = vadd.f32 %v4530, %v4933
      %v5080 = vadd.f32 %v4531, %v4938
      %v5081 = vadd.f32 %v4532, %v4943
      %v5082 = vadd.f32 %v4533, %v4948
      %v5083 = vadd.f32 %v4534, %v4953
      %v5084 = vadd.f32 %v4535, %v4958
      %v5085 = vadd.f32 %v4536, %v4963
      %v5086 = vadd.f32 %v4537, %v4968
      %v5087 = vadd.f32 %v4538, %v4973
      %v5088 = vadd.f32 %v4539, %v4978
      %v5089 = vadd.f32 %v4540, %v4983
      %v5090 = vadd.f32 %v4541, %v4988
      %v5091 = vadd.f32 %v4542, %v4993
      %v5092 = vadd.f32 %v4543, %v4998
      %v5093 = vadd.f32 %v4544, %v5003
      %v5094 = vadd.f32 %v4545, %v5008
      %v5095 = vadd.f32 %v4546, %v5013
      %v5096 = vadd.f32 %v4547, %v5018
      %v5097 = vadd.f32 %v4548, %v5023
      %v5098 = vadd.f32 %v4549, %v5028
      %v5099 = vadd.f32 %v4550, %v5033
      %v5100 = vadd.f32 %v4551, %v5038
      %v5101 = vadd.f32 %v4552, %v5043
      %v5102 = vadd.f32 %v4553, %v5048
      %v5103 = vadd.f32 %v4554, %v5053
      %v5104 = vld [vmem:[%s244] sm:$0x1]
      %v5106 = vlaneseq
      %v5107 = vshrl.u32 %v5106, 7
      %v5108 = vsub.s32 0, %v5107
      %v5109 = vrot.slane %v5104, %v5108
      %v5111 = vadd.f32 %v5056, %v5109
      %v5112 = vadd.f32 %v5057, %v5109
      %v5113 = vadd.f32 %v5058, %v5109
      %v5114 = vadd.f32 %v5059, %v5109
      %v5115 = vadd.f32 %v5060, %v5109
      %v5116 = vadd.f32 %v5061, %v5109
      %v5117 = vadd.f32 %v5062, %v5109
      %v5118 = vadd.f32 %v5063, %v5109
      %v5119 = vadd.f32 %v5064, %v5109
      %v5120 = vadd.f32 %v5065, %v5109
      %v5121 = vadd.f32 %v5066, %v5109
      %v5122 = vadd.f32 %v5067, %v5109
      %v5123 = vadd.f32 %v5068, %v5109
      %v5124 = vadd.f32 %v5069, %v5109
      %v5125 = vadd.f32 %v5070, %v5109
      %v5126 = vadd.f32 %v5071, %v5109
      %v5127 = vadd.f32 %v5072, %v5109
      %v5128 = vadd.f32 %v5073, %v5109
      %v5129 = vadd.f32 %v5074, %v5109
      %v5130 = vadd.f32 %v5075, %v5109
      %v5131 = vadd.f32 %v5076, %v5109
      %v5132 = vadd.f32 %v5077, %v5109
      %v5133 = vadd.f32 %v5078, %v5109
      %v5134 = vadd.f32 %v5079, %v5109
      %v5135 = vadd.f32 %v5080, %v5109
      %v5136 = vadd.f32 %v5081, %v5109
      %v5137 = vadd.f32 %v5082, %v5109
      %v5138 = vadd.f32 %v5083, %v5109
      %v5139 = vadd.f32 %v5084, %v5109
      %v5140 = vadd.f32 %v5085, %v5109
      %v5141 = vadd.f32 %v5086, %v5109
      %v5142 = vadd.f32 %v5087, %v5109
      %v5143 = vadd.f32 %v5088, %v5109
      %v5144 = vadd.f32 %v5089, %v5109
      %v5145 = vadd.f32 %v5090, %v5109
      %v5146 = vadd.f32 %v5091, %v5109
      %v5147 = vadd.f32 %v5092, %v5109
      %v5148 = vadd.f32 %v5093, %v5109
      %v5149 = vadd.f32 %v5094, %v5109
      %v5150 = vadd.f32 %v5095, %v5109
      %v5151 = vadd.f32 %v5096, %v5109
      %v5152 = vadd.f32 %v5097, %v5109
      %v5153 = vadd.f32 %v5098, %v5109
      %v5154 = vadd.f32 %v5099, %v5109
      %v5155 = vadd.f32 %v5100, %v5109
      %v5156 = vadd.f32 %v5101, %v5109
      %v5157 = vadd.f32 %v5102, %v5109
      %v5158 = vadd.f32 %v5103, %v5109
      %v5159 = vsub.f32 0.0, %v5111
      %v5160 = vsub.f32 0.0, %v5112
      %v5161 = vsub.f32 0.0, %v5113
      %v5162 = vsub.f32 0.0, %v5114
      %v5163 = vsub.f32 0.0, %v5115
      %v5164 = vsub.f32 0.0, %v5116
      %v5165 = vsub.f32 0.0, %v5117
      %v5166 = vsub.f32 0.0, %v5118
      %v5167 = vsub.f32 0.0, %v5119
      %v5168 = vsub.f32 0.0, %v5120
      %v5169 = vsub.f32 0.0, %v5121
      %v5170 = vsub.f32 0.0, %v5122
      %v5171 = vsub.f32 0.0, %v5123
      %v5172 = vsub.f32 0.0, %v5124
      %v5173 = vsub.f32 0.0, %v5125
      %v5174 = vsub.f32 0.0, %v5126
      %v5175 = vsub.f32 0.0, %v5127
      %v5176 = vsub.f32 0.0, %v5128
      %v5177 = vsub.f32 0.0, %v5129
      %v5178 = vsub.f32 0.0, %v5130
      %v5179 = vsub.f32 0.0, %v5131
      %v5180 = vsub.f32 0.0, %v5132
      %v5181 = vsub.f32 0.0, %v5133
      %v5182 = vsub.f32 0.0, %v5134
      %v5183 = vsub.f32 0.0, %v5135
      %v5184 = vsub.f32 0.0, %v5136
      %v5185 = vsub.f32 0.0, %v5137
      %v5186 = vsub.f32 0.0, %v5138
      %v5187 = vsub.f32 0.0, %v5139
      %v5188 = vsub.f32 0.0, %v5140
      %v5189 = vsub.f32 0.0, %v5141
      %v5190 = vsub.f32 0.0, %v5142
      %v5191 = vsub.f32 0.0, %v5143
      %v5192 = vsub.f32 0.0, %v5144
      %v5193 = vsub.f32 0.0, %v5145
      %v5194 = vsub.f32 0.0, %v5146
      %v5195 = vsub.f32 0.0, %v5147
      %v5196 = vsub.f32 0.0, %v5148
      %v5197 = vsub.f32 0.0, %v5149
      %v5198 = vsub.f32 0.0, %v5150
      %v5199 = vsub.f32 0.0, %v5151
      %v5200 = vsub.f32 0.0, %v5152
      %v5201 = vsub.f32 0.0, %v5153
      %v5202 = vsub.f32 0.0, %v5154
      %v5203 = vsub.f32 0.0, %v5155
      %v5204 = vsub.f32 0.0, %v5156
      %v5205 = vsub.f32 0.0, %v5157
      %v5206 = vsub.f32 0.0, %v5158
      %v5207 = vmul.f32 %v5159, 1.442695
      %v5208 = vpow.pop %v5207
      %v5209 = vmul.f32 %v5160, 1.442695
      %v5210 = vpow.pop %v5209
      %v5211 = vmul.f32 %v5161, 1.442695
      %v5212 = vpow.pop %v5211
      %v5213 = vmul.f32 %v5162, 1.442695
      %v5214 = vpow.pop %v5213
      %v5215 = vmul.f32 %v5163, 1.442695
      %v5216 = vpow.pop %v5215
      %v5217 = vmul.f32 %v5164, 1.442695
      %v5218 = vpow.pop %v5217
      %v5219 = vmul.f32 %v5165, 1.442695
      %v5220 = vpow.pop %v5219
      %v5221 = vmul.f32 %v5166, 1.442695
      %v5222 = vpow.pop %v5221
      %v5223 = vmul.f32 %v5167, 1.442695
      %v5224 = vpow.pop %v5223
      %v5225 = vmul.f32 %v5168, 1.442695
      %v5226 = vpow.pop %v5225
      %v5227 = vmul.f32 %v5169, 1.442695
      %v5228 = vpow.pop %v5227
      %v5229 = vmul.f32 %v5170, 1.442695
      %v5230 = vpow.pop %v5229
      %v5231 = vmul.f32 %v5171, 1.442695
      %v5232 = vpow.pop %v5231
      %v5233 = vmul.f32 %v5172, 1.442695
      %v5234 = vpow.pop %v5233
      %v5235 = vmul.f32 %v5173, 1.442695
      %v5236 = vpow.pop %v5235
      %v5237 = vmul.f32 %v5174, 1.442695
      %v5238 = vpow.pop %v5237
      %v5239 = vmul.f32 %v5175, 1.442695
      %v5240 = vpow.pop %v5239
      %v5241 = vmul.f32 %v5176, 1.442695
      %v5242 = vpow.pop %v5241
      %v5243 = vmul.f32 %v5177, 1.442695
      %v5244 = vpow.pop %v5243
      %v5245 = vmul.f32 %v5178, 1.442695
      %v5246 = vpow.pop %v5245
      %v5247 = vmul.f32 %v5179, 1.442695
      %v5248 = vpow.pop %v5247
      %v5249 = vmul.f32 %v5180, 1.442695
      %v5250 = vpow.pop %v5249
      %v5251 = vmul.f32 %v5181, 1.442695
      %v5252 = vpow.pop %v5251
      %v5253 = vmul.f32 %v5182, 1.442695
      %v5254 = vpow.pop %v5253
      %v5255 = vmul.f32 %v5183, 1.442695
      %v5256 = vpow.pop %v5255
      %v5257 = vmul.f32 %v5184, 1.442695
      %v5258 = vpow.pop %v5257
      %v5259 = vmul.f32 %v5185, 1.442695
      %v5260 = vpow.pop %v5259
      %v5261 = vmul.f32 %v5186, 1.442695
      %v5262 = vpow.pop %v5261
      %v5263 = vmul.f32 %v5187, 1.442695
      %v5264 = vpow.pop %v5263
      %v5265 = vmul.f32 %v5188, 1.442695
      %v5266 = vpow.pop %v5265
      %v5267 = vmul.f32 %v5189, 1.442695
      %v5268 = vpow.pop %v5267
      %v5269 = vmul.f32 %v5190, 1.442695
      %v5270 = vpow.pop %v5269
      %v5271 = vmul.f32 %v5191, 1.442695
      %v5272 = vpow.pop %v5271
      %v5273 = vmul.f32 %v5192, 1.442695
      %v5274 = vpow.pop %v5273
      %v5275 = vmul.f32 %v5193, 1.442695
      %v5276 = vpow.pop %v5275
      %v5277 = vmul.f32 %v5194, 1.442695
      %v5278 = vpow.pop %v5277
      %v5279 = vmul.f32 %v5195, 1.442695
      %v5280 = vpow.pop %v5279
      %v5281 = vmul.f32 %v5196, 1.442695
      %v5282 = vpow.pop %v5281
      %v5283 = vmul.f32 %v5197, 1.442695
      %v5284 = vpow.pop %v5283
      %v5285 = vmul.f32 %v5198, 1.442695
      %v5286 = vpow.pop %v5285
      %v5287 = vmul.f32 %v5199, 1.442695
      %v5288 = vpow.pop %v5287
      %v5289 = vmul.f32 %v5200, 1.442695
      %v5290 = vpow.pop %v5289
      %v5291 = vmul.f32 %v5201, 1.442695
      %v5292 = vpow.pop %v5291
      %v5293 = vmul.f32 %v5202, 1.442695
      %v5294 = vpow.pop %v5293
      %v5295 = vmul.f32 %v5203, 1.442695
      %v5296 = vpow.pop %v5295
      %v5297 = vmul.f32 %v5204, 1.442695
      %v5298 = vpow.pop %v5297
      %v5299 = vmul.f32 %v5205, 1.442695
      %v5300 = vpow.pop %v5299
      %v5301 = vmul.f32 %v5206, 1.442695
      %v5302 = vpow.pop %v5301
      %v5303 = vadd.f32 %v5208, 1.0
      %v5304 = vadd.f32 %v5210, 1.0
      %v5305 = vadd.f32 %v5212, 1.0
      %v5306 = vadd.f32 %v5214, 1.0
      %v5307 = vadd.f32 %v5216, 1.0
      %v5308 = vadd.f32 %v5218, 1.0
      %v5309 = vadd.f32 %v5220, 1.0
      %v5310 = vadd.f32 %v5222, 1.0
      %v5311 = vadd.f32 %v5224, 1.0
      %v5312 = vadd.f32 %v5226, 1.0
      %v5313 = vadd.f32 %v5228, 1.0
      %v5314 = vadd.f32 %v5230, 1.0
      %v5315 = vadd.f32 %v5232, 1.0
      %v5316 = vadd.f32 %v5234, 1.0
      %v5317 = vadd.f32 %v5236, 1.0
      %v5318 = vadd.f32 %v5238, 1.0
      %v5319 = vadd.f32 %v5240, 1.0
      %v5320 = vadd.f32 %v5242, 1.0
      %v5321 = vadd.f32 %v5244, 1.0
      %v5322 = vadd.f32 %v5246, 1.0
      %v5323 = vadd.f32 %v5248, 1.0
      %v5324 = vadd.f32 %v5250, 1.0
      %v5325 = vadd.f32 %v5252, 1.0
      %v5326 = vadd.f32 %v5254, 1.0
      %v5327 = vadd.f32 %v5256, 1.0
      %v5328 = vadd.f32 %v5258, 1.0
      %v5329 = vadd.f32 %v5260, 1.0
      %v5330 = vadd.f32 %v5262, 1.0
      %v5331 = vadd.f32 %v5264, 1.0
      %v5332 = vadd.f32 %v5266, 1.0
      %v5333 = vadd.f32 %v5268, 1.0
      %v5334 = vadd.f32 %v5270, 1.0
      %v5335 = vadd.f32 %v5272, 1.0
      %v5336 = vadd.f32 %v5274, 1.0
      %v5337 = vadd.f32 %v5276, 1.0
      %v5338 = vadd.f32 %v5278, 1.0
      %v5339 = vadd.f32 %v5280, 1.0
      %v5340 = vadd.f32 %v5282, 1.0
      %v5341 = vadd.f32 %v5284, 1.0
      %v5342 = vadd.f32 %v5286, 1.0
      %v5343 = vadd.f32 %v5288, 1.0
      %v5344 = vadd.f32 %v5290, 1.0
      %v5345 = vadd.f32 %v5292, 1.0
      %v5346 = vadd.f32 %v5294, 1.0
      %v5347 = vadd.f32 %v5296, 1.0
      %v5348 = vadd.f32 %v5298, 1.0
      %v5349 = vadd.f32 %v5300, 1.0
      %v5350 = vadd.f32 %v5302, 1.0
      %v5351 = vrcp.pop %v5303
      %v5352 = vrcp.pop %v5304
      %v5353 = vrcp.pop %v5305
      %v5354 = vrcp.pop %v5306
      %v5355 = vrcp.pop %v5307
      %v5356 = vrcp.pop %v5308
      %v5357 = vrcp.pop %v5309
      %v5358 = vrcp.pop %v5310
      %v5359 = vrcp.pop %v5311
      %v5360 = vrcp.pop %v5312
      %v5361 = vrcp.pop %v5313
      %v5362 = vrcp.pop %v5314
      %v5363 = vrcp.pop %v5315
      %v5364 = vrcp.pop %v5316
      %v5365 = vrcp.pop %v5317
      %v5366 = vrcp.pop %v5318
      %v5367 = vrcp.pop %v5319
      %v5368 = vrcp.pop %v5320
      %v5369 = vrcp.pop %v5321
      %v5370 = vrcp.pop %v5322
      %v5371 = vrcp.pop %v5323
      %v5372 = vrcp.pop %v5324
      %v5373 = vrcp.pop %v5325
      %v5374 = vrcp.pop %v5326
      %v5375 = vrcp.pop %v5327
      %v5376 = vrcp.pop %v5328
      %v5377 = vrcp.pop %v5329
      %v5378 = vrcp.pop %v5330
      %v5379 = vrcp.pop %v5331
      %v5380 = vrcp.pop %v5332
      %v5381 = vrcp.pop %v5333
      %v5382 = vrcp.pop %v5334
      %v5383 = vrcp.pop %v5335
      %v5384 = vrcp.pop %v5336
      %v5385 = vrcp.pop %v5337
      %v5386 = vrcp.pop %v5338
      %v5387 = vrcp.pop %v5339
      %v5388 = vrcp.pop %v5340
      %v5389 = vrcp.pop %v5341
      %v5390 = vrcp.pop %v5342
      %v5391 = vrcp.pop %v5343
      %v5392 = vrcp.pop %v5344
      %v5393 = vrcp.pop %v5345
      %v5394 = vrcp.pop %v5346
      %v5395 = vrcp.pop %v5347
      %v5396 = vrcp.pop %v5348
      %v5397 = vrcp.pop %v5349
      %v5398 = vrcp.pop %v5350
      %v5399 = vmul.f32 %v5111, %v5351
      %v5400 = vmul.f32 %v5112, %v5352
      %v5401 = vmul.f32 %v5113, %v5353
      %v5402 = vmul.f32 %v5114, %v5354
      %v5403 = vmul.f32 %v5115, %v5355
      %v5404 = vmul.f32 %v5116, %v5356
      %v5405 = vmul.f32 %v5117, %v5357
      %v5406 = vmul.f32 %v5118, %v5358
      %v5407 = vmul.f32 %v5119, %v5359
      %v5408 = vmul.f32 %v5120, %v5360
      %v5409 = vmul.f32 %v5121, %v5361
      %v5410 = vmul.f32 %v5122, %v5362
      %v5411 = vmul.f32 %v5123, %v5363
      %v5412 = vmul.f32 %v5124, %v5364
      %v5413 = vmul.f32 %v5125, %v5365
      %v5414 = vmul.f32 %v5126, %v5366
      %v5415 = vmul.f32 %v5127, %v5367
      %v5416 = vmul.f32 %v5128, %v5368
      %v5417 = vmul.f32 %v5129, %v5369
      %v5418 = vmul.f32 %v5130, %v5370
      %v5419 = vmul.f32 %v5131, %v5371
      %v5420 = vmul.f32 %v5132, %v5372
      %v5421 = vmul.f32 %v5133, %v5373
      %v5422 = vmul.f32 %v5134, %v5374
      %v5423 = vmul.f32 %v5135, %v5375
      %v5424 = vmul.f32 %v5136, %v5376
      %v5425 = vmul.f32 %v5137, %v5377
      %v5426 = vmul.f32 %v5138, %v5378
      %v5427 = vmul.f32 %v5139, %v5379
      %v5428 = vmul.f32 %v5140, %v5380
      %v5429 = vmul.f32 %v5141, %v5381
      %v5430 = vmul.f32 %v5142, %v5382
      %v5431 = vmul.f32 %v5143, %v5383
      %v5432 = vmul.f32 %v5144, %v5384
      %v5433 = vmul.f32 %v5145, %v5385
      %v5434 = vmul.f32 %v5146, %v5386
      %v5435 = vmul.f32 %v5147, %v5387
      %v5436 = vmul.f32 %v5148, %v5388
      %v5437 = vmul.f32 %v5149, %v5389
      %v5438 = vmul.f32 %v5150, %v5390
      %v5439 = vmul.f32 %v5151, %v5391
      %v5440 = vmul.f32 %v5152, %v5392
      %v5441 = vmul.f32 %v5153, %v5393
      %v5442 = vmul.f32 %v5154, %v5394
      %v5443 = vmul.f32 %v5155, %v5395
      %v5444 = vmul.f32 %v5156, %v5396
      %v5445 = vmul.f32 %v5157, %v5397
      %v5446 = vmul.f32 %v5158, %v5398
      %5447 = vst.msk [vmem:[%s257] sm:$0xff] %vm362, %v5399
      %5448 = vst.msk [vmem:[%s257 + $0x8] sm:$0xff] %vm362, %v5400
      %5449 = vst.msk [vmem:[%s257 + $0x10] sm:$0xff] %vm362, %v5401
      %5450 = vst.msk [vmem:[%s257 + $0x18] sm:$0xff] %vm362, %v5402
      %5451 = vst.msk [vmem:[%s257 + $0x20] sm:$0xff] %vm362, %v5403
      %5452 = vst.msk [vmem:[%s257 + $0x28] sm:$0xff] %vm362, %v5404
      %5453 = vst.msk [vmem:[%s257 + $0x30] sm:$0xff] %vm362, %v5405
      %5454 = vst.msk [vmem:[%s257 + $0x38] sm:$0xff] %vm362, %v5406
      %5455 = vst.msk [vmem:[%s257 + $0x40] sm:$0xff] %vm362, %v5407
      %5456 = vst.msk [vmem:[%s257 + $0x48] sm:$0xff] %vm362, %v5408
      %5457 = vst.msk [vmem:[%s257 + $0x50] sm:$0xff] %vm362, %v5409
      %5458 = vst.msk [vmem:[%s257 + $0x58] sm:$0xff] %vm362, %v5410
      %5459 = vst.msk [vmem:[%s257 + $0x60] sm:$0xff] %vm362, %v5411
      %5460 = vst.msk [vmem:[%s257 + $0x68] sm:$0xff] %vm362, %v5412
      %5461 = vst.msk [vmem:[%s257 + $0x70] sm:$0xff] %vm362, %v5413
      %5462 = vst.msk [vmem:[%s257 + $0x78] sm:$0xff] %vm362, %v5414
      %5463 = vst.msk [vmem:[%s257 + $0x80] sm:$0xff] %vm362, %v5415
      %5464 = vst.msk [vmem:[%s257 + $0x88] sm:$0xff] %vm362, %v5416
      %5465 = vst.msk [vmem:[%s257 + $0x90] sm:$0xff] %vm362, %v5417
      %5466 = vst.msk [vmem:[%s257 + $0x98] sm:$0xff] %vm362, %v5418
      %5467 = vst.msk [vmem:[%s257 + $0xa0] sm:$0xff] %vm362, %v5419
      %5468 = vst.msk [vmem:[%s257 + $0xa8] sm:$0xff] %vm362, %v5420
      %5469 = vst.msk [vmem:[%s257 + $0xb0] sm:$0xff] %vm362, %v5421
      %5470 = vst.msk [vmem:[%s257 + $0xb8] sm:$0xff] %vm362, %v5422
      %5471 = vst.msk [vmem:[%s257 + $0xc0] sm:$0xff] %vm362, %v5423
      %5472 = vst.msk [vmem:[%s257 + $0xc8] sm:$0xff] %vm362, %v5424
      %5473 = vst.msk [vmem:[%s257 + $0xd0] sm:$0xff] %vm362, %v5425
      %5474 = vst.msk [vmem:[%s257 + $0xd8] sm:$0xff] %vm362, %v5426
      %5475 = vst.msk [vmem:[%s257 + $0xe0] sm:$0xff] %vm362, %v5427
      %5476 = vst.msk [vmem:[%s257 + $0xe8] sm:$0xff] %vm362, %v5428
      %5477 = vst.msk [vmem:[%s257 + $0xf0] sm:$0xff] %vm362, %v5429
      %5478 = vst.msk [vmem:[%s257 + $0xf8] sm:$0xff] %vm362, %v5430
      %5479 = vst.msk [vmem:[%s257 + $0x100] sm:$0xff] %vm362, %v5431
      %5480 = vst.msk [vmem:[%s257 + $0x108] sm:$0xff] %vm362, %v5432
      %5481 = vst.msk [vmem:[%s257 + $0x110] sm:$0xff] %vm362, %v5433
      %5482 = vst.msk [vmem:[%s257 + $0x118] sm:$0xff] %vm362, %v5434
      %5483 = vst.msk [vmem:[%s257 + $0x120] sm:$0xff] %vm362, %v5435
      %5484 = vst.msk [vmem:[%s257 + $0x128] sm:$0xff] %vm362, %v5436
      %5485 = vst.msk [vmem:[%s257 + $0x130] sm:$0xff] %vm362, %v5437
      %5486 = vst.msk [vmem:[%s257 + $0x138] sm:$0xff] %vm362, %v5438
      %5487 = vst.msk [vmem:[%s257 + $0x140] sm:$0xff] %vm362, %v5439
      %5488 = vst.msk [vmem:[%s257 + $0x148] sm:$0xff] %vm362, %v5440
      %5489 = vst.msk [vmem:[%s257 + $0x150] sm:$0xff] %vm362, %v5441
      %5490 = vst.msk [vmem:[%s257 + $0x158] sm:$0xff] %vm362, %v5442
      %5491 = vst.msk [vmem:[%s257 + $0x160] sm:$0xff] %vm362, %v5443
      %5492 = vst.msk [vmem:[%s257 + $0x168] sm:$0xff] %vm362, %v5444
      %5493 = vst.msk [vmem:[%s257 + $0x170] sm:$0xff] %vm362, %v5445
      %5494 = vst.msk [vmem:[%s257 + $0x178] sm:$0xff] %vm362, %v5446
      %s5495 = smul.u32 48, %s21
      %p5496 = scmp.lt.s32.totalorder %s19, 1
      %s5497 = scalar_select %p5496, %s19, 1
      %p5498 = scmp.lt.s32.totalorder %s20, 0
      %s5499 = scalar_select %p5498, %s20, 0
      %p5500 = scmp.lt.s32.totalorder %s5495, 47
      %s5501 = scalar_select %p5500, %s5495, 47
      %s5502 = smul.addr %s5499, 48
      %s5503 = sadd.s32 %s5501, %s5502
      %s5504 = smul.addr %s5497, 48
      %s5505 = sadd.s32 %s5503, %s5504
      %s5506 = smul.addr %s5505, 8
      %s5507 = scalar_lea.vmem %s3, %s5506
      // Predicated region
      $region33: #{tpu_custom_call.1} parent=31 // pred_check
        %p5508 = pneg %p135
      $region34: #{tpu_custom_call.1} parent=31 // pred_check_branch
        %5510 = sbr.rel (%p5508) target = $region36
      $region35: #{tpu_custom_call.1} parent=31 // pred_region
        %s5511 = smul.u32 48, %s21
      $region36: #{tpu_custom_call.1} parent=31 // pred_fallthru
        _
    $region32: #{tpu_custom_call.1} parent=5 // pred_fallthru
      _
    %p5512 = scmp.le.s32.totalorder 2, %s9
    // Predicated region
    $region37: #{tpu_custom_call.1} parent=5 // pred_check
      %p5513 = pneg %p5512
    $region38: #{tpu_custom_call.1} parent=5 // pred_check_branch
      %5515 = sbr.rel (%p5513) target = $region40
    $region39: #{tpu_custom_call.1} parent=5 // pred_region
      %s5516 = ssub.s32 %s9, 2
      // Predicated region
      $region41: #{tpu_custom_call.1} parent=39 // pred_check
        %p5517 = pneg %p141
      $region42: #{tpu_custom_call.1} parent=39 // pred_check_branch
        %5519 = sbr.rel (%p5517) target = $region44
      $region43: #{tpu_custom_call.1} parent=39 // pred_region
        %s5520 = smul.u32 48, %s24
        %p5521 = scmp.lt.s32.totalorder %s22, 1
        %s5522 = scalar_select %p5521, %s22, 1
        %p5523 = scmp.lt.s32.totalorder %s23, 0
        %s5524 = scalar_select %p5523, %s23, 0
        %p5525 = scmp.lt.s32.totalorder %s5520, 47
        %s5526 = scalar_select %p5525, %s5520, 47
        %s5527 = smul.addr %s5524, 48
        %s5528 = sadd.s32 %s5526, %s5527
        %s5529 = smul.addr %s5522, 48
        %s5530 = sadd.s32 %s5528, %s5529
        %s5531 = smul.addr %s5530, 8
        %s5532 = scalar_lea.vmem %s3, %s5531
      $region44: #{tpu_custom_call.1} parent=39 // pred_fallthru
        _
    $region40: #{tpu_custom_call.1} parent=5 // pred_fallthru
      _
  $region6: #{tpu_custom_call.1} parent=0 // loop_footer
    %s13 = sadd.s32 1, %s9
  $region7: #{tpu_custom_call.1} parent=0 // loop_footer_branch
    %8 = sbr.rel target = $region3
  $region8: #{tpu_custom_call.1} parent=0 // loop_exit
    _

</llo_original>
